<compile_context>
chip_gen: v7x
topology: tpu7x:2x2x1
jax: 0.10.0
libtpu: 0.0.40
codegen_flags: <defaults>
</compile_context>

<pallas_src>
import math

import jax
import jax.numpy as jnp
from jax.experimental import pallas as pl
from jax.experimental.pallas import tpu as pltpu  # noqa: F401  (single un-gridded invocation)

# ---------------- model hyper-params (small, deterministic) ----------------
B = 2        # batch
LQ = 8       # decoder sequence length
LK = 8       # encoder sequence length
D_MODEL = 32
D_K = 8
D_V = 8
N_HEADS = 4
D_FF = 64
LN_EPS = 1e-5
HK = N_HEADS * D_K       # 32
HV = N_HEADS * D_V       # 32
NEG_INF = -1e9


# ------------------------------- kernel ------------------------------------
def decoder_layer_kernel(
    dec_ref, enc_ref,                  # (B*LQ, D), (B*LK, D)
    sbias_ref, cbias_ref,              # (B*LQ, B*LQ), (B*LQ, B*LK) additive masks (block-diag)
    wsqkv_ref, bsqkv_ref,              # (D, HK+HK+HV)=(32,96), (1,96)   self Q|K|V (Q pre-scaled)
    wcq_ref, bcq_ref,                  # (32, 32), (1, 32)               cross Q (pre-scaled)
    wckv_ref, bckv_ref,                # (32, 64), (1, 64)               cross K|V
    wo_ref, bo_ref,                    # (2, HV, D)=(2,32,32), (2, D)    output projections
    w1_ref, b1_ref, w2_ref, b2_ref,    # FFN
    lng_ref, lnb_ref,                  # (3, D) LayerNorm gamma / beta
    out_ref, attn_ref,                 # (B*LQ, D), (B*LQ, 128) lane-dense attention slab
):
    x = dec_ref[...]          # (16, 32)
    enc = enc_ref[...]        # (16, 32)

    def layer_norm(t, i):
        g = lng_ref[i:i + 1, :]
        b = lnb_ref[i:i + 1, :]
        mu = jnp.mean(t, axis=-1, keepdims=True)
        var = jnp.mean((t - mu) * (t - mu), axis=-1, keepdims=True)
        return (t - mu) * jax.lax.rsqrt(var + LN_EPS) * g + b

    def attention(q2d, k2d, v2d, bias2d, wo, bo):
        """q2d:(B*LQ,HK) k2d/v2d:(B*LK,HK/HV); batch folded into rows, heads via lane slices."""
        ctx_heads = []
        attn_heads = []
        for h in range(N_HEADS):
            q_h = q2d[:, h * D_K:(h + 1) * D_K]          # (B*LQ, D_K) lane slice
            k_h = k2d[:, h * D_K:(h + 1) * D_K]          # (B*LK, D_K)
            v_h = v2d[:, h * D_V:(h + 1) * D_V]          # (B*LK, D_V)
            # (B*LQ, B*LK); cross-batch entries neutralised by the block-diagonal bias.
            s = jnp.einsum('ik,jk->ij', q_h, k_h,
                           preferred_element_type=jnp.float32) + bias2d
            m = jnp.max(s, axis=-1, keepdims=True)
            e = jnp.exp(s - m)                           # masked / cross-batch -> exactly 0.0
            p = e * pl.reciprocal(jnp.sum(e, axis=-1, keepdims=True), approx=True)
            attn_heads.append(p)
            ctx_heads.append(jnp.dot(p, v_h, preferred_element_type=jnp.float32))
        ctx2d = jnp.concatenate(ctx_heads, axis=-1)      # (B*LQ, HV) lane concat
        out = jnp.dot(ctx2d, wo, preferred_element_type=jnp.float32) + bo
        attn2d = jnp.concatenate(attn_heads, axis=-1)    # (B*LQ, N_HEADS*B*LK) lane concat
        return out, attn2d

    # --- masked self-attention (fused Q|K|V projection) + add & norm ---
    qkv = jnp.dot(x, wsqkv_ref[...], preferred_element_type=jnp.float32) + bsqkv_ref[...]
    sa, sattn2d = attention(qkv[:, 0:HK], qkv[:, HK:2 * HK], qkv[:, 2 * HK:2 * HK + HV],
                            sbias_ref[...], wo_ref[0], bo_ref[0:1, :])
    y1 = layer_norm(x + sa, 0)

    # --- encoder-decoder attention + add & norm ---
    cq = jnp.dot(y1, wcq_ref[...], preferred_element_type=jnp.float32) + bcq_ref[...]
    ckv = jnp.dot(enc, wckv_ref[...], preferred_element_type=jnp.float32) + bckv_ref[...]
    ca, cattn2d = attention(cq, ckv[:, 0:HK], ckv[:, HK:HK + HV],
                            cbias_ref[...], wo_ref[1], bo_ref[1:2, :])
    y2 = layer_norm(y1 + ca, 1)

    # --- position-wise FFN (Linear -> ReLU -> Linear) + add & norm ---
    h = jnp.maximum(
        jnp.dot(y2, w1_ref[...], preferred_element_type=jnp.float32) + b1_ref[...], 0.0)
    ff = jnp.dot(h, w2_ref[...], preferred_element_type=jnp.float32) + b2_ref[...]
    y3 = layer_norm(y2 + ff, 2)

    out_ref[...] = y3
    # single fully lane-dense (16, 128) store: [self maps (64 lanes) | cross maps (64 lanes)]
    attn_ref[...] = jnp.concatenate([sattn2d, cattn2d], axis=-1)


# ------------------------------ wrapper -------------------------------------
def _pack_params(params):
    """Pack the 26 per-module tensors into 14 lane-dense kernel inputs (no replication)."""
    (s_wq, s_bq, s_wk, s_bk, s_wv, s_bv, s_wo, s_bo,
     c_wq, c_bq, c_wk, c_bk, c_wv, c_bv, c_wo, c_bo,
     f_w1, f_b1, f_w2, f_b2,
     g1, be1, g2, be2, g3, be3) = params
    scale = 1.0 / math.sqrt(D_K)

    wsqkv = jnp.concatenate([s_wq * scale, s_wk, s_wv], axis=1)     # (32, 96), Q pre-scaled
    bsqkv = jnp.concatenate([s_bq * scale, s_bk, s_bv], axis=1)     # (1, 96)
    wcq = c_wq * scale                                              # (32, 32)
    bcq = c_bq * scale                                              # (1, 32)
    wckv = jnp.concatenate([c_wk, c_wv], axis=1)                    # (32, 64)
    bckv = jnp.concatenate([c_bk, c_bv], axis=1)                    # (1, 64)
    wo = jnp.stack([s_wo, c_wo])                                    # (2, 32, 32)
    bo = jnp.concatenate([s_bo, c_bo], axis=0)                      # (2, 32)
    lng = jnp.concatenate([g1, g2, g3], axis=0)                     # (3, 32)
    lnb = jnp.concatenate([be1, be2, be3], axis=0)                  # (3, 32)
    return (wsqkv, bsqkv, wcq, bcq, wckv, bckv, wo, bo,
            f_w1, f_b1, f_w2, f_b2, lng, lnb)


def _block_diag_bias(mask):
    """(B, Lq, Lk) 1.0==masked -> (B*Lq, B*Lk) additive bias; off-diagonal blocks fully masked."""
    rows = []
    for b in range(B):
        blocks = [mask[b] if b2 == b else jnp.ones_like(mask[b]) for b2 in range(B)]
        rows.append(jnp.concatenate(blocks, axis=-1))
    return jnp.concatenate(rows, axis=0) * NEG_INF


def _extract_attn(slab_half, lk):
    """(B*LQ, N_HEADS*B*lk) lane-major slab -> (B, N_HEADS, LQ, lk) diagonal batch blocks."""
    x = slab_half.reshape(B, LQ, N_HEADS, B, lk)
    x = jnp.stack([x[b, :, :, b, :] for b in range(B)], axis=0)     # (B, LQ, H, lk)
    return jnp.transpose(x, (0, 2, 1, 3))                           # (B, H, LQ, lk)


@jax.jit
def decoder_layer(dec_inputs, enc_outputs, self_attn_mask, enc_attn_mask, params):
    packed = _pack_params(params)

    dec2d = dec_inputs.reshape(B * LQ, D_MODEL)
    enc2d = enc_outputs.reshape(B * LK, D_MODEL)
    sbias = _block_diag_bias(self_attn_mask)     # (16, 16)
    cbias = _block_diag_bias(enc_attn_mask)      # (16, 16)

    slab_w = N_HEADS * B * (LQ + LK)             # 64 + 64 = 128 (fully lane-dense)
    out_shape = (
        jax.ShapeDtypeStruct((B * LQ, D_MODEL), jnp.float32),
        jax.ShapeDtypeStruct((B * LQ, slab_w), jnp.float32),
    )
    # single invocation: no grid, whole arrays mapped into VMEM (default BlockSpecs)
    out2d, attn_slab = pl.pallas_call(
        decoder_layer_kernel,
        out_shape=out_shape,
    )(dec2d, enc2d, sbias, cbias, *packed)

    self_w = N_HEADS * B * LQ
    sattn = _extract_attn(attn_slab[:, :self_w], LQ)
    cattn = _extract_attn(attn_slab[:, self_w:], LK)
    return out2d.reshape(B, LQ, D_MODEL), sattn, cattn


# --------------------------- pure-JAX reference ------------------------------
def reference_decoder_layer(dec_inputs, enc_outputs, self_attn_mask, enc_attn_mask,
                            params):
    (s_wq, s_bq, s_wk, s_bk, s_wv, s_bv, s_wo, s_bo,
     c_wq, c_bq, c_wk, c_bk, c_wv, c_bv, c_wo, c_bo,
     f_w1, f_b1, f_w2, f_b2,
     g1, be1, g2, be2, g3, be3) = params

    def ln(x, g, b):
        mu = jnp.mean(x, axis=-1, keepdims=True)
        var = jnp.mean((x - mu) ** 2, axis=-1, keepdims=True)
        return (x - mu) / jnp.sqrt(var + LN_EPS) * g + b

    def mha(xq, xkv, mask, wq, bq, wk, bk, wv, bv, wo, bo):
        bsz, lq, _ = xq.shape
        lk = xkv.shape[1]
        q = (xq @ wq + bq).reshape(bsz, lq, N_HEADS, D_K).transpose(0, 2, 1, 3)
        k = (xkv @ wk + bk).reshape(bsz, lk, N_HEADS, D_K).transpose(0, 2, 1, 3)
        v = (xkv @ wv + bv).reshape(bsz, lk, N_HEADS, D_V).transpose(0, 2, 1, 3)
        scores = jnp.einsum('bhid,bhjd->bhij', q, k) / math.sqrt(D_K)
        scores = jnp.where(mask[:, None] > 0.5, NEG_INF, scores)
        attn = jax.nn.softmax(scores, axis=-1)
        ctx = jnp.einsum('bhij,bhjd->bhid', attn, v)
        ctx = ctx.transpose(0, 2, 1, 3).reshape(bsz, lq, N_HEADS * D_V)
        return ctx @ wo + bo, attn

    sa, sattn = mha(dec_inputs, dec_inputs, self_attn_mask,
                    s_wq, s_bq, s_wk, s_bk, s_wv, s_bv, s_wo, s_bo)
    y1 = ln(dec_inputs + sa, g1, be1)
    ca, cattn = mha(y1, enc_outputs, enc_attn_mask,
                    c_wq, c_bq, c_wk, c_bk, c_wv, c_bv, c_wo, c_bo)
    y2 = ln(y1 + ca, g2, be2)
    ff = jnp.maximum(y2 @ f_w1 + f_b1, 0.0) @ f_w2 + f_b2
    y3 = ln(y2 + ff, g3, be3)
    return y3, sattn, cattn


# ------------------------------ params --------------------------------------
def init_params(key):
    """Deterministic parameter init matching the module's shapes."""
    ks = jax.random.split(key, 10)

    def lin(k, din, dout):
        w = jax.random.normal(k, (din, dout), jnp.float32) * 0.02
        b = jnp.zeros((1, dout), jnp.float32)
        return w, b

    s_wq, s_bq = lin(ks[0], D_MODEL, N_HEADS * D_K)
    s_wk, s_bk = lin(ks[1], D_MODEL, N_HEADS * D_K)
    s_wv, s_bv = lin(ks[2], D_MODEL, N_HEADS * D_V)
    s_wo, s_bo = lin(ks[3], N_HEADS * D_V, D_MODEL)
    c_wq, c_bq = lin(ks[4], D_MODEL, N_HEADS * D_K)
    c_wk, c_bk = lin(ks[5], D_MODEL, N_HEADS * D_K)
    c_wv, c_bv = lin(ks[6], D_MODEL, N_HEADS * D_V)
    c_wo, c_bo = lin(ks[7], N_HEADS * D_V, D_MODEL)
    f_w1, f_b1 = lin(ks[8], D_MODEL, D_FF)
    f_w2, f_b2 = lin(ks[9], D_FF, D_MODEL)
    g1 = jnp.ones((1, D_MODEL), jnp.float32); be1 = jnp.zeros((1, D_MODEL), jnp.float32)
    g2 = jnp.ones((1, D_MODEL), jnp.float32); be2 = jnp.zeros((1, D_MODEL), jnp.float32)
    g3 = jnp.ones((1, D_MODEL), jnp.float32); be3 = jnp.zeros((1, D_MODEL), jnp.float32)

    return (s_wq, s_bq, s_wk, s_bk, s_wv, s_bv, s_wo, s_bo,
            c_wq, c_bq, c_wk, c_bk, c_wv, c_bv, c_wo, c_bo,
            f_w1, f_b1, f_w2, f_b2,
            g1, be1, g2, be2, g3, be3)


if __name__ == "__main__":
    key = jax.random.PRNGKey(0)
    k_dec, k_enc, k_par = jax.random.split(key, 3)

    dec_inputs = jax.random.normal(k_dec, (B, LQ, D_MODEL), jnp.float32)
    enc_outputs = jax.random.normal(k_enc, (B, LK, D_MODEL), jnp.float32)

    # causal mask for decoder self-attention (1.0 == masked), no mask for cross-attn
    causal = jnp.triu(jnp.ones((LQ, LQ), jnp.float32), k=1)
    self_attn_mask = jnp.broadcast_to(causal, (B, LQ, LQ))
    enc_attn_mask = jnp.zeros((B, LQ, LK), jnp.float32)

    params = init_params(k_par)

    dec_out, self_attn, enc_attn = decoder_layer(
        dec_inputs, enc_outputs, self_attn_mask, enc_attn_mask, params)
    jax.block_until_ready((dec_out, self_attn, enc_attn))

    # shape / sanity checks (softmax rows sum to 1 within approx-reciprocal tolerance)
    assert dec_out.shape == (B, LQ, D_MODEL)
    assert self_attn.shape == (B, N_HEADS, LQ, LQ)
    assert enc_attn.shape == (B, N_HEADS, LQ, LK)
    assert bool(jnp.all(jnp.isfinite(dec_out)))
    assert bool(jnp.allclose(jnp.sum(self_attn, axis=-1), 1.0, atol=5e-3))
    assert bool(jnp.allclose(jnp.sum(enc_attn, axis=-1), 1.0, atol=5e-3))

    # compare against a pure-JAX reference of the same decoder layer
    with jax.default_matmul_precision("float32"):
        ref_out, ref_sattn, ref_cattn = reference_decoder_layer(
            dec_inputs, enc_outputs, self_attn_mask, enc_attn_mask, params)
    assert bool(jnp.allclose(dec_out, ref_out, atol=2e-2, rtol=2e-2))
    assert bool(jnp.allclose(self_attn, ref_sattn, atol=2e-2, rtol=2e-2))
    assert bool(jnp.allclose(enc_attn, ref_cattn, atol=2e-2, rtol=2e-2))

    print("KERNEL_OK")
</pallas_src>

<mosaic_0001>
module attributes {stable_mosaic.version = 11 : i64} {
  func.func @decoder_layer_kernel(%arg0: memref<16x32xf32, #tpu.memory_space<vmem>>, %arg1: memref<16x32xf32, #tpu.memory_space<vmem>>, %arg2: memref<16x16xf32, #tpu.memory_space<vmem>>, %arg3: memref<16x16xf32, #tpu.memory_space<vmem>>, %arg4: memref<32x96xf32, #tpu.memory_space<vmem>>, %arg5: memref<1x96xf32, #tpu.memory_space<vmem>>, %arg6: memref<32x32xf32, #tpu.memory_space<vmem>>, %arg7: memref<1x32xf32, #tpu.memory_space<vmem>>, %arg8: memref<32x64xf32, #tpu.memory_space<vmem>>, %arg9: memref<1x64xf32, #tpu.memory_space<vmem>>, %arg10: memref<2x32x32xf32, #tpu.memory_space<vmem>>, %arg11: memref<2x32xf32, #tpu.memory_space<vmem>>, %arg12: memref<32x64xf32, #tpu.memory_space<vmem>>, %arg13: memref<1x64xf32, #tpu.memory_space<vmem>>, %arg14: memref<64x32xf32, #tpu.memory_space<vmem>>, %arg15: memref<1x32xf32, #tpu.memory_space<vmem>>, %arg16: memref<3x32xf32, #tpu.memory_space<vmem>>, %arg17: memref<3x32xf32, #tpu.memory_space<vmem>>, %arg18: memref<16x32xf32, #tpu.memory_space<vmem>>, %arg19: memref<16x128xf32, #tpu.memory_space<vmem>>) attributes {dimension_semantics = [], scalar_prefetch = 0 : i64, scratch_operands = 0 : i64, tpu.core_type = #tpu.core_type<tc>} {
    %c0 = arith.constant 0 : index
    %c0_0 = arith.constant 0 : index
    %0 = vector.load %arg0[%c0, %c0_0] : memref<16x32xf32, #tpu.memory_space<vmem>>, vector<16x32xf32>
    %c0_1 = arith.constant 0 : index
    %c0_2 = arith.constant 0 : index
    %1 = vector.load %arg1[%c0_1, %c0_2] : memref<16x32xf32, #tpu.memory_space<vmem>>, vector<16x32xf32>
    %c0_3 = arith.constant 0 : index
    %c0_4 = arith.constant 0 : index
    %2 = vector.load %arg4[%c0_3, %c0_4] : memref<32x96xf32, #tpu.memory_space<vmem>>, vector<32x96xf32>
    %cst = arith.constant dense<0.000000e+00> : vector<16x96xf32>
    %3 = tpu.matmul %0, %2, %cst {dimension_numbers = #tpu.dot_dimension_numbers<[1], [0], [0], [1], [0, 0, 1, 1], [], []>} : vector<16x32xf32>, vector<32x96xf32>, vector<16x96xf32> -> vector<16x96xf32>
    %c0_5 = arith.constant 0 : index
    %c0_6 = arith.constant 0 : index
    %4 = vector.load %arg5[%c0_5, %c0_6] : memref<1x96xf32, #tpu.memory_space<vmem>>, vector<1x96xf32>
    %5 = vector.broadcast %4 : vector<1x96xf32> to vector<16x96xf32>
    %6 = arith.addf %3, %5 : vector<16x96xf32>
    %7 = vector.extract_strided_slice %6 {offsets = [0, 0], sizes = [16, 32], strides = [1, 1]} : vector<16x96xf32> to vector<16x32xf32>
    %8 = vector.extract_strided_slice %6 {offsets = [0, 32], sizes = [16, 32], strides = [1, 1]} : vector<16x96xf32> to vector<16x32xf32>
    %9 = vector.extract_strided_slice %6 {offsets = [0, 64], sizes = [16, 32], strides = [1, 1]} : vector<16x96xf32> to vector<16x32xf32>
    %c0_7 = arith.constant 0 : index
    %c0_8 = arith.constant 0 : index
    %10 = vector.load %arg2[%c0_7, %c0_8] : memref<16x16xf32, #tpu.memory_space<vmem>>, vector<16x16xf32>
    %c0_9 = arith.constant 0 : index
    %c0_10 = arith.constant 0 : index
    %c0_11 = arith.constant 0 : index
    %11 = vector.load %arg10[%c0_9, %c0_10, %c0_11] : memref<2x32x32xf32, #tpu.memory_space<vmem>>, vector<1x32x32xf32>
    %12 = vector.shape_cast %11 : vector<1x32x32xf32> to vector<32x32xf32>
    %c0_12 = arith.constant 0 : index
    %c0_13 = arith.constant 0 : index
    %13 = vector.load %arg11[%c0_12, %c0_13] : memref<2x32xf32, #tpu.memory_space<vmem>>, vector<1x32xf32>
    %14 = vector.extract_strided_slice %7 {offsets = [0, 0], sizes = [16, 8], strides = [1, 1]} : vector<16x32xf32> to vector<16x8xf32>
    %15 = vector.extract_strided_slice %8 {offsets = [0, 0], sizes = [16, 8], strides = [1, 1]} : vector<16x32xf32> to vector<16x8xf32>
    %16 = vector.extract_strided_slice %9 {offsets = [0, 0], sizes = [16, 8], strides = [1, 1]} : vector<16x32xf32> to vector<16x8xf32>
    "tpu.trace_start"() <{level = 10 : i32, message = "ik,jk->ij"}> : () -> ()
    %cst_14 = arith.constant dense<0.000000e+00> : vector<16x16xf32>
    %17 = tpu.matmul %14, %15, %cst_14 {dimension_numbers = #tpu.dot_dimension_numbers<[1], [1], [0], [0], [0, 0, 1, 0], [], []>} : vector<16x8xf32>, vector<16x8xf32>, vector<16x16xf32> -> vector<16x16xf32>
    "tpu.trace_stop"() : () -> ()
    %18 = arith.addf %17, %10 : vector<16x16xf32>
    %cst_15 = arith.constant dense<0xFF800000> : vector<16xf32>
    %19 = vector.multi_reduction <maximumf>, %18, %cst_15 [1] : vector<16x16xf32> to vector<16xf32>
    %20 = vector.shape_cast %19 : vector<16xf32> to vector<16x1xf32>
    %21 = vector.broadcast %20 : vector<16x1xf32> to vector<16x16xf32>
    %22 = arith.subf %18, %21 : vector<16x16xf32>
    %23 = math.exp %22 : vector<16x16xf32>
    %cst_16 = arith.constant dense<0.000000e+00> : vector<16xf32>
    %24 = vector.multi_reduction <add>, %23, %cst_16 [1] : vector<16x16xf32> to vector<16xf32>
    %25 = vector.shape_cast %24 : vector<16xf32> to vector<16x1xf32>
    %26 = tpu.reciprocal %25 {approx = true} : vector<16x1xf32> -> vector<16x1xf32>
    %27 = vector.broadcast %26 : vector<16x1xf32> to vector<16x16xf32>
    %28 = arith.mulf %23, %27 : vector<16x16xf32>
    %cst_17 = arith.constant dense<0.000000e+00> : vector<16x8xf32>
    %29 = tpu.matmul %28, %16, %cst_17 {dimension_numbers = #tpu.dot_dimension_numbers<[1], [0], [0], [1], [0, 0, 1, 1], [], []>} : vector<16x16xf32>, vector<16x8xf32>, vector<16x8xf32> -> vector<16x8xf32>
    %30 = vector.extract_strided_slice %7 {offsets = [0, 8], sizes = [16, 8], strides = [1, 1]} : vector<16x32xf32> to vector<16x8xf32>
    %31 = vector.extract_strided_slice %8 {offsets = [0, 8], sizes = [16, 8], strides = [1, 1]} : vector<16x32xf32> to vector<16x8xf32>
    %32 = vector.extract_strided_slice %9 {offsets = [0, 8], sizes = [16, 8], strides = [1, 1]} : vector<16x32xf32> to vector<16x8xf32>
    "tpu.trace_start"() <{level = 10 : i32, message = "ik,jk->ij"}> : () -> ()
    %cst_18 = arith.constant dense<0.000000e+00> : vector<16x16xf32>
    %33 = tpu.matmul %30, %31, %cst_18 {dimension_numbers = #tpu.dot_dimension_numbers<[1], [1], [0], [0], [0, 0, 1, 0], [], []>} : vector<16x8xf32>, vector<16x8xf32>, vector<16x16xf32> -> vector<16x16xf32>
    "tpu.trace_stop"() : () -> ()
    %34 = arith.addf %33, %10 : vector<16x16xf32>
    %cst_19 = arith.constant dense<0xFF800000> : vector<16xf32>
    %35 = vector.multi_reduction <maximumf>, %34, %cst_19 [1] : vector<16x16xf32> to vector<16xf32>
    %36 = vector.shape_cast %35 : vector<16xf32> to vector<16x1xf32>
    %37 = vector.broadcast %36 : vector<16x1xf32> to vector<16x16xf32>
    %38 = arith.subf %34, %37 : vector<16x16xf32>
    %39 = math.exp %38 : vector<16x16xf32>
    %cst_20 = arith.constant dense<0.000000e+00> : vector<16xf32>
    %40 = vector.multi_reduction <add>, %39, %cst_20 [1] : vector<16x16xf32> to vector<16xf32>
    %41 = vector.shape_cast %40 : vector<16xf32> to vector<16x1xf32>
    %42 = tpu.reciprocal %41 {approx = true} : vector<16x1xf32> -> vector<16x1xf32>
    %43 = vector.broadcast %42 : vector<16x1xf32> to vector<16x16xf32>
    %44 = arith.mulf %39, %43 : vector<16x16xf32>
    %cst_21 = arith.constant dense<0.000000e+00> : vector<16x8xf32>
    %45 = tpu.matmul %44, %32, %cst_21 {dimension_numbers = #tpu.dot_dimension_numbers<[1], [0], [0], [1], [0, 0, 1, 1], [], []>} : vector<16x16xf32>, vector<16x8xf32>, vector<16x8xf32> -> vector<16x8xf32>
    %46 = vector.extract_strided_slice %7 {offsets = [0, 16], sizes = [16, 8], strides = [1, 1]} : vector<16x32xf32> to vector<16x8xf32>
    %47 = vector.extract_strided_slice %8 {offsets = [0, 16], sizes = [16, 8], strides = [1, 1]} : vector<16x32xf32> to vector<16x8xf32>
    %48 = vector.extract_strided_slice %9 {offsets = [0, 16], sizes = [16, 8], strides = [1, 1]} : vector<16x32xf32> to vector<16x8xf32>
    "tpu.trace_start"() <{level = 10 : i32, message = "ik,jk->ij"}> : () -> ()
    %cst_22 = arith.constant dense<0.000000e+00> : vector<16x16xf32>
    %49 = tpu.matmul %46, %47, %cst_22 {dimension_numbers = #tpu.dot_dimension_numbers<[1], [1], [0], [0], [0, 0, 1, 0], [], []>} : vector<16x8xf32>, vector<16x8xf32>, vector<16x16xf32> -> vector<16x16xf32>
    "tpu.trace_stop"() : () -> ()
    %50 = arith.addf %49, %10 : vector<16x16xf32>
    %cst_23 = arith.constant dense<0xFF800000> : vector<16xf32>
    %51 = vector.multi_reduction <maximumf>, %50, %cst_23 [1] : vector<16x16xf32> to vector<16xf32>
    %52 = vector.shape_cast %51 : vector<16xf32> to vector<16x1xf32>
    %53 = vector.broadcast %52 : vector<16x1xf32> to vector<16x16xf32>
    %54 = arith.subf %50, %53 : vector<16x16xf32>
    %55 = math.exp %54 : vector<16x16xf32>
    %cst_24 = arith.constant dense<0.000000e+00> : vector<16xf32>
    %56 = vector.multi_reduction <add>, %55, %cst_24 [1] : vector<16x16xf32> to vector<16xf32>
    %57 = vector.shape_cast %56 : vector<16xf32> to vector<16x1xf32>
    %58 = tpu.reciprocal %57 {approx = true} : vector<16x1xf32> -> vector<16x1xf32>
    %59 = vector.broadcast %58 : vector<16x1xf32> to vector<16x16xf32>
    %60 = arith.mulf %55, %59 : vector<16x16xf32>
    %cst_25 = arith.constant dense<0.000000e+00> : vector<16x8xf32>
    %61 = tpu.matmul %60, %48, %cst_25 {dimension_numbers = #tpu.dot_dimension_numbers<[1], [0], [0], [1], [0, 0, 1, 1], [], []>} : vector<16x16xf32>, vector<16x8xf32>, vector<16x8xf32> -> vector<16x8xf32>
    %62 = vector.extract_strided_slice %7 {offsets = [0, 24], sizes = [16, 8], strides = [1, 1]} : vector<16x32xf32> to vector<16x8xf32>
    %63 = vector.extract_strided_slice %8 {offsets = [0, 24], sizes = [16, 8], strides = [1, 1]} : vector<16x32xf32> to vector<16x8xf32>
    %64 = vector.extract_strided_slice %9 {offsets = [0, 24], sizes = [16, 8], strides = [1, 1]} : vector<16x32xf32> to vector<16x8xf32>
    "tpu.trace_start"() <{level = 10 : i32, message = "ik,jk->ij"}> : () -> ()
    %cst_26 = arith.constant dense<0.000000e+00> : vector<16x16xf32>
    %65 = tpu.matmul %62, %63, %cst_26 {dimension_numbers = #tpu.dot_dimension_numbers<[1], [1], [0], [0], [0, 0, 1, 0], [], []>} : vector<16x8xf32>, vector<16x8xf32>, vector<16x16xf32> -> vector<16x16xf32>
    "tpu.trace_stop"() : () -> ()
    %66 = arith.addf %65, %10 : vector<16x16xf32>
    %cst_27 = arith.constant dense<0xFF800000> : vector<16xf32>
    %67 = vector.multi_reduction <maximumf>, %66, %cst_27 [1] : vector<16x16xf32> to vector<16xf32>
    %68 = vector.shape_cast %67 : vector<16xf32> to vector<16x1xf32>
    %69 = vector.broadcast %68 : vector<16x1xf32> to vector<16x16xf32>
    %70 = arith.subf %66, %69 : vector<16x16xf32>
    %71 = math.exp %70 : vector<16x16xf32>
    %cst_28 = arith.constant dense<0.000000e+00> : vector<16xf32>
    %72 = vector.multi_reduction <add>, %71, %cst_28 [1] : vector<16x16xf32> to vector<16xf32>
    %73 = vector.shape_cast %72 : vector<16xf32> to vector<16x1xf32>
    %74 = tpu.reciprocal %73 {approx = true} : vector<16x1xf32> -> vector<16x1xf32>
    %75 = vector.broadcast %74 : vector<16x1xf32> to vector<16x16xf32>
    %76 = arith.mulf %71, %75 : vector<16x16xf32>
    %cst_29 = arith.constant dense<0.000000e+00> : vector<16x8xf32>
    %77 = tpu.matmul %76, %64, %cst_29 {dimension_numbers = #tpu.dot_dimension_numbers<[1], [0], [0], [1], [0, 0, 1, 1], [], []>} : vector<16x16xf32>, vector<16x8xf32>, vector<16x8xf32> -> vector<16x8xf32>
    %78 = tpu.concatenate %29, %45, %61, %77 in 1 : vector<16x8xf32>, vector<16x8xf32>, vector<16x8xf32>, vector<16x8xf32> -> vector<16x32xf32>
    %cst_30 = arith.constant dense<0.000000e+00> : vector<16x32xf32>
    %79 = tpu.matmul %78, %12, %cst_30 {dimension_numbers = #tpu.dot_dimension_numbers<[1], [0], [0], [1], [0, 0, 1, 1], [], []>} : vector<16x32xf32>, vector<32x32xf32>, vector<16x32xf32> -> vector<16x32xf32>
    %80 = vector.broadcast %13 : vector<1x32xf32> to vector<16x32xf32>
    %81 = arith.addf %79, %80 : vector<16x32xf32>
    %82 = tpu.concatenate %28, %44, %60, %76 in 1 : vector<16x16xf32>, vector<16x16xf32>, vector<16x16xf32>, vector<16x16xf32> -> vector<16x64xf32>
    %83 = arith.addf %0, %81 : vector<16x32xf32>
    %c0_31 = arith.constant 0 : index
    %c0_32 = arith.constant 0 : index
    %84 = vector.load %arg16[%c0_31, %c0_32] : memref<3x32xf32, #tpu.memory_space<vmem>>, vector<1x32xf32>
    %c0_33 = arith.constant 0 : index
    %c0_34 = arith.constant 0 : index
    %85 = vector.load %arg17[%c0_33, %c0_34] : memref<3x32xf32, #tpu.memory_space<vmem>>, vector<1x32xf32>
    %cst_35 = arith.constant dense<0.000000e+00> : vector<16xf32>
    %86 = vector.multi_reduction <add>, %83, %cst_35 [1] : vector<16x32xf32> to vector<16xf32>
    %87 = vector.shape_cast %86 : vector<16xf32> to vector<16x1xf32>
    %cst_36 = arith.constant 3.200000e+01 : f32
    %88 = vector.broadcast %cst_36 : f32 to vector<16x1xf32>
    %89 = arith.divf %87, %88 : vector<16x1xf32>
    %90 = vector.broadcast %89 : vector<16x1xf32> to vector<16x32xf32>
    %91 = arith.subf %83, %90 : vector<16x32xf32>
    %92 = vector.broadcast %89 : vector<16x1xf32> to vector<16x32xf32>
    %93 = arith.subf %83, %92 : vector<16x32xf32>
    %94 = arith.mulf %91, %93 : vector<16x32xf32>
    %cst_37 = arith.constant dense<0.000000e+00> : vector<16xf32>
    %95 = vector.multi_reduction <add>, %94, %cst_37 [1] : vector<16x32xf32> to vector<16xf32>
    %96 = vector.shape_cast %95 : vector<16xf32> to vector<16x1xf32>
    %cst_38 = arith.constant 3.200000e+01 : f32
    %97 = vector.broadcast %cst_38 : f32 to vector<16x1xf32>
    %98 = arith.divf %96, %97 : vector<16x1xf32>
    %99 = vector.broadcast %89 : vector<16x1xf32> to vector<16x32xf32>
    %100 = arith.subf %83, %99 : vector<16x32xf32>
    %cst_39 = arith.constant 9.99999974E-6 : f32
    %101 = vector.broadcast %cst_39 : f32 to vector<16x1xf32>
    %102 = arith.addf %98, %101 : vector<16x1xf32>
    %103 = math.rsqrt %102 : vector<16x1xf32>
    %104 = vector.broadcast %103 : vector<16x1xf32> to vector<16x32xf32>
    %105 = arith.mulf %100, %104 : vector<16x32xf32>
    %106 = vector.broadcast %84 : vector<1x32xf32> to vector<16x32xf32>
    %107 = arith.mulf %105, %106 : vector<16x32xf32>
    %108 = vector.broadcast %85 : vector<1x32xf32> to vector<16x32xf32>
    %109 = arith.addf %107, %108 : vector<16x32xf32>
    %c0_40 = arith.constant 0 : index
    %c0_41 = arith.constant 0 : index
    %110 = vector.load %arg6[%c0_40, %c0_41] : memref<32x32xf32, #tpu.memory_space<vmem>>, vector<32x32xf32>
    %cst_42 = arith.constant dense<0.000000e+00> : vector<16x32xf32>
    %111 = tpu.matmul %109, %110, %cst_42 {dimension_numbers = #tpu.dot_dimension_numbers<[1], [0], [0], [1], [0, 0, 1, 1], [], []>} : vector<16x32xf32>, vector<32x32xf32>, vector<16x32xf32> -> vector<16x32xf32>
    %c0_43 = arith.constant 0 : index
    %c0_44 = arith.constant 0 : index
    %112 = vector.load %arg7[%c0_43, %c0_44] : memref<1x32xf32, #tpu.memory_space<vmem>>, vector<1x32xf32>
    %113 = vector.broadcast %112 : vector<1x32xf32> to vector<16x32xf32>
    %114 = arith.addf %111, %113 : vector<16x32xf32>
    %c0_45 = arith.constant 0 : index
    %c0_46 = arith.constant 0 : index
    %115 = vector.load %arg8[%c0_45, %c0_46] : memref<32x64xf32, #tpu.memory_space<vmem>>, vector<32x64xf32>
    %cst_47 = arith.constant dense<0.000000e+00> : vector<16x64xf32>
    %116 = tpu.matmul %1, %115, %cst_47 {dimension_numbers = #tpu.dot_dimension_numbers<[1], [0], [0], [1], [0, 0, 1, 1], [], []>} : vector<16x32xf32>, vector<32x64xf32>, vector<16x64xf32> -> vector<16x64xf32>
    %c0_48 = arith.constant 0 : index
    %c0_49 = arith.constant 0 : index
    %117 = vector.load %arg9[%c0_48, %c0_49] : memref<1x64xf32, #tpu.memory_space<vmem>>, vector<1x64xf32>
    %118 = vector.broadcast %117 : vector<1x64xf32> to vector<16x64xf32>
    %119 = arith.addf %116, %118 : vector<16x64xf32>
    %120 = vector.extract_strided_slice %119 {offsets = [0, 0], sizes = [16, 32], strides = [1, 1]} : vector<16x64xf32> to vector<16x32xf32>
    %121 = vector.extract_strided_slice %119 {offsets = [0, 32], sizes = [16, 32], strides = [1, 1]} : vector<16x64xf32> to vector<16x32xf32>
    %c0_50 = arith.constant 0 : index
    %c0_51 = arith.constant 0 : index
    %122 = vector.load %arg3[%c0_50, %c0_51] : memref<16x16xf32, #tpu.memory_space<vmem>>, vector<16x16xf32>
    %c1 = arith.constant 1 : index
    %c0_52 = arith.constant 0 : index
    %c0_53 = arith.constant 0 : index
    %123 = vector.load %arg10[%c1, %c0_52, %c0_53] : memref<2x32x32xf32, #tpu.memory_space<vmem>>, vector<1x32x32xf32>
    %124 = vector.shape_cast %123 : vector<1x32x32xf32> to vector<32x32xf32>
    %c1_54 = arith.constant 1 : index
    %c0_55 = arith.constant 0 : index
    %125 = vector.load %arg11[%c1_54, %c0_55] : memref<2x32xf32, #tpu.memory_space<vmem>>, vector<1x32xf32>
    %126 = vector.extract_strided_slice %114 {offsets = [0, 0], sizes = [16, 8], strides = [1, 1]} : vector<16x32xf32> to vector<16x8xf32>
    %127 = vector.extract_strided_slice %120 {offsets = [0, 0], sizes = [16, 8], strides = [1, 1]} : vector<16x32xf32> to vector<16x8xf32>
    %128 = vector.extract_strided_slice %121 {offsets = [0, 0], sizes = [16, 8], strides = [1, 1]} : vector<16x32xf32> to vector<16x8xf32>
    "tpu.trace_start"() <{level = 10 : i32, message = "ik,jk->ij"}> : () -> ()
    %cst_56 = arith.constant dense<0.000000e+00> : vector<16x16xf32>
    %129 = tpu.matmul %126, %127, %cst_56 {dimension_numbers = #tpu.dot_dimension_numbers<[1], [1], [0], [0], [0, 0, 1, 0], [], []>} : vector<16x8xf32>, vector<16x8xf32>, vector<16x16xf32> -> vector<16x16xf32>
    "tpu.trace_stop"() : () -> ()
    %130 = arith.addf %129, %122 : vector<16x16xf32>
    %cst_57 = arith.constant dense<0xFF800000> : vector<16xf32>
    %131 = vector.multi_reduction <maximumf>, %130, %cst_57 [1] : vector<16x16xf32> to vector<16xf32>
    %132 = vector.shape_cast %131 : vector<16xf32> to vector<16x1xf32>
    %133 = vector.broadcast %132 : vector<16x1xf32> to vector<16x16xf32>
    %134 = arith.subf %130, %133 : vector<16x16xf32>
    %135 = math.exp %134 : vector<16x16xf32>
    %cst_58 = arith.constant dense<0.000000e+00> : vector<16xf32>
    %136 = vector.multi_reduction <add>, %135, %cst_58 [1] : vector<16x16xf32> to vector<16xf32>
    %137 = vector.shape_cast %136 : vector<16xf32> to vector<16x1xf32>
    %138 = tpu.reciprocal %137 {approx = true} : vector<16x1xf32> -> vector<16x1xf32>
    %139 = vector.broadcast %138 : vector<16x1xf32> to vector<16x16xf32>
    %140 = arith.mulf %135, %139 : vector<16x16xf32>
    %cst_59 = arith.constant dense<0.000000e+00> : vector<16x8xf32>
    %141 = tpu.matmul %140, %128, %cst_59 {dimension_numbers = #tpu.dot_dimension_numbers<[1], [0], [0], [1], [0, 0, 1, 1], [], []>} : vector<16x16xf32>, vector<16x8xf32>, vector<16x8xf32> -> vector<16x8xf32>
    %142 = vector.extract_strided_slice %114 {offsets = [0, 8], sizes = [16, 8], strides = [1, 1]} : vector<16x32xf32> to vector<16x8xf32>
    %143 = vector.extract_strided_slice %120 {offsets = [0, 8], sizes = [16, 8], strides = [1, 1]} : vector<16x32xf32> to vector<16x8xf32>
    %144 = vector.extract_strided_slice %121 {offsets = [0, 8], sizes = [16, 8], strides = [1, 1]} : vector<16x32xf32> to vector<16x8xf32>
    "tpu.trace_start"() <{level = 10 : i32, message = "ik,jk->ij"}> : () -> ()
    %cst_60 = arith.constant dense<0.000000e+00> : vector<16x16xf32>
    %145 = tpu.matmul %142, %143, %cst_60 {dimension_numbers = #tpu.dot_dimension_numbers<[1], [1], [0], [0], [0, 0, 1, 0], [], []>} : vector<16x8xf32>, vector<16x8xf32>, vector<16x16xf32> -> vector<16x16xf32>
    "tpu.trace_stop"() : () -> ()
    %146 = arith.addf %145, %122 : vector<16x16xf32>
    %cst_61 = arith.constant dense<0xFF800000> : vector<16xf32>
    %147 = vector.multi_reduction <maximumf>, %146, %cst_61 [1] : vector<16x16xf32> to vector<16xf32>
    %148 = vector.shape_cast %147 : vector<16xf32> to vector<16x1xf32>
    %149 = vector.broadcast %148 : vector<16x1xf32> to vector<16x16xf32>
    %150 = arith.subf %146, %149 : vector<16x16xf32>
    %151 = math.exp %150 : vector<16x16xf32>
    %cst_62 = arith.constant dense<0.000000e+00> : vector<16xf32>
    %152 = vector.multi_reduction <add>, %151, %cst_62 [1] : vector<16x16xf32> to vector<16xf32>
    %153 = vector.shape_cast %152 : vector<16xf32> to vector<16x1xf32>
    %154 = tpu.reciprocal %153 {approx = true} : vector<16x1xf32> -> vector<16x1xf32>
    %155 = vector.broadcast %154 : vector<16x1xf32> to vector<16x16xf32>
    %156 = arith.mulf %151, %155 : vector<16x16xf32>
    %cst_63 = arith.constant dense<0.000000e+00> : vector<16x8xf32>
    %157 = tpu.matmul %156, %144, %cst_63 {dimension_numbers = #tpu.dot_dimension_numbers<[1], [0], [0], [1], [0, 0, 1, 1], [], []>} : vector<16x16xf32>, vector<16x8xf32>, vector<16x8xf32> -> vector<16x8xf32>
    %158 = vector.extract_strided_slice %114 {offsets = [0, 16], sizes = [16, 8], strides = [1, 1]} : vector<16x32xf32> to vector<16x8xf32>
    %159 = vector.extract_strided_slice %120 {offsets = [0, 16], sizes = [16, 8], strides = [1, 1]} : vector<16x32xf32> to vector<16x8xf32>
    %160 = vector.extract_strided_slice %121 {offsets = [0, 16], sizes = [16, 8], strides = [1, 1]} : vector<16x32xf32> to vector<16x8xf32>
    "tpu.trace_start"() <{level = 10 : i32, message = "ik,jk->ij"}> : () -> ()
    %cst_64 = arith.constant dense<0.000000e+00> : vector<16x16xf32>
    %161 = tpu.matmul %158, %159, %cst_64 {dimension_numbers = #tpu.dot_dimension_numbers<[1], [1], [0], [0], [0, 0, 1, 0], [], []>} : vector<16x8xf32>, vector<16x8xf32>, vector<16x16xf32> -> vector<16x16xf32>
    "tpu.trace_stop"() : () -> ()
    %162 = arith.addf %161, %122 : vector<16x16xf32>
    %cst_65 = arith.constant dense<0xFF800000> : vector<16xf32>
    %163 = vector.multi_reduction <maximumf>, %162, %cst_65 [1] : vector<16x16xf32> to vector<16xf32>
    %164 = vector.shape_cast %163 : vector<16xf32> to vector<16x1xf32>
    %165 = vector.broadcast %164 : vector<16x1xf32> to vector<16x16xf32>
    %166 = arith.subf %162, %165 : vector<16x16xf32>
    %167 = math.exp %166 : vector<16x16xf32>
    %cst_66 = arith.constant dense<0.000000e+00> : vector<16xf32>
    %168 = vector.multi_reduction <add>, %167, %cst_66 [1] : vector<16x16xf32> to vector<16xf32>
    %169 = vector.shape_cast %168 : vector<16xf32> to vector<16x1xf32>
    %170 = tpu.reciprocal %169 {approx = true} : vector<16x1xf32> -> vector<16x1xf32>
    %171 = vector.broadcast %170 : vector<16x1xf32> to vector<16x16xf32>
    %172 = arith.mulf %167, %171 : vector<16x16xf32>
    %cst_67 = arith.constant dense<0.000000e+00> : vector<16x8xf32>
    %173 = tpu.matmul %172, %160, %cst_67 {dimension_numbers = #tpu.dot_dimension_numbers<[1], [0], [0], [1], [0, 0, 1, 1], [], []>} : vector<16x16xf32>, vector<16x8xf32>, vector<16x8xf32> -> vector<16x8xf32>
    %174 = vector.extract_strided_slice %114 {offsets = [0, 24], sizes = [16, 8], strides = [1, 1]} : vector<16x32xf32> to vector<16x8xf32>
    %175 = vector.extract_strided_slice %120 {offsets = [0, 24], sizes = [16, 8], strides = [1, 1]} : vector<16x32xf32> to vector<16x8xf32>
    %176 = vector.extract_strided_slice %121 {offsets = [0, 24], sizes = [16, 8], strides = [1, 1]} : vector<16x32xf32> to vector<16x8xf32>
    "tpu.trace_start"() <{level = 10 : i32, message = "ik,jk->ij"}> : () -> ()
    %cst_68 = arith.constant dense<0.000000e+00> : vector<16x16xf32>
    %177 = tpu.matmul %174, %175, %cst_68 {dimension_numbers = #tpu.dot_dimension_numbers<[1], [1], [0], [0], [0, 0, 1, 0], [], []>} : vector<16x8xf32>, vector<16x8xf32>, vector<16x16xf32> -> vector<16x16xf32>
    "tpu.trace_stop"() : () -> ()
    %178 = arith.addf %177, %122 : vector<16x16xf32>
    %cst_69 = arith.constant dense<0xFF800000> : vector<16xf32>
    %179 = vector.multi_reduction <maximumf>, %178, %cst_69 [1] : vector<16x16xf32> to vector<16xf32>
    %180 = vector.shape_cast %179 : vector<16xf32> to vector<16x1xf32>
    %181 = vector.broadcast %180 : vector<16x1xf32> to vector<16x16xf32>
    %182 = arith.subf %178, %181 : vector<16x16xf32>
    %183 = math.exp %182 : vector<16x16xf32>
    %cst_70 = arith.constant dense<0.000000e+00> : vector<16xf32>
    %184 = vector.multi_reduction <add>, %183, %cst_70 [1] : vector<16x16xf32> to vector<16xf32>
    %185 = vector.shape_cast %184 : vector<16xf32> to vector<16x1xf32>
    %186 = tpu.reciprocal %185 {approx = true} : vector<16x1xf32> -> vector<16x1xf32>
    %187 = vector.broadcast %186 : vector<16x1xf32> to vector<16x16xf32>
    %188 = arith.mulf %183, %187 : vector<16x16xf32>
    %cst_71 = arith.constant dense<0.000000e+00> : vector<16x8xf32>
    %189 = tpu.matmul %188, %176, %cst_71 {dimension_numbers = #tpu.dot_dimension_numbers<[1], [0], [0], [1], [0, 0, 1, 1], [], []>} : vector<16x16xf32>, vector<16x8xf32>, vector<16x8xf32> -> vector<16x8xf32>
    %190 = tpu.concatenate %141, %157, %173, %189 in 1 : vector<16x8xf32>, vector<16x8xf32>, vector<16x8xf32>, vector<16x8xf32> -> vector<16x32xf32>
    %cst_72 = arith.constant dense<0.000000e+00> : vector<16x32xf32>
    %191 = tpu.matmul %190, %124, %cst_72 {dimension_numbers = #tpu.dot_dimension_numbers<[1], [0], [0], [1], [0, 0, 1, 1], [], []>} : vector<16x32xf32>, vector<32x32xf32>, vector<16x32xf32> -> vector<16x32xf32>
    %192 = vector.broadcast %125 : vector<1x32xf32> to vector<16x32xf32>
    %193 = arith.addf %191, %192 : vector<16x32xf32>
    %194 = tpu.concatenate %140, %156, %172, %188 in 1 : vector<16x16xf32>, vector<16x16xf32>, vector<16x16xf32>, vector<16x16xf32> -> vector<16x64xf32>
    %195 = arith.addf %109, %193 : vector<16x32xf32>
    %c1_73 = arith.constant 1 : index
    %c0_74 = arith.constant 0 : index
    %196 = vector.load %arg16[%c1_73, %c0_74] : memref<3x32xf32, #tpu.memory_space<vmem>>, vector<1x32xf32>
    %c1_75 = arith.constant 1 : index
    %c0_76 = arith.constant 0 : index
    %197 = vector.load %arg17[%c1_75, %c0_76] : memref<3x32xf32, #tpu.memory_space<vmem>>, vector<1x32xf32>
    %cst_77 = arith.constant dense<0.000000e+00> : vector<16xf32>
    %198 = vector.multi_reduction <add>, %195, %cst_77 [1] : vector<16x32xf32> to vector<16xf32>
    %199 = vector.shape_cast %198 : vector<16xf32> to vector<16x1xf32>
    %cst_78 = arith.constant 3.200000e+01 : f32
    %200 = vector.broadcast %cst_78 : f32 to vector<16x1xf32>
    %201 = arith.divf %199, %200 : vector<16x1xf32>
    %202 = vector.broadcast %201 : vector<16x1xf32> to vector<16x32xf32>
    %203 = arith.subf %195, %202 : vector<16x32xf32>
    %204 = vector.broadcast %201 : vector<16x1xf32> to vector<16x32xf32>
    %205 = arith.subf %195, %204 : vector<16x32xf32>
    %206 = arith.mulf %203, %205 : vector<16x32xf32>
    %cst_79 = arith.constant dense<0.000000e+00> : vector<16xf32>
    %207 = vector.multi_reduction <add>, %206, %cst_79 [1] : vector<16x32xf32> to vector<16xf32>
    %208 = vector.shape_cast %207 : vector<16xf32> to vector<16x1xf32>
    %cst_80 = arith.constant 3.200000e+01 : f32
    %209 = vector.broadcast %cst_80 : f32 to vector<16x1xf32>
    %210 = arith.divf %208, %209 : vector<16x1xf32>
    %211 = vector.broadcast %201 : vector<16x1xf32> to vector<16x32xf32>
    %212 = arith.subf %195, %211 : vector<16x32xf32>
    %cst_81 = arith.constant 9.99999974E-6 : f32
    %213 = vector.broadcast %cst_81 : f32 to vector<16x1xf32>
    %214 = arith.addf %210, %213 : vector<16x1xf32>
    %215 = math.rsqrt %214 : vector<16x1xf32>
    %216 = vector.broadcast %215 : vector<16x1xf32> to vector<16x32xf32>
    %217 = arith.mulf %212, %216 : vector<16x32xf32>
    %218 = vector.broadcast %196 : vector<1x32xf32> to vector<16x32xf32>
    %219 = arith.mulf %217, %218 : vector<16x32xf32>
    %220 = vector.broadcast %197 : vector<1x32xf32> to vector<16x32xf32>
    %221 = arith.addf %219, %220 : vector<16x32xf32>
    %c0_82 = arith.constant 0 : index
    %c0_83 = arith.constant 0 : index
    %222 = vector.load %arg12[%c0_82, %c0_83] : memref<32x64xf32, #tpu.memory_space<vmem>>, vector<32x64xf32>
    %cst_84 = arith.constant dense<0.000000e+00> : vector<16x64xf32>
    %223 = tpu.matmul %221, %222, %cst_84 {dimension_numbers = #tpu.dot_dimension_numbers<[1], [0], [0], [1], [0, 0, 1, 1], [], []>} : vector<16x32xf32>, vector<32x64xf32>, vector<16x64xf32> -> vector<16x64xf32>
    %c0_85 = arith.constant 0 : index
    %c0_86 = arith.constant 0 : index
    %224 = vector.load %arg13[%c0_85, %c0_86] : memref<1x64xf32, #tpu.memory_space<vmem>>, vector<1x64xf32>
    %225 = vector.broadcast %224 : vector<1x64xf32> to vector<16x64xf32>
    %226 = arith.addf %223, %225 : vector<16x64xf32>
    %cst_87 = arith.constant 0.000000e+00 : f32
    %227 = vector.broadcast %cst_87 : f32 to vector<16x64xf32>
    %228 = arith.maximumf %226, %227 : vector<16x64xf32>
    %c0_88 = arith.constant 0 : index
    %c0_89 = arith.constant 0 : index
    %229 = vector.load %arg14[%c0_88, %c0_89] : memref<64x32xf32, #tpu.memory_space<vmem>>, vector<64x32xf32>
    %cst_90 = arith.constant dense<0.000000e+00> : vector<16x32xf32>
    %230 = tpu.matmul %228, %229, %cst_90 {dimension_numbers = #tpu.dot_dimension_numbers<[1], [0], [0], [1], [0, 0, 1, 1], [], []>} : vector<16x64xf32>, vector<64x32xf32>, vector<16x32xf32> -> vector<16x32xf32>
    %c0_91 = arith.constant 0 : index
    %c0_92 = arith.constant 0 : index
    %231 = vector.load %arg15[%c0_91, %c0_92] : memref<1x32xf32, #tpu.memory_space<vmem>>, vector<1x32xf32>
    %232 = vector.broadcast %231 : vector<1x32xf32> to vector<16x32xf32>
    %233 = arith.addf %230, %232 : vector<16x32xf32>
    %234 = arith.addf %221, %233 : vector<16x32xf32>
    %c2 = arith.constant 2 : index
    %c0_93 = arith.constant 0 : index
    %235 = vector.load %arg16[%c2, %c0_93] : memref<3x32xf32, #tpu.memory_space<vmem>>, vector<1x32xf32>
    %c2_94 = arith.constant 2 : index
    %c0_95 = arith.constant 0 : index
    %236 = vector.load %arg17[%c2_94, %c0_95] : memref<3x32xf32, #tpu.memory_space<vmem>>, vector<1x32xf32>
    %cst_96 = arith.constant dense<0.000000e+00> : vector<16xf32>
    %237 = vector.multi_reduction <add>, %234, %cst_96 [1] : vector<16x32xf32> to vector<16xf32>
    %238 = vector.shape_cast %237 : vector<16xf32> to vector<16x1xf32>
    %cst_97 = arith.constant 3.200000e+01 : f32
    %239 = vector.broadcast %cst_97 : f32 to vector<16x1xf32>
    %240 = arith.divf %238, %239 : vector<16x1xf32>
    %241 = vector.broadcast %240 : vector<16x1xf32> to vector<16x32xf32>
    %242 = arith.subf %234, %241 : vector<16x32xf32>
    %243 = vector.broadcast %240 : vector<16x1xf32> to vector<16x32xf32>
    %244 = arith.subf %234, %243 : vector<16x32xf32>
    %245 = arith.mulf %242, %244 : vector<16x32xf32>
    %cst_98 = arith.constant dense<0.000000e+00> : vector<16xf32>
    %246 = vector.multi_reduction <add>, %245, %cst_98 [1] : vector<16x32xf32> to vector<16xf32>
    %247 = vector.shape_cast %246 : vector<16xf32> to vector<16x1xf32>
    %cst_99 = arith.constant 3.200000e+01 : f32
    %248 = vector.broadcast %cst_99 : f32 to vector<16x1xf32>
    %249 = arith.divf %247, %248 : vector<16x1xf32>
    %250 = vector.broadcast %240 : vector<16x1xf32> to vector<16x32xf32>
    %251 = arith.subf %234, %250 : vector<16x32xf32>
    %cst_100 = arith.constant 9.99999974E-6 : f32
    %252 = vector.broadcast %cst_100 : f32 to vector<16x1xf32>
    %253 = arith.addf %249, %252 : vector<16x1xf32>
    %254 = math.rsqrt %253 : vector<16x1xf32>
    %255 = vector.broadcast %254 : vector<16x1xf32> to vector<16x32xf32>
    %256 = arith.mulf %251, %255 : vector<16x32xf32>
    %257 = vector.broadcast %235 : vector<1x32xf32> to vector<16x32xf32>
    %258 = arith.mulf %256, %257 : vector<16x32xf32>
    %259 = vector.broadcast %236 : vector<1x32xf32> to vector<16x32xf32>
    %260 = arith.addf %258, %259 : vector<16x32xf32>
    %c0_101 = arith.constant 0 : index
    %c0_102 = arith.constant 0 : index
    %261 = vector.load %arg18[%c0_101, %c0_102] : memref<16x32xf32, #tpu.memory_space<vmem>>, vector<16x32xf32>
    tpu.vector_store %arg18[%c0_101, %c0_102], %260 {strides = array<i32>} : memref<16x32xf32, #tpu.memory_space<vmem>>, vector<16x32xf32>,
    %262 = tpu.concatenate %82, %194 in 1 : vector<16x64xf32>, vector<16x64xf32> -> vector<16x128xf32>
    %c0_103 = arith.constant 0 : index
    %c0_104 = arith.constant 0 : index
    %263 = vector.load %arg19[%c0_103, %c0_104] : memref<16x128xf32, #tpu.memory_space<vmem>>, vector<16x128xf32>
    tpu.vector_store %arg19[%c0_103, %c0_104], %262 {strides = array<i32>} : memref<16x128xf32, #tpu.memory_space<vmem>>, vector<16x128xf32>,
    return
  }
}

</mosaic_0001>

<llo_original>
// kernel: decoder_layer.1
$region0: #{decoder_layer.1}
  #allocation0 [shape = 'u32[]', space=smem, size = 0x4, offset = 0x4, fixed_abs, tag = 'smem constant byte address 0x4 - core index']
  #allocation1 [shape = 'u32[144,128]{1,0:T(1,128)}', space=vmem, size = 0x12000, scoped, tag = 'internal scratch']
  %s0 = inlined_call_operand.vmem [shape: f32[16,32], index: 0, kind: input, shape index: {}]
  %s1 = inlined_call_operand.vmem [shape: f32[16,32], index: 1, kind: input, shape index: {}]
  %s2 = inlined_call_operand.vmem [shape: f32[16,16], index: 2, kind: input, shape index: {}]
  %s3 = inlined_call_operand.vmem [shape: f32[16,16], index: 3, kind: input, shape index: {}]
  %s4 = inlined_call_operand.vmem [shape: f32[32,96], index: 4, kind: input, shape index: {}]
  %s5 = inlined_call_operand.vmem [shape: f32[1,96], index: 5, kind: input, shape index: {}]
  %s6 = inlined_call_operand.vmem [shape: f32[32,32], index: 6, kind: input, shape index: {}]
  %s7 = inlined_call_operand.vmem [shape: f32[1,32], index: 7, kind: input, shape index: {}]
  %s8 = inlined_call_operand.vmem [shape: f32[32,64], index: 8, kind: input, shape index: {}]
  %s9 = inlined_call_operand.vmem [shape: f32[1,64], index: 9, kind: input, shape index: {}]
  %s10 = inlined_call_operand.vmem [shape: f32[2,32,32], index: 10, kind: input, shape index: {}]
  %s11 = inlined_call_operand.vmem [shape: f32[2,32], index: 11, kind: input, shape index: {}]
  %s12 = inlined_call_operand.vmem [shape: f32[32,64], index: 12, kind: input, shape index: {}]
  %s13 = inlined_call_operand.vmem [shape: f32[1,64], index: 13, kind: input, shape index: {}]
  %s14 = inlined_call_operand.vmem [shape: f32[64,32], index: 14, kind: input, shape index: {}]
  %s15 = inlined_call_operand.vmem [shape: f32[1,32], index: 15, kind: input, shape index: {}]
  %s16 = inlined_call_operand.vmem [shape: f32[3,32], index: 16, kind: input, shape index: {}]
  %s17 = inlined_call_operand.vmem [shape: f32[3,32], index: 17, kind: input, shape index: {}]
  %s18 = inlined_call_operand.hbm [shape: f32[16,32], index: 18, kind: output, shape index: {0}]
  %s19 = inlined_call_operand.vmem [shape: f32[16,128], index: 19, kind: output, shape index: {1}]
  %20 = xla_tuple %s18, %s19
  %s21 = sld [smem:[#allocation0]]
  $region90: #{decoder_layer.1} parent=0
    _
  %s23 = ssub.s32 1, %s21
  %s24 = scalar_select 0, %s23, %s21
  $region1: #{decoder_layer.1} parent=0
    #allocation2 [shape = 'u8[8192]{0}', space=vmem, size = 0x2000, scoped, tag = 'output window, operand 0, single buffered']
    #allocation3 [shape = 's32[1]{0}', space=sflag, size = 0x4, scoped, tag = 'scoped memory for decoder_layer.1']
    %25 = vsyncpa [#allocation3], 0
    // Predicated region
    $region2: #{decoder_layer.1} parent=1 // pred_check
      _
    $region3: #{decoder_layer.1} parent=1 // pred_check_branch
      %27 = sbr.rel (0) target = $region5
    $region4: #{decoder_layer.1} parent=1 // pred_region
      _
    $region5: #{decoder_layer.1} parent=1 // pred_fallthru
      _
    // Predicated region
    $region6: #{decoder_layer.1} parent=1 // pred_check
      _
    $region7: #{decoder_layer.1} parent=1 // pred_check_branch
      %29 = sbr.rel (0) target = $region9
    $region8: #{decoder_layer.1} parent=1 // pred_region
      _
    $region9: #{decoder_layer.1} parent=1 // pred_fallthru
      _
    // Predicated region
    $region10: #{decoder_layer.1} parent=1 // pred_check
      _
    $region11: #{decoder_layer.1} parent=1 // pred_check_branch
      %31 = sbr.rel (0) target = $region13
    $region12: #{decoder_layer.1} parent=1 // pred_region
      _
    $region13: #{decoder_layer.1} parent=1 // pred_fallthru
      _
    // Predicated region
    $region14: #{decoder_layer.1} parent=1 // pred_check
      _
    $region15: #{decoder_layer.1} parent=1 // pred_check_branch
      %33 = sbr.rel (0) target = $region17
    $region16: #{decoder_layer.1} parent=1 // pred_region
      _
    $region17: #{decoder_layer.1} parent=1 // pred_fallthru
      _
    // Predicated region
    $region18: #{decoder_layer.1} parent=1 // pred_check
      _
    $region19: #{decoder_layer.1} parent=1 // pred_check_branch
      %35 = sbr.rel (0) target = $region21
    $region20: #{decoder_layer.1} parent=1 // pred_region
      _
    $region21: #{decoder_layer.1} parent=1 // pred_fallthru
      _
    // Predicated region
    $region22: #{decoder_layer.1} parent=1 // pred_check
      _
    $region23: #{decoder_layer.1} parent=1 // pred_check_branch
      %37 = sbr.rel (0) target = $region25
    $region24: #{decoder_layer.1} parent=1 // pred_region
      _
    $region25: #{decoder_layer.1} parent=1 // pred_fallthru
      _
    // Predicated region
    $region26: #{decoder_layer.1} parent=1 // pred_check
      _
    $region27: #{decoder_layer.1} parent=1 // pred_check_branch
      %39 = sbr.rel (0) target = $region29
    $region28: #{decoder_layer.1} parent=1 // pred_region
      _
    $region29: #{decoder_layer.1} parent=1 // pred_fallthru
      _
    // Predicated region
    $region30: #{decoder_layer.1} parent=1 // pred_check
      _
    $region31: #{decoder_layer.1} parent=1 // pred_check_branch
      %41 = sbr.rel (0) target = $region33
    $region32: #{decoder_layer.1} parent=1 // pred_region
      _
    $region33: #{decoder_layer.1} parent=1 // pred_fallthru
      _
    // Predicated region
    $region34: #{decoder_layer.1} parent=1 // pred_check
      _
    $region35: #{decoder_layer.1} parent=1 // pred_check_branch
      %43 = sbr.rel (0) target = $region37
    $region36: #{decoder_layer.1} parent=1 // pred_region
      _
    $region37: #{decoder_layer.1} parent=1 // pred_fallthru
      _
    // Predicated region
    $region38: #{decoder_layer.1} parent=1 // pred_check
      _
    $region39: #{decoder_layer.1} parent=1 // pred_check_branch
      %45 = sbr.rel (0) target = $region41
    $region40: #{decoder_layer.1} parent=1 // pred_region
      _
    $region41: #{decoder_layer.1} parent=1 // pred_fallthru
      _
    // Predicated region
    $region42: #{decoder_layer.1} parent=1 // pred_check
      _
    $region43: #{decoder_layer.1} parent=1 // pred_check_branch
      %47 = sbr.rel (0) target = $region45
    $region44: #{decoder_layer.1} parent=1 // pred_region
      _
    $region45: #{decoder_layer.1} parent=1 // pred_fallthru
      _
    // Predicated region
    $region46: #{decoder_layer.1} parent=1 // pred_check
      _
    $region47: #{decoder_layer.1} parent=1 // pred_check_branch
      %49 = sbr.rel (0) target = $region49
    $region48: #{decoder_layer.1} parent=1 // pred_region
      _
    $region49: #{decoder_layer.1} parent=1 // pred_fallthru
      _
    // Predicated region
    $region50: #{decoder_layer.1} parent=1 // pred_check
      _
    $region51: #{decoder_layer.1} parent=1 // pred_check_branch
      %51 = sbr.rel (0) target = $region53
    $region52: #{decoder_layer.1} parent=1 // pred_region
      _
    $region53: #{decoder_layer.1} parent=1 // pred_fallthru
      _
    // Predicated region
    $region54: #{decoder_layer.1} parent=1 // pred_check
      _
    $region55: #{decoder_layer.1} parent=1 // pred_check_branch
      %53 = sbr.rel (0) target = $region57
    $region56: #{decoder_layer.1} parent=1 // pred_region
      _
    $region57: #{decoder_layer.1} parent=1 // pred_fallthru
      _
    // Predicated region
    $region58: #{decoder_layer.1} parent=1 // pred_check
      _
    $region59: #{decoder_layer.1} parent=1 // pred_check_branch
      %55 = sbr.rel (0) target = $region61
    $region60: #{decoder_layer.1} parent=1 // pred_region
      _
    $region61: #{decoder_layer.1} parent=1 // pred_fallthru
      _
    // Predicated region
    $region62: #{decoder_layer.1} parent=1 // pred_check
      _
    $region63: #{decoder_layer.1} parent=1 // pred_check_branch
      %57 = sbr.rel (0) target = $region65
    $region64: #{decoder_layer.1} parent=1 // pred_region
      _
    $region65: #{decoder_layer.1} parent=1 // pred_fallthru
      _
    // Predicated region
    $region66: #{decoder_layer.1} parent=1 // pred_check
      _
    $region67: #{decoder_layer.1} parent=1 // pred_check_branch
      %59 = sbr.rel (0) target = $region69
    $region68: #{decoder_layer.1} parent=1 // pred_region
      _
    $region69: #{decoder_layer.1} parent=1 // pred_fallthru
      _
    // Predicated region
    $region70: #{decoder_layer.1} parent=1 // pred_check
      _
    $region71: #{decoder_layer.1} parent=1 // pred_check_branch
      %61 = sbr.rel (0) target = $region73
    $region72: #{decoder_layer.1} parent=1 // pred_region
      _
    $region73: #{decoder_layer.1} parent=1 // pred_fallthru
      _
    %v62 = vld [vmem:[%s0] sm:$0xff]
    %v63 = vld [vmem:[%s0 + $0x8] sm:$0xff]
    %v64 = vld [vmem:[%s1] sm:$0xff]
    %v65 = vld [vmem:[%s1 + $0x8] sm:$0xff]
    %v66 = vld [vmem:[%s4] sm:$0xff]
    %v67 = vld [vmem:[%s4 + $0x8] sm:$0xff]
    %v68 = vld [vmem:[%s4 + $0x10] sm:$0xff]
    %v69 = vld [vmem:[%s4 + $0x18] sm:$0xff]
    %v70 = vld [vmem:[%s5] sm:$0x1]
    %v72 = vlaneseq
    %v73 = vshrl.u32 %v72, 7
    %v74 = vsub.s32 0, %v73
    %v75 = vrot.slane %v70, %v74
    %vm77 = vcmask 261120
    %v79 = vsel %vm77, %v62, 0
    %v82 = vsel %vm77, %v63, 0
    %84 = vmatprep.subr.mxu0 0.0
    %85 = vmatpush1.msra.mxu0 %v66
    %86 = vmatprep.subr.mxu0 0.0
    %87 = vmatpush1.msra.mxu0 %v67
    %88 = vmatprep.subr.mxu0 0.0
    %89 = vmatpush1.msra.mxu0 %v68
    %90 = vmatprep.subr.mxu0 0.0
    %91 = vmatpush1.msra.mxu0 %v69
    %92 = vmatprep.subr.mxu0 0.0
    %93 = vmatpush1.msra.mxu0 0.0
    %94 = vmatprep.subr.mxu0 0.0
    %95 = vmatpush1.msra.mxu0 0.0
    %96 = vmatprep.subr.mxu0 0.0
    %97 = vmatpush1.msra.mxu0 0.0
    %98 = vmatprep.subr.mxu0 0.0
    %99 = vmatpush1.msra.mxu0 0.0
    %100 = vmatprep.subr.mxu0 0.0
    %101 = vmatpush1.msra.mxu0 0.0
    %102 = vmatprep.subr.mxu0 0.0
    %103 = vmatpush1.msra.mxu0 0.0
    %104 = vmatprep.subr.mxu0 0.0
    %105 = vmatpush1.msra.mxu0 0.0
    %106 = vmatprep.subr.mxu0 0.0
    %107 = vmatpush1.msra.mxu0 0.0
    %108 = vmatprep.subr.mxu0 0.0
    %109 = vmatpush1.msra.mxu0 0.0
    %110 = vmatprep.subr.mxu0 0.0
    %111 = vmatpush1.msra.mxu0 0.0
    %112 = vmatprep.subr.mxu0 0.0
    %113 = vmatpush1.msra.mxu0 0.0
    %114 = vmatprep.subr.mxu0 0.0
    %115 = vmatpush1.msra.mxu0 0.0
    %116 = vmatprep.subr.mxu0 0.0
    %117 = vmatpush1.msra.mxu0 0.0
    %118 = vmatprep.subr.mxu0 0.0
    %119 = vmatpush1.msra.mxu0 0.0
    %120 = vmatprep.subr.mxu0 0.0
    %121 = vmatpush1.msra.mxu0 0.0
    %122 = vmatprep.subr.mxu0 0.0
    %123 = vmatpush1.msra.mxu0 0.0
    %124 = vmatprep.subr.mxu0 0.0
    %125 = vmatpush1.msra.mxu0 0.0
    %126 = vmatprep.subr.mxu0 0.0
    %127 = vmatpush1.msra.mxu0 0.0
    %128 = vmatprep.subr.mxu0 0.0
    %129 = vmatpush1.msra.mxu0 0.0
    %130 = vmatprep.subr.mxu0 0.0
    %131 = vmatpush1.msra.mxu0 0.0
    %132 = vmatprep.subr.mxu0 0.0
    %133 = vmatpush1.msra.mxu0 0.0
    %134 = vmatprep.subr.mxu0 0.0
    %135 = vmatpush1.msra.mxu0 0.0
    %136 = vmatprep.subr.mxu0 0.0
    %137 = vmatpush1.msra.mxu0 0.0
    %138 = vmatprep.subr.mxu0 0.0
    %139 = vmatpush1.msra.mxu0 0.0
    %140 = vmatprep.subr.mxu0 0.0
    %141 = vmatpush1.msra.mxu0 0.0
    %142 = vmatprep.subr.mxu0 0.0
    %143 = vmatpush1.msra.mxu0 0.0
    %144 = vmatprep.subr.mxu0 0.0
    %145 = vmatpush1.msra.mxu0 0.0
    %146 = vmatprep.subr.mxu0 0.0
    %147 = vmatpush1.msra.mxu0 0.0
    %148 = vmatprep.mubr.f32.mxu0 0.0
    %149 = vmatmul.mubr.f32.gmra.mrb[0].mxu0 %v79
    %v150 = vpop.f32.mrb[0].mxu0
    %v151 = vadd.f32 %v75, %v150
    %v152 = vpop.f32.mrb[0].mxu0
    %153 = vmatprep.mubr.f32.mxu0 0.0
    %154 = vmatmul.mubr.f32.gmra.mrb[0].mxu0 %v82
    %v155 = vpop.f32.mrb[0].mxu0
    %v156 = vadd.f32 %v75, %v155
    %v157 = vpop.f32.mrb[0].mxu0
    %158 = vdwg.mxu0
    %v159 = vld [vmem:[%s2] sm:$0xff]
    %v160 = vld [vmem:[%s2 + $0x8] sm:$0xff]
    %v161 = vld [vmem:[%s10] sm:$0xff]
    %v162 = vld [vmem:[%s10 + $0x8] sm:$0xff]
    %v163 = vld [vmem:[%s10 + $0x10] sm:$0xff]
    %v164 = vld [vmem:[%s10 + $0x18] sm:$0xff]
    %v165 = vld [vmem:[%s11] sm:$0x1]
    %168 = vrot.lane.b32.xlu0 %v151, 96
    %v169 = vpop.permute.xlu0 %168
    %170 = vrot.lane.b32.xlu0 %v156, 96
    %v171 = vpop.permute.xlu0 %170
    %vm172 = vcmask 64512
    %v173 = vsel %vm172, %v151, 0
    %v175 = vsel %vm172, %v156, 0
    %v177 = vsel %vm172, %v169, 0
    %v179 = vsel %vm172, %v171, 0
    %181 = vmatprep.subr.mxu0 0.0
    %182 = vmatpush1.xpose.msra.mxu0 %v177
    %183 = vmatprep.subr.mxu0 0.0
    %184 = vmatpush1.xpose.msra.mxu0 %v179
    %185 = vmatprep.subr.mxu0 0.0
    %186 = vmatpush1.xpose.msra.mxu0 0.0
    %187 = vmatprep.subr.mxu0 0.0
    %188 = vmatpush1.xpose.msra.mxu0 0.0
    %189 = vmatprep.subr.mxu0 0.0
    %190 = vmatpush1.xpose.msra.mxu0 0.0
    %191 = vmatprep.subr.mxu0 0.0
    %192 = vmatpush1.xpose.msra.mxu0 0.0
    %193 = vmatprep.subr.mxu0 0.0
    %194 = vmatpush1.xpose.msra.mxu0 0.0
    %195 = vmatprep.subr.mxu0 0.0
    %196 = vmatpush1.xpose.msra.mxu0 0.0
    %197 = vmatprep.subr.mxu0 0.0
    %198 = vmatpush1.xpose.msra.mxu0 0.0
    %199 = vmatprep.subr.mxu0 0.0
    %200 = vmatpush1.xpose.msra.mxu0 0.0
    %201 = vmatprep.subr.mxu0 0.0
    %202 = vmatpush1.xpose.msra.mxu0 0.0
    %203 = vmatprep.subr.mxu0 0.0
    %204 = vmatpush1.xpose.msra.mxu0 0.0
    %205 = vmatprep.subr.mxu0 0.0
    %206 = vmatpush1.xpose.msra.mxu0 0.0
    %207 = vmatprep.subr.mxu0 0.0
    %208 = vmatpush1.xpose.msra.mxu0 0.0
    %209 = vmatprep.subr.mxu0 0.0
    %210 = vmatpush1.xpose.msra.mxu0 0.0
    %211 = vmatprep.subr.mxu0 0.0
    %212 = vmatpush1.xpose.msra.mxu0 0.0
    %213 = vmatprep.subr.mxu0 0.0
    %214 = vmatpush1.xpose.msra.mxu0 0.0
    %215 = vmatprep.subr.mxu0 0.0
    %216 = vmatpush1.xpose.msra.mxu0 0.0
    %217 = vmatprep.subr.mxu0 0.0
    %218 = vmatpush1.xpose.msra.mxu0 0.0
    %219 = vmatprep.subr.mxu0 0.0
    %220 = vmatpush1.xpose.msra.mxu0 0.0
    %221 = vmatprep.subr.mxu0 0.0
    %222 = vmatpush1.xpose.msra.mxu0 0.0
    %223 = vmatprep.subr.mxu0 0.0
    %224 = vmatpush1.xpose.msra.mxu0 0.0
    %225 = vmatprep.subr.mxu0 0.0
    %226 = vmatpush1.xpose.msra.mxu0 0.0
    %227 = vmatprep.subr.mxu0 0.0
    %228 = vmatpush1.xpose.msra.mxu0 0.0
    %229 = vmatprep.subr.mxu0 0.0
    %230 = vmatpush1.xpose.msra.mxu0 0.0
    %231 = vmatprep.subr.mxu0 0.0
    %232 = vmatpush1.xpose.msra.mxu0 0.0
    %233 = vmatprep.subr.mxu0 0.0
    %234 = vmatpush1.xpose.msra.mxu0 0.0
    %235 = vmatprep.subr.mxu0 0.0
    %236 = vmatpush1.xpose.msra.mxu0 0.0
    %237 = vmatprep.subr.mxu0 0.0
    %238 = vmatpush1.xpose.msra.mxu0 0.0
    %239 = vmatprep.subr.mxu0 0.0
    %240 = vmatpush1.xpose.msra.mxu0 0.0
    %241 = vmatprep.subr.mxu0 0.0
    %242 = vmatpush1.xpose.msra.mxu0 0.0
    %243 = vmatprep.subr.mxu0 0.0
    %244 = vmatpush1.xpose.msra.mxu0 0.0
    %245 = vmatprep.mubr.f32.mxu0 0.0
    %246 = vmatmul.mubr.f32.gmra.mrb[0].mxu0 %v173
    %v247 = vpop.f32.mrb[0].mxu0
    %v248 = vadd.f32 %v159, %v247
    %v249 = vpop.f32.mrb[0].mxu0
    %250 = vmatprep.mubr.f32.mxu0 0.0
    %251 = vmatmul.mubr.f32.gmra.mrb[0].mxu0 %v175
    %v252 = vpop.f32.mrb[0].mxu0
    %v253 = vadd.f32 %v160, %v252
    %v254 = vpop.f32.mrb[0].mxu0
    %255 = vdwg.mxu0
    %vm256 = vcmask 130048
    %v257 = vsel %vm256, %v248, -inf
    %258 = vmax.xlane.f32.xlu0 %v257
    %v259 = vpop.xlane.xlu0 %258
    %v260 = vsel %vm256, %v253, -inf
    %261 = vmax.xlane.f32.xlu0 %v260
    %v262 = vpop.xlane.xlu0 %261
    %v263 = vsub.f32 %v248, %v259
    %v264 = vsub.f32 %v253, %v262
    %v265 = vmul.f32 %v263, 1.442695
    %v266 = vpow.pop %v265
    %v267 = vmul.f32 %v264, 1.442695
    %v268 = vpow.pop %v267
    %v269 = vsel %vm256, %v266, 0.0
    %270 = vadd.xlane.f32.xlu0 %v269
    %v271 = vpop.xlane.xlu0 %270
    %v272 = vsel %vm256, %v268, 0.0
    %273 = vadd.xlane.f32.xlu0 %v272
    %v274 = vpop.xlane.xlu0 %273
    %v275 = vrcp.pop %v271
    %v276 = vrcp.pop %v274
    %v277 = vmul.f32 %v266, %v275
    %v278 = vmul.f32 %v268, %v276
    %279 = vrot.lane.b32.xlu0 %v151, 64
    %v280 = vpop.permute.xlu0 %279
    %281 = vrot.lane.b32.xlu0 %v156, 64
    %v282 = vpop.permute.xlu0 %281
    %v286 = vsel %vm256, %v277, 0
    %v289 = vsel %vm256, %v278, 0
    %291 = vmatprep.subr.mxu0 0.0
    %292 = vmatpush1.msra.mxu0 %v280
    %293 = vmatprep.subr.mxu0 0.0
    %294 = vmatpush1.msra.mxu0 %v282
    %295 = vmatprep.subr.mxu0 0.0
    %296 = vmatpush1.msra.mxu0 0.0
    %297 = vmatprep.subr.mxu0 0.0
    %298 = vmatpush1.msra.mxu0 0.0
    %299 = vmatprep.subr.mxu0 0.0
    %300 = vmatpush1.msra.mxu0 0.0
    %301 = vmatprep.subr.mxu0 0.0
    %302 = vmatpush1.msra.mxu0 0.0
    %303 = vmatprep.subr.mxu0 0.0
    %304 = vmatpush1.msra.mxu0 0.0
    %305 = vmatprep.subr.mxu0 0.0
    %306 = vmatpush1.msra.mxu0 0.0
    %307 = vmatprep.subr.mxu0 0.0
    %308 = vmatpush1.msra.mxu0 0.0
    %309 = vmatprep.subr.mxu0 0.0
    %310 = vmatpush1.msra.mxu0 0.0
    %311 = vmatprep.subr.mxu0 0.0
    %312 = vmatpush1.msra.mxu0 0.0
    %313 = vmatprep.subr.mxu0 0.0
    %314 = vmatpush1.msra.mxu0 0.0
    %315 = vmatprep.subr.mxu0 0.0
    %316 = vmatpush1.msra.mxu0 0.0
    %317 = vmatprep.subr.mxu0 0.0
    %318 = vmatpush1.msra.mxu0 0.0
    %319 = vmatprep.subr.mxu0 0.0
    %320 = vmatpush1.msra.mxu0 0.0
    %321 = vmatprep.subr.mxu0 0.0
    %322 = vmatpush1.msra.mxu0 0.0
    %323 = vmatprep.subr.mxu0 0.0
    %324 = vmatpush1.msra.mxu0 0.0
    %325 = vmatprep.subr.mxu0 0.0
    %326 = vmatpush1.msra.mxu0 0.0
    %327 = vmatprep.subr.mxu0 0.0
    %328 = vmatpush1.msra.mxu0 0.0
    %329 = vmatprep.subr.mxu0 0.0
    %330 = vmatpush1.msra.mxu0 0.0
    %331 = vmatprep.subr.mxu0 0.0
    %332 = vmatpush1.msra.mxu0 0.0
    %333 = vmatprep.subr.mxu0 0.0
    %334 = vmatpush1.msra.mxu0 0.0
    %335 = vmatprep.subr.mxu0 0.0
    %336 = vmatpush1.msra.mxu0 0.0
    %337 = vmatprep.subr.mxu0 0.0
    %338 = vmatpush1.msra.mxu0 0.0
    %339 = vmatprep.subr.mxu0 0.0
    %340 = vmatpush1.msra.mxu0 0.0
    %341 = vmatprep.subr.mxu0 0.0
    %342 = vmatpush1.msra.mxu0 0.0
    %343 = vmatprep.subr.mxu0 0.0
    %344 = vmatpush1.msra.mxu0 0.0
    %345 = vmatprep.subr.mxu0 0.0
    %346 = vmatpush1.msra.mxu0 0.0
    %347 = vmatprep.subr.mxu0 0.0
    %348 = vmatpush1.msra.mxu0 0.0
    %349 = vmatprep.subr.mxu0 0.0
    %350 = vmatpush1.msra.mxu0 0.0
    %351 = vmatprep.subr.mxu0 0.0
    %352 = vmatpush1.msra.mxu0 0.0
    %353 = vmatprep.subr.mxu0 0.0
    %354 = vmatpush1.msra.mxu0 0.0
    %355 = vmatprep.mubr.f32.mxu0 0.0
    %356 = vmatmul.mubr.f32.gmra.mrb[0].mxu0 %v286
    %v357 = vpop.f32.mrb[0].mxu0
    %v358 = vadd.f32 0.0, %v357
    %v359 = vpop.f32.mrb[0].mxu0
    %360 = vmatprep.mubr.f32.mxu0 0.0
    %361 = vmatmul.mubr.f32.gmra.mrb[0].mxu0 %v289
    %v362 = vpop.f32.mrb[0].mxu0
    %v363 = vadd.f32 0.0, %v362
    %v364 = vpop.f32.mrb[0].mxu0
    %365 = vdwg.mxu0
    %366 = vrot.lane.b32.xlu0 %v151, 120
    %v367 = vpop.permute.xlu0 %366
    %368 = vrot.lane.b32.xlu0 %v156, 120
    %v369 = vpop.permute.xlu0 %368
    %370 = vrot.lane.b32.xlu0 %v151, 88
    %v371 = vpop.permute.xlu0 %370
    %372 = vrot.lane.b32.xlu0 %v156, 88
    %v373 = vpop.permute.xlu0 %372
    %v374 = vsel %vm172, %v367, 0
    %v376 = vsel %vm172, %v369, 0
    %v378 = vsel %vm172, %v371, 0
    %v380 = vsel %vm172, %v373, 0
    %382 = vmatprep.subr.mxu0 0.0
    %383 = vmatpush1.xpose.msra.mxu0 %v378
    %384 = vmatprep.subr.mxu0 0.0
    %385 = vmatpush1.xpose.msra.mxu0 %v380
    %386 = vmatprep.subr.mxu0 0.0
    %387 = vmatpush1.xpose.msra.mxu0 0.0
    %388 = vmatprep.subr.mxu0 0.0
    %389 = vmatpush1.xpose.msra.mxu0 0.0
    %390 = vmatprep.subr.mxu0 0.0
    %391 = vmatpush1.xpose.msra.mxu0 0.0
    %392 = vmatprep.subr.mxu0 0.0
    %393 = vmatpush1.xpose.msra.mxu0 0.0
    %394 = vmatprep.subr.mxu0 0.0
    %395 = vmatpush1.xpose.msra.mxu0 0.0
    %396 = vmatprep.subr.mxu0 0.0
    %397 = vmatpush1.xpose.msra.mxu0 0.0
    %398 = vmatprep.subr.mxu0 0.0
    %399 = vmatpush1.xpose.msra.mxu0 0.0
    %400 = vmatprep.subr.mxu0 0.0
    %401 = vmatpush1.xpose.msra.mxu0 0.0
    %402 = vmatprep.subr.mxu0 0.0
    %403 = vmatpush1.xpose.msra.mxu0 0.0
    %404 = vmatprep.subr.mxu0 0.0
    %405 = vmatpush1.xpose.msra.mxu0 0.0
    %406 = vmatprep.subr.mxu0 0.0
    %407 = vmatpush1.xpose.msra.mxu0 0.0
    %408 = vmatprep.subr.mxu0 0.0
    %409 = vmatpush1.xpose.msra.mxu0 0.0
    %410 = vmatprep.subr.mxu0 0.0
    %411 = vmatpush1.xpose.msra.mxu0 0.0
    %412 = vmatprep.subr.mxu0 0.0
    %413 = vmatpush1.xpose.msra.mxu0 0.0
    %414 = vmatprep.subr.mxu0 0.0
    %415 = vmatpush1.xpose.msra.mxu0 0.0
    %416 = vmatprep.subr.mxu0 0.0
    %417 = vmatpush1.xpose.msra.mxu0 0.0
    %418 = vmatprep.subr.mxu0 0.0
    %419 = vmatpush1.xpose.msra.mxu0 0.0
    %420 = vmatprep.subr.mxu0 0.0
    %421 = vmatpush1.xpose.msra.mxu0 0.0
    %422 = vmatprep.subr.mxu0 0.0
    %423 = vmatpush1.xpose.msra.mxu0 0.0
    %424 = vmatprep.subr.mxu0 0.0
    %425 = vmatpush1.xpose.msra.mxu0 0.0
    %426 = vmatprep.subr.mxu0 0.0
    %427 = vmatpush1.xpose.msra.mxu0 0.0
    %428 = vmatprep.subr.mxu0 0.0
    %429 = vmatpush1.xpose.msra.mxu0 0.0
    %430 = vmatprep.subr.mxu0 0.0
    %431 = vmatpush1.xpose.msra.mxu0 0.0
    %432 = vmatprep.subr.mxu0 0.0
    %433 = vmatpush1.xpose.msra.mxu0 0.0
    %434 = vmatprep.subr.mxu0 0.0
    %435 = vmatpush1.xpose.msra.mxu0 0.0
    %436 = vmatprep.subr.mxu0 0.0
    %437 = vmatpush1.xpose.msra.mxu0 0.0
    %438 = vmatprep.subr.mxu0 0.0
    %439 = vmatpush1.xpose.msra.mxu0 0.0
    %440 = vmatprep.subr.mxu0 0.0
    %441 = vmatpush1.xpose.msra.mxu0 0.0
    %442 = vmatprep.subr.mxu0 0.0
    %443 = vmatpush1.xpose.msra.mxu0 0.0
    %444 = vmatprep.subr.mxu0 0.0
    %445 = vmatpush1.xpose.msra.mxu0 0.0
    %446 = vmatprep.mubr.f32.mxu0 0.0
    %447 = vmatmul.mubr.f32.gmra.mrb[0].mxu0 %v374
    %v448 = vpop.f32.mrb[0].mxu0
    %v449 = vadd.f32 %v159, %v448
    %v450 = vpop.f32.mrb[0].mxu0
    %451 = vmatprep.mubr.f32.mxu0 0.0
    %452 = vmatmul.mubr.f32.gmra.mrb[0].mxu0 %v376
    %v453 = vpop.f32.mrb[0].mxu0
    %v454 = vadd.f32 %v160, %v453
    %v455 = vpop.f32.mrb[0].mxu0
    %456 = vdwg.mxu0
    %v457 = vsel %vm256, %v449, -inf
    %458 = vmax.xlane.f32.xlu0 %v457
    %v459 = vpop.xlane.xlu0 %458
    %v460 = vsel %vm256, %v454, -inf
    %461 = vmax.xlane.f32.xlu0 %v460
    %v462 = vpop.xlane.xlu0 %461
    %v463 = vsub.f32 %v449, %v459
    %v464 = vsub.f32 %v454, %v462
    %v465 = vmul.f32 %v463, 1.442695
    %v466 = vpow.pop %v465
    %v467 = vmul.f32 %v464, 1.442695
    %v468 = vpow.pop %v467
    %v469 = vsel %vm256, %v466, 0.0
    %470 = vadd.xlane.f32.xlu0 %v469
    %v471 = vpop.xlane.xlu0 %470
    %v472 = vsel %vm256, %v468, 0.0
    %473 = vadd.xlane.f32.xlu0 %v472
    %v474 = vpop.xlane.xlu0 %473
    %v475 = vrcp.pop %v471
    %v476 = vrcp.pop %v474
    %v477 = vmul.f32 %v466, %v475
    %v478 = vmul.f32 %v468, %v476
    %479 = vrot.lane.b32.xlu0 %v151, 56
    %v480 = vpop.permute.xlu0 %479
    %481 = vrot.lane.b32.xlu0 %v156, 56
    %v482 = vpop.permute.xlu0 %481
    %v486 = vsel %vm256, %v477, 0
    %v489 = vsel %vm256, %v478, 0
    %491 = vmatprep.subr.mxu0 0.0
    %492 = vmatpush1.msra.mxu0 %v480
    %493 = vmatprep.subr.mxu0 0.0
    %494 = vmatpush1.msra.mxu0 %v482
    %495 = vmatprep.subr.mxu0 0.0
    %496 = vmatpush1.msra.mxu0 0.0
    %497 = vmatprep.subr.mxu0 0.0
    %498 = vmatpush1.msra.mxu0 0.0
    %499 = vmatprep.subr.mxu0 0.0
    %500 = vmatpush1.msra.mxu0 0.0
    %501 = vmatprep.subr.mxu0 0.0
    %502 = vmatpush1.msra.mxu0 0.0
    %503 = vmatprep.subr.mxu0 0.0
    %504 = vmatpush1.msra.mxu0 0.0
    %505 = vmatprep.subr.mxu0 0.0
    %506 = vmatpush1.msra.mxu0 0.0
    %507 = vmatprep.subr.mxu0 0.0
    %508 = vmatpush1.msra.mxu0 0.0
    %509 = vmatprep.subr.mxu0 0.0
    %510 = vmatpush1.msra.mxu0 0.0
    %511 = vmatprep.subr.mxu0 0.0
    %512 = vmatpush1.msra.mxu0 0.0
    %513 = vmatprep.subr.mxu0 0.0
    %514 = vmatpush1.msra.mxu0 0.0
    %515 = vmatprep.subr.mxu0 0.0
    %516 = vmatpush1.msra.mxu0 0.0
    %517 = vmatprep.subr.mxu0 0.0
    %518 = vmatpush1.msra.mxu0 0.0
    %519 = vmatprep.subr.mxu0 0.0
    %520 = vmatpush1.msra.mxu0 0.0
    %521 = vmatprep.subr.mxu0 0.0
    %522 = vmatpush1.msra.mxu0 0.0
    %523 = vmatprep.subr.mxu0 0.0
    %524 = vmatpush1.msra.mxu0 0.0
    %525 = vmatprep.subr.mxu0 0.0
    %526 = vmatpush1.msra.mxu0 0.0
    %527 = vmatprep.subr.mxu0 0.0
    %528 = vmatpush1.msra.mxu0 0.0
    %529 = vmatprep.subr.mxu0 0.0
    %530 = vmatpush1.msra.mxu0 0.0
    %531 = vmatprep.subr.mxu0 0.0
    %532 = vmatpush1.msra.mxu0 0.0
    %533 = vmatprep.subr.mxu0 0.0
    %534 = vmatpush1.msra.mxu0 0.0
    %535 = vmatprep.subr.mxu0 0.0
    %536 = vmatpush1.msra.mxu0 0.0
    %537 = vmatprep.subr.mxu0 0.0
    %538 = vmatpush1.msra.mxu0 0.0
    %539 = vmatprep.subr.mxu0 0.0
    %540 = vmatpush1.msra.mxu0 0.0
    %541 = vmatprep.subr.mxu0 0.0
    %542 = vmatpush1.msra.mxu0 0.0
    %543 = vmatprep.subr.mxu0 0.0
    %544 = vmatpush1.msra.mxu0 0.0
    %545 = vmatprep.subr.mxu0 0.0
    %546 = vmatpush1.msra.mxu0 0.0
    %547 = vmatprep.subr.mxu0 0.0
    %548 = vmatpush1.msra.mxu0 0.0
    %549 = vmatprep.subr.mxu0 0.0
    %550 = vmatpush1.msra.mxu0 0.0
    %551 = vmatprep.subr.mxu0 0.0
    %552 = vmatpush1.msra.mxu0 0.0
    %553 = vmatprep.subr.mxu0 0.0
    %554 = vmatpush1.msra.mxu0 0.0
    %555 = vmatprep.mubr.f32.mxu0 0.0
    %556 = vmatmul.mubr.f32.gmra.mrb[0].mxu0 %v486
    %v557 = vpop.f32.mrb[0].mxu0
    %v558 = vadd.f32 0.0, %v557
    %v559 = vpop.f32.mrb[0].mxu0
    %560 = vmatprep.mubr.f32.mxu0 0.0
    %561 = vmatmul.mubr.f32.gmra.mrb[0].mxu0 %v489
    %v562 = vpop.f32.mrb[0].mxu0
    %v563 = vadd.f32 0.0, %v562
    %v564 = vpop.f32.mrb[0].mxu0
    %565 = vdwg.mxu0
    %566 = vrot.lane.b32.xlu0 %v151, 112
    %v567 = vpop.permute.xlu0 %566
    %568 = vrot.lane.b32.xlu0 %v156, 112
    %v569 = vpop.permute.xlu0 %568
    %570 = vrot.lane.b32.xlu0 %v151, 80
    %v571 = vpop.permute.xlu0 %570
    %572 = vrot.lane.b32.xlu0 %v156, 80
    %v573 = vpop.permute.xlu0 %572
    %v574 = vsel %vm172, %v567, 0
    %v576 = vsel %vm172, %v569, 0
    %v578 = vsel %vm172, %v571, 0
    %v580 = vsel %vm172, %v573, 0
    %582 = vmatprep.subr.mxu0 0.0
    %583 = vmatpush1.xpose.msra.mxu0 %v578
    %584 = vmatprep.subr.mxu0 0.0
    %585 = vmatpush1.xpose.msra.mxu0 %v580
    %586 = vmatprep.subr.mxu0 0.0
    %587 = vmatpush1.xpose.msra.mxu0 0.0
    %588 = vmatprep.subr.mxu0 0.0
    %589 = vmatpush1.xpose.msra.mxu0 0.0
    %590 = vmatprep.subr.mxu0 0.0
    %591 = vmatpush1.xpose.msra.mxu0 0.0
    %592 = vmatprep.subr.mxu0 0.0
    %593 = vmatpush1.xpose.msra.mxu0 0.0
    %594 = vmatprep.subr.mxu0 0.0
    %595 = vmatpush1.xpose.msra.mxu0 0.0
    %596 = vmatprep.subr.mxu0 0.0
    %597 = vmatpush1.xpose.msra.mxu0 0.0
    %598 = vmatprep.subr.mxu0 0.0
    %599 = vmatpush1.xpose.msra.mxu0 0.0
    %600 = vmatprep.subr.mxu0 0.0
    %601 = vmatpush1.xpose.msra.mxu0 0.0
    %602 = vmatprep.subr.mxu0 0.0
    %603 = vmatpush1.xpose.msra.mxu0 0.0
    %604 = vmatprep.subr.mxu0 0.0
    %605 = vmatpush1.xpose.msra.mxu0 0.0
    %606 = vmatprep.subr.mxu0 0.0
    %607 = vmatpush1.xpose.msra.mxu0 0.0
    %608 = vmatprep.subr.mxu0 0.0
    %609 = vmatpush1.xpose.msra.mxu0 0.0
    %610 = vmatprep.subr.mxu0 0.0
    %611 = vmatpush1.xpose.msra.mxu0 0.0
    %612 = vmatprep.subr.mxu0 0.0
    %613 = vmatpush1.xpose.msra.mxu0 0.0
    %614 = vmatprep.subr.mxu0 0.0
    %615 = vmatpush1.xpose.msra.mxu0 0.0
    %616 = vmatprep.subr.mxu0 0.0
    %617 = vmatpush1.xpose.msra.mxu0 0.0
    %618 = vmatprep.subr.mxu0 0.0
    %619 = vmatpush1.xpose.msra.mxu0 0.0
    %620 = vmatprep.subr.mxu0 0.0
    %621 = vmatpush1.xpose.msra.mxu0 0.0
    %622 = vmatprep.subr.mxu0 0.0
    %623 = vmatpush1.xpose.msra.mxu0 0.0
    %624 = vmatprep.subr.mxu0 0.0
    %625 = vmatpush1.xpose.msra.mxu0 0.0
    %626 = vmatprep.subr.mxu0 0.0
    %627 = vmatpush1.xpose.msra.mxu0 0.0
    %628 = vmatprep.subr.mxu0 0.0
    %629 = vmatpush1.xpose.msra.mxu0 0.0
    %630 = vmatprep.subr.mxu0 0.0
    %631 = vmatpush1.xpose.msra.mxu0 0.0
    %632 = vmatprep.subr.mxu0 0.0
    %633 = vmatpush1.xpose.msra.mxu0 0.0
    %634 = vmatprep.subr.mxu0 0.0
    %635 = vmatpush1.xpose.msra.mxu0 0.0
    %636 = vmatprep.subr.mxu0 0.0
    %637 = vmatpush1.xpose.msra.mxu0 0.0
    %638 = vmatprep.subr.mxu0 0.0
    %639 = vmatpush1.xpose.msra.mxu0 0.0
    %640 = vmatprep.subr.mxu0 0.0
    %641 = vmatpush1.xpose.msra.mxu0 0.0
    %642 = vmatprep.subr.mxu0 0.0
    %643 = vmatpush1.xpose.msra.mxu0 0.0
    %644 = vmatprep.subr.mxu0 0.0
    %645 = vmatpush1.xpose.msra.mxu0 0.0
    %646 = vmatprep.mubr.f32.mxu0 0.0
    %647 = vmatmul.mubr.f32.gmra.mrb[0].mxu0 %v574
    %v648 = vpop.f32.mrb[0].mxu0
    %v649 = vadd.f32 %v159, %v648
    %v650 = vpop.f32.mrb[0].mxu0
    %651 = vmatprep.mubr.f32.mxu0 0.0
    %652 = vmatmul.mubr.f32.gmra.mrb[0].mxu0 %v576
    %v653 = vpop.f32.mrb[0].mxu0
    %v654 = vadd.f32 %v160, %v653
    %v655 = vpop.f32.mrb[0].mxu0
    %656 = vdwg.mxu0
    %v657 = vsel %vm256, %v649, -inf
    %658 = vmax.xlane.f32.xlu0 %v657
    %v659 = vpop.xlane.xlu0 %658
    %v660 = vsel %vm256, %v654, -inf
    %661 = vmax.xlane.f32.xlu0 %v660
    %v662 = vpop.xlane.xlu0 %661
    %v663 = vsub.f32 %v649, %v659
    %v664 = vsub.f32 %v654, %v662
    %v665 = vmul.f32 %v663, 1.442695
    %v666 = vpow.pop %v665
    %v667 = vmul.f32 %v664, 1.442695
    %v668 = vpow.pop %v667
    %v669 = vsel %vm256, %v666, 0.0
    %670 = vadd.xlane.f32.xlu0 %v669
    %v671 = vpop.xlane.xlu0 %670
    %v672 = vsel %vm256, %v668, 0.0
    %673 = vadd.xlane.f32.xlu0 %v672
    %v674 = vpop.xlane.xlu0 %673
    %v675 = vrcp.pop %v671
    %v676 = vrcp.pop %v674
    %v677 = vmul.f32 %v666, %v675
    %v678 = vmul.f32 %v668, %v676
    %679 = vrot.lane.b32.xlu0 %v151, 48
    %v680 = vpop.permute.xlu0 %679
    %681 = vrot.lane.b32.xlu0 %v156, 48
    %v682 = vpop.permute.xlu0 %681
    %v686 = vsel %vm256, %v677, 0
    %v689 = vsel %vm256, %v678, 0
    %691 = vmatprep.subr.mxu0 0.0
    %692 = vmatpush1.msra.mxu0 %v680
    %693 = vmatprep.subr.mxu0 0.0
    %694 = vmatpush1.msra.mxu0 %v682
    %695 = vmatprep.subr.mxu0 0.0
    %696 = vmatpush1.msra.mxu0 0.0
    %697 = vmatprep.subr.mxu0 0.0
    %698 = vmatpush1.msra.mxu0 0.0
    %699 = vmatprep.subr.mxu0 0.0
    %700 = vmatpush1.msra.mxu0 0.0
    %701 = vmatprep.subr.mxu0 0.0
    %702 = vmatpush1.msra.mxu0 0.0
    %703 = vmatprep.subr.mxu0 0.0
    %704 = vmatpush1.msra.mxu0 0.0
    %705 = vmatprep.subr.mxu0 0.0
    %706 = vmatpush1.msra.mxu0 0.0
    %707 = vmatprep.subr.mxu0 0.0
    %708 = vmatpush1.msra.mxu0 0.0
    %709 = vmatprep.subr.mxu0 0.0
    %710 = vmatpush1.msra.mxu0 0.0
    %711 = vmatprep.subr.mxu0 0.0
    %712 = vmatpush1.msra.mxu0 0.0
    %713 = vmatprep.subr.mxu0 0.0
    %714 = vmatpush1.msra.mxu0 0.0
    %715 = vmatprep.subr.mxu0 0.0
    %716 = vmatpush1.msra.mxu0 0.0
    %717 = vmatprep.subr.mxu0 0.0
    %718 = vmatpush1.msra.mxu0 0.0
    %719 = vmatprep.subr.mxu0 0.0
    %720 = vmatpush1.msra.mxu0 0.0
    %721 = vmatprep.subr.mxu0 0.0
    %722 = vmatpush1.msra.mxu0 0.0
    %723 = vmatprep.subr.mxu0 0.0
    %724 = vmatpush1.msra.mxu0 0.0
    %725 = vmatprep.subr.mxu0 0.0
    %726 = vmatpush1.msra.mxu0 0.0
    %727 = vmatprep.subr.mxu0 0.0
    %728 = vmatpush1.msra.mxu0 0.0
    %729 = vmatprep.subr.mxu0 0.0
    %730 = vmatpush1.msra.mxu0 0.0
    %731 = vmatprep.subr.mxu0 0.0
    %732 = vmatpush1.msra.mxu0 0.0
    %733 = vmatprep.subr.mxu0 0.0
    %734 = vmatpush1.msra.mxu0 0.0
    %735 = vmatprep.subr.mxu0 0.0
    %736 = vmatpush1.msra.mxu0 0.0
    %737 = vmatprep.subr.mxu0 0.0
    %738 = vmatpush1.msra.mxu0 0.0
    %739 = vmatprep.subr.mxu0 0.0
    %740 = vmatpush1.msra.mxu0 0.0
    %741 = vmatprep.subr.mxu0 0.0
    %742 = vmatpush1.msra.mxu0 0.0
    %743 = vmatprep.subr.mxu0 0.0
    %744 = vmatpush1.msra.mxu0 0.0
    %745 = vmatprep.subr.mxu0 0.0
    %746 = vmatpush1.msra.mxu0 0.0
    %747 = vmatprep.subr.mxu0 0.0
    %748 = vmatpush1.msra.mxu0 0.0
    %749 = vmatprep.subr.mxu0 0.0
    %750 = vmatpush1.msra.mxu0 0.0
    %751 = vmatprep.subr.mxu0 0.0
    %752 = vmatpush1.msra.mxu0 0.0
    %753 = vmatprep.subr.mxu0 0.0
    %754 = vmatpush1.msra.mxu0 0.0
    %755 = vmatprep.mubr.f32.mxu0 0.0
    %756 = vmatmul.mubr.f32.gmra.mrb[0].mxu0 %v686
    %v757 = vpop.f32.mrb[0].mxu0
    %v758 = vadd.f32 0.0, %v757
    %v759 = vpop.f32.mrb[0].mxu0
    %760 = vmatprep.mubr.f32.mxu0 0.0
    %761 = vmatmul.mubr.f32.gmra.mrb[0].mxu0 %v689
    %v762 = vpop.f32.mrb[0].mxu0
    %v763 = vadd.f32 0.0, %v762
    %v764 = vpop.f32.mrb[0].mxu0
    %765 = vdwg.mxu0
    %766 = vrot.lane.b32.xlu0 %v151, 104
    %v767 = vpop.permute.xlu0 %766
    %768 = vrot.lane.b32.xlu0 %v156, 104
    %v769 = vpop.permute.xlu0 %768
    %770 = vrot.lane.b32.xlu0 %v151, 72
    %v771 = vpop.permute.xlu0 %770
    %772 = vrot.lane.b32.xlu0 %v156, 72
    %v773 = vpop.permute.xlu0 %772
    %v774 = vsel %vm172, %v767, 0
    %v776 = vsel %vm172, %v769, 0
    %v778 = vsel %vm172, %v771, 0
    %v780 = vsel %vm172, %v773, 0
    %782 = vmatprep.subr.mxu0 0.0
    %783 = vmatpush1.xpose.msra.mxu0 %v778
    %784 = vmatprep.subr.mxu0 0.0
    %785 = vmatpush1.xpose.msra.mxu0 %v780
    %786 = vmatprep.subr.mxu0 0.0
    %787 = vmatpush1.xpose.msra.mxu0 0.0
    %788 = vmatprep.subr.mxu0 0.0
    %789 = vmatpush1.xpose.msra.mxu0 0.0
    %790 = vmatprep.subr.mxu0 0.0
    %791 = vmatpush1.xpose.msra.mxu0 0.0
    %792 = vmatprep.subr.mxu0 0.0
    %793 = vmatpush1.xpose.msra.mxu0 0.0
    %794 = vmatprep.subr.mxu0 0.0
    %795 = vmatpush1.xpose.msra.mxu0 0.0
    %796 = vmatprep.subr.mxu0 0.0
    %797 = vmatpush1.xpose.msra.mxu0 0.0
    %798 = vmatprep.subr.mxu0 0.0
    %799 = vmatpush1.xpose.msra.mxu0 0.0
    %800 = vmatprep.subr.mxu0 0.0
    %801 = vmatpush1.xpose.msra.mxu0 0.0
    %802 = vmatprep.subr.mxu0 0.0
    %803 = vmatpush1.xpose.msra.mxu0 0.0
    %804 = vmatprep.subr.mxu0 0.0
    %805 = vmatpush1.xpose.msra.mxu0 0.0
    %806 = vmatprep.subr.mxu0 0.0
    %807 = vmatpush1.xpose.msra.mxu0 0.0
    %808 = vmatprep.subr.mxu0 0.0
    %809 = vmatpush1.xpose.msra.mxu0 0.0
    %810 = vmatprep.subr.mxu0 0.0
    %811 = vmatpush1.xpose.msra.mxu0 0.0
    %812 = vmatprep.subr.mxu0 0.0
    %813 = vmatpush1.xpose.msra.mxu0 0.0
    %814 = vmatprep.subr.mxu0 0.0
    %815 = vmatpush1.xpose.msra.mxu0 0.0
    %816 = vmatprep.subr.mxu0 0.0
    %817 = vmatpush1.xpose.msra.mxu0 0.0
    %818 = vmatprep.subr.mxu0 0.0
    %819 = vmatpush1.xpose.msra.mxu0 0.0
    %820 = vmatprep.subr.mxu0 0.0
    %821 = vmatpush1.xpose.msra.mxu0 0.0
    %822 = vmatprep.subr.mxu0 0.0
    %823 = vmatpush1.xpose.msra.mxu0 0.0
    %824 = vmatprep.subr.mxu0 0.0
    %825 = vmatpush1.xpose.msra.mxu0 0.0
    %826 = vmatprep.subr.mxu0 0.0
    %827 = vmatpush1.xpose.msra.mxu0 0.0
    %828 = vmatprep.subr.mxu0 0.0
    %829 = vmatpush1.xpose.msra.mxu0 0.0
    %830 = vmatprep.subr.mxu0 0.0
    %831 = vmatpush1.xpose.msra.mxu0 0.0
    %832 = vmatprep.subr.mxu0 0.0
    %833 = vmatpush1.xpose.msra.mxu0 0.0
    %834 = vmatprep.subr.mxu0 0.0
    %835 = vmatpush1.xpose.msra.mxu0 0.0
    %836 = vmatprep.subr.mxu0 0.0
    %837 = vmatpush1.xpose.msra.mxu0 0.0
    %838 = vmatprep.subr.mxu0 0.0
    %839 = vmatpush1.xpose.msra.mxu0 0.0
    %840 = vmatprep.subr.mxu0 0.0
    %841 = vmatpush1.xpose.msra.mxu0 0.0
    %842 = vmatprep.subr.mxu0 0.0
    %843 = vmatpush1.xpose.msra.mxu0 0.0
    %844 = vmatprep.subr.mxu0 0.0
    %845 = vmatpush1.xpose.msra.mxu0 0.0
    %846 = vmatprep.mubr.f32.mxu0 0.0
    %847 = vmatmul.mubr.f32.gmra.mrb[0].mxu0 %v774
    %v848 = vpop.f32.mrb[0].mxu0
    %v849 = vadd.f32 %v159, %v848
    %v850 = vpop.f32.mrb[0].mxu0
    %851 = vmatprep.mubr.f32.mxu0 0.0
    %852 = vmatmul.mubr.f32.gmra.mrb[0].mxu0 %v776
    %v853 = vpop.f32.mrb[0].mxu0
    %v854 = vadd.f32 %v160, %v853
    %v855 = vpop.f32.mrb[0].mxu0
    %856 = vdwg.mxu0
    %v857 = vsel %vm256, %v849, -inf
    %858 = vmax.xlane.f32.xlu0 %v857
    %v859 = vpop.xlane.xlu0 %858
    %v860 = vsel %vm256, %v854, -inf
    %861 = vmax.xlane.f32.xlu0 %v860
    %v862 = vpop.xlane.xlu0 %861
    %v863 = vsub.f32 %v849, %v859
    %v864 = vsub.f32 %v854, %v862
    %v865 = vmul.f32 %v863, 1.442695
    %v866 = vpow.pop %v865
    %v867 = vmul.f32 %v864, 1.442695
    %v868 = vpow.pop %v867
    %v869 = vsel %vm256, %v866, 0.0
    %870 = vadd.xlane.f32.xlu0 %v869
    %v871 = vpop.xlane.xlu0 %870
    %v872 = vsel %vm256, %v868, 0.0
    %873 = vadd.xlane.f32.xlu0 %v872
    %v874 = vpop.xlane.xlu0 %873
    %v875 = vrcp.pop %v871
    %v876 = vrcp.pop %v874
    %v877 = vmul.f32 %v866, %v875
    %v878 = vmul.f32 %v868, %v876
    %879 = vrot.lane.b32.xlu0 %v151, 40
    %v880 = vpop.permute.xlu0 %879
    %881 = vrot.lane.b32.xlu0 %v156, 40
    %v882 = vpop.permute.xlu0 %881
    %v886 = vsel %vm256, %v877, 0
    %v889 = vsel %vm256, %v878, 0
    %891 = vmatprep.subr.mxu0 0.0
    %892 = vmatpush1.msra.mxu0 %v880
    %893 = vmatprep.subr.mxu0 0.0
    %894 = vmatpush1.msra.mxu0 %v882
    %895 = vmatprep.subr.mxu0 0.0
    %896 = vmatpush1.msra.mxu0 0.0
    %897 = vmatprep.subr.mxu0 0.0
    %898 = vmatpush1.msra.mxu0 0.0
    %899 = vmatprep.subr.mxu0 0.0
    %900 = vmatpush1.msra.mxu0 0.0
    %901 = vmatprep.subr.mxu0 0.0
    %902 = vmatpush1.msra.mxu0 0.0
    %903 = vmatprep.subr.mxu0 0.0
    %904 = vmatpush1.msra.mxu0 0.0
    %905 = vmatprep.subr.mxu0 0.0
    %906 = vmatpush1.msra.mxu0 0.0
    %907 = vmatprep.subr.mxu0 0.0
    %908 = vmatpush1.msra.mxu0 0.0
    %909 = vmatprep.subr.mxu0 0.0
    %910 = vmatpush1.msra.mxu0 0.0
    %911 = vmatprep.subr.mxu0 0.0
    %912 = vmatpush1.msra.mxu0 0.0
    %913 = vmatprep.subr.mxu0 0.0
    %914 = vmatpush1.msra.mxu0 0.0
    %915 = vmatprep.subr.mxu0 0.0
    %916 = vmatpush1.msra.mxu0 0.0
    %917 = vmatprep.subr.mxu0 0.0
    %918 = vmatpush1.msra.mxu0 0.0
    %919 = vmatprep.subr.mxu0 0.0
    %920 = vmatpush1.msra.mxu0 0.0
    %921 = vmatprep.subr.mxu0 0.0
    %922 = vmatpush1.msra.mxu0 0.0
    %923 = vmatprep.subr.mxu0 0.0
    %924 = vmatpush1.msra.mxu0 0.0
    %925 = vmatprep.subr.mxu0 0.0
    %926 = vmatpush1.msra.mxu0 0.0
    %927 = vmatprep.subr.mxu0 0.0
    %928 = vmatpush1.msra.mxu0 0.0
    %929 = vmatprep.subr.mxu0 0.0
    %930 = vmatpush1.msra.mxu0 0.0
    %931 = vmatprep.subr.mxu0 0.0
    %932 = vmatpush1.msra.mxu0 0.0
    %933 = vmatprep.subr.mxu0 0.0
    %934 = vmatpush1.msra.mxu0 0.0
    %935 = vmatprep.subr.mxu0 0.0
    %936 = vmatpush1.msra.mxu0 0.0
    %937 = vmatprep.subr.mxu0 0.0
    %938 = vmatpush1.msra.mxu0 0.0
    %939 = vmatprep.subr.mxu0 0.0
    %940 = vmatpush1.msra.mxu0 0.0
    %941 = vmatprep.subr.mxu0 0.0
    %942 = vmatpush1.msra.mxu0 0.0
    %943 = vmatprep.subr.mxu0 0.0
    %944 = vmatpush1.msra.mxu0 0.0
    %945 = vmatprep.subr.mxu0 0.0
    %946 = vmatpush1.msra.mxu0 0.0
    %947 = vmatprep.subr.mxu0 0.0
    %948 = vmatpush1.msra.mxu0 0.0
    %949 = vmatprep.subr.mxu0 0.0
    %950 = vmatpush1.msra.mxu0 0.0
    %951 = vmatprep.subr.mxu0 0.0
    %952 = vmatpush1.msra.mxu0 0.0
    %953 = vmatprep.subr.mxu0 0.0
    %954 = vmatpush1.msra.mxu0 0.0
    %955 = vmatprep.mubr.f32.mxu0 0.0
    %956 = vmatmul.mubr.f32.gmra.mrb[0].mxu0 %v886
    %v957 = vpop.f32.mrb[0].mxu0
    %v958 = vadd.f32 0.0, %v957
    %v959 = vpop.f32.mrb[0].mxu0
    %960 = vmatprep.mubr.f32.mxu0 0.0
    %961 = vmatmul.mubr.f32.gmra.mrb[0].mxu0 %v889
    %v962 = vpop.f32.mrb[0].mxu0
    %v963 = vadd.f32 0.0, %v962
    %v964 = vpop.f32.mrb[0].mxu0
    %965 = vdwg.mxu0
    %968 = vrot.lane.b32.xlu0 %v558, 8
    %v969 = vpop.permute.xlu0 %968
    %970 = vrot.lane.b32.xlu0 %v563, 8
    %v971 = vpop.permute.xlu0 %970
    %976 = vrot.lane.b32.xlu0 %v758, 16
    %v977 = vpop.permute.xlu0 %976
    %978 = vrot.lane.b32.xlu0 %v763, 16
    %v979 = vpop.permute.xlu0 %978
    %984 = vrot.lane.b32.xlu0 %v958, 24
    %v985 = vpop.permute.xlu0 %984
    %986 = vrot.lane.b32.xlu0 %v963, 24
    %v987 = vpop.permute.xlu0 %986
    %v990 = vsel %vm172, %v358, %v969
    %v991 = vsel %vm172, %v363, %v971
    %v992 = vsel %vm256, %v990, %v977
    %v993 = vsel %vm256, %v991, %v979
    %vm994 = vcmask 195584
    %v995 = vsel %vm994, %v992, %v985
    %v996 = vsel %vm994, %v993, %v987
    %v997 = vlaneseq
    %v998 = vshrl.u32 %v997, 7
    %v999 = vsub.s32 0, %v998
    %v1000 = vrot.slane %v165, %v999
    %v1002 = vsel %vm77, %v995, 0
    %v1005 = vsel %vm77, %v996, 0
    %1007 = vmatprep.subr.mxu0 0.0
    %1008 = vmatpush1.msra.mxu0 %v161
    %1009 = vmatprep.subr.mxu0 0.0
    %1010 = vmatpush1.msra.mxu0 %v162
    %1011 = vmatprep.subr.mxu0 0.0
    %1012 = vmatpush1.msra.mxu0 %v163
    %1013 = vmatprep.subr.mxu0 0.0
    %1014 = vmatpush1.msra.mxu0 %v164
    %1015 = vmatprep.subr.mxu0 0.0
    %1016 = vmatpush1.msra.mxu0 0.0
    %1017 = vmatprep.subr.mxu0 0.0
    %1018 = vmatpush1.msra.mxu0 0.0
    %1019 = vmatprep.subr.mxu0 0.0
    %1020 = vmatpush1.msra.mxu0 0.0
    %1021 = vmatprep.subr.mxu0 0.0
    %1022 = vmatpush1.msra.mxu0 0.0
    %1023 = vmatprep.subr.mxu0 0.0
    %1024 = vmatpush1.msra.mxu0 0.0
    %1025 = vmatprep.subr.mxu0 0.0
    %1026 = vmatpush1.msra.mxu0 0.0
    %1027 = vmatprep.subr.mxu0 0.0
    %1028 = vmatpush1.msra.mxu0 0.0
    %1029 = vmatprep.subr.mxu0 0.0
    %1030 = vmatpush1.msra.mxu0 0.0
    %1031 = vmatprep.subr.mxu0 0.0
    %1032 = vmatpush1.msra.mxu0 0.0
    %1033 = vmatprep.subr.mxu0 0.0
    %1034 = vmatpush1.msra.mxu0 0.0
    %1035 = vmatprep.subr.mxu0 0.0
    %1036 = vmatpush1.msra.mxu0 0.0
    %1037 = vmatprep.subr.mxu0 0.0
    %1038 = vmatpush1.msra.mxu0 0.0
    %1039 = vmatprep.subr.mxu0 0.0
    %1040 = vmatpush1.msra.mxu0 0.0
    %1041 = vmatprep.subr.mxu0 0.0
    %1042 = vmatpush1.msra.mxu0 0.0
    %1043 = vmatprep.subr.mxu0 0.0
    %1044 = vmatpush1.msra.mxu0 0.0
    %1045 = vmatprep.subr.mxu0 0.0
    %1046 = vmatpush1.msra.mxu0 0.0
    %1047 = vmatprep.subr.mxu0 0.0
    %1048 = vmatpush1.msra.mxu0 0.0
    %1049 = vmatprep.subr.mxu0 0.0
    %1050 = vmatpush1.msra.mxu0 0.0
    %1051 = vmatprep.subr.mxu0 0.0
    %1052 = vmatpush1.msra.mxu0 0.0
    %1053 = vmatprep.subr.mxu0 0.0
    %1054 = vmatpush1.msra.mxu0 0.0
    %1055 = vmatprep.subr.mxu0 0.0
    %1056 = vmatpush1.msra.mxu0 0.0
    %1057 = vmatprep.subr.mxu0 0.0
    %1058 = vmatpush1.msra.mxu0 0.0
    %1059 = vmatprep.subr.mxu0 0.0
    %1060 = vmatpush1.msra.mxu0 0.0
    %1061 = vmatprep.subr.mxu0 0.0
    %1062 = vmatpush1.msra.mxu0 0.0
    %1063 = vmatprep.subr.mxu0 0.0
    %1064 = vmatpush1.msra.mxu0 0.0
    %1065 = vmatprep.subr.mxu0 0.0
    %1066 = vmatpush1.msra.mxu0 0.0
    %1067 = vmatprep.subr.mxu0 0.0
    %1068 = vmatpush1.msra.mxu0 0.0
    %1069 = vmatprep.subr.mxu0 0.0
    %1070 = vmatpush1.msra.mxu0 0.0
    %1071 = vmatprep.mubr.f32.mxu0 0.0
    %1072 = vmatmul.mubr.f32.gmra.mrb[0].mxu0 %v1002
    %v1073 = vpop.f32.mrb[0].mxu0
    %v1074 = vadd.f32 %v1000, %v1073
    %v1075 = vpop.f32.mrb[0].mxu0
    %1076 = vmatprep.mubr.f32.mxu0 0.0
    %1077 = vmatmul.mubr.f32.gmra.mrb[0].mxu0 %v1005
    %v1078 = vpop.f32.mrb[0].mxu0
    %v1079 = vadd.f32 %v1000, %v1078
    %v1080 = vpop.f32.mrb[0].mxu0
    %1081 = vdwg.mxu0
    %1082 = vrot.lane.b32.xlu0 %v477, 16
    %v1083 = vpop.permute.xlu0 %1082
    %1084 = vrot.lane.b32.xlu0 %v478, 16
    %v1085 = vpop.permute.xlu0 %1084
    %1088 = vrot.lane.b32.xlu0 %v677, 32
    %v1089 = vpop.permute.xlu0 %1088
    %1090 = vrot.lane.b32.xlu0 %v678, 32
    %v1091 = vpop.permute.xlu0 %1090
    %1094 = vrot.lane.b32.xlu0 %v877, 48
    %v1095 = vpop.permute.xlu0 %1094
    %1096 = vrot.lane.b32.xlu0 %v878, 48
    %v1097 = vpop.permute.xlu0 %1096
    %v1100 = vsel %vm256, %v277, %v1083
    %v1101 = vsel %vm256, %v278, %v1085
    %v1102 = vsel %vm77, %v1100, %v1089
    %v1103 = vsel %vm77, %v1101, %v1091
    %vm1104 = vcmask 392192
    %v1105 = vsel %vm1104, %v1102, %v1095
    %v1106 = vsel %vm1104, %v1103, %v1097
    %v1107 = vadd.f32 %v62, %v1074
    %v1108 = vadd.f32 %v63, %v1079
    %v1109 = vld [vmem:[%s16] sm:$0x1]
    %v1110 = vld [vmem:[%s17] sm:$0x1]
    %v1111 = vsel %vm77, %v1107, 0.0
    %1112 = vadd.xlane.f32.xlu0 %v1111
    %v1113 = vpop.xlane.xlu0 %1112
    %v1114 = vsel %vm77, %v1108, 0.0
    %1115 = vadd.xlane.f32.xlu0 %v1114
    %v1116 = vpop.xlane.xlu0 %1115
    %v1117 = vrcp.pop 32.0
    %v1118 = vmul.f32 %v1113, %v1117
    %v1119 = vmul.f32 %v1116, %v1117
    %v1120 = vsub.f32 %v1107, %v1118
    %v1121 = vsub.f32 %v1108, %v1119
    %v1122 = vmul.f32 %v1120, %v1120
    %v1123 = vmul.f32 %v1121, %v1121
    %v1124 = vsel %vm77, %v1122, 0.0
    %1125 = vadd.xlane.f32.xlu0 %v1124
    %v1126 = vpop.xlane.xlu0 %1125
    %v1127 = vsel %vm77, %v1123, 0.0
    %1128 = vadd.xlane.f32.xlu0 %v1127
    %v1129 = vpop.xlane.xlu0 %1128
    %v1130 = vmul.f32 %v1126, %v1117
    %v1131 = vmul.f32 %v1129, %v1117
    %v1132 = vadd.f32 %v1130, 1e-05
    %v1133 = vadd.f32 %v1131, 1e-05
    %v1134 = vrsqrt.pop %v1132
    %v1135 = vrsqrt.pop %v1133
    %v1136 = vmul.f32 %v1120, %v1134
    %v1137 = vmul.f32 %v1121, %v1135
    %v1138 = vlaneseq
    %v1139 = vshrl.u32 %v1138, 7
    %v1140 = vsub.s32 0, %v1139
    %v1141 = vrot.slane %v1109, %v1140
    %v1142 = vmul.f32 %v1136, %v1141
    %v1143 = vmul.f32 %v1137, %v1141
    %v1144 = vlaneseq
    %v1145 = vshrl.u32 %v1144, 7
    %v1146 = vsub.s32 0, %v1145
    %v1147 = vrot.slane %v1110, %v1146
    %v1148 = vadd.f32 %v1142, %v1147
    %v1149 = vadd.f32 %v1143, %v1147
    %v1150 = vld [vmem:[%s6] sm:$0xff]
    %v1151 = vld [vmem:[%s6 + $0x8] sm:$0xff]
    %v1152 = vld [vmem:[%s6 + $0x10] sm:$0xff]
    %v1153 = vld [vmem:[%s6 + $0x18] sm:$0xff]
    %v1154 = vld [vmem:[%s7] sm:$0x1]
    %v1156 = vlaneseq
    %v1157 = vshrl.u32 %v1156, 7
    %v1158 = vsub.s32 0, %v1157
    %v1159 = vrot.slane %v1154, %v1158
    %v1162 = vsel %vm77, %v1148, 0
    %v1165 = vsel %vm77, %v1149, 0
    %1167 = vmatprep.subr.mxu0 0.0
    %1168 = vmatpush1.msra.mxu0 %v1150
    %1169 = vmatprep.subr.mxu0 0.0
    %1170 = vmatpush1.msra.mxu0 %v1151
    %1171 = vmatprep.subr.mxu0 0.0
    %1172 = vmatpush1.msra.mxu0 %v1152
    %1173 = vmatprep.subr.mxu0 0.0
    %1174 = vmatpush1.msra.mxu0 %v1153
    %1175 = vmatprep.subr.mxu0 0.0
    %1176 = vmatpush1.msra.mxu0 0.0
    %1177 = vmatprep.subr.mxu0 0.0
    %1178 = vmatpush1.msra.mxu0 0.0
    %1179 = vmatprep.subr.mxu0 0.0
    %1180 = vmatpush1.msra.mxu0 0.0
    %1181 = vmatprep.subr.mxu0 0.0
    %1182 = vmatpush1.msra.mxu0 0.0
    %1183 = vmatprep.subr.mxu0 0.0
    %1184 = vmatpush1.msra.mxu0 0.0
    %1185 = vmatprep.subr.mxu0 0.0
    %1186 = vmatpush1.msra.mxu0 0.0
    %1187 = vmatprep.subr.mxu0 0.0
    %1188 = vmatpush1.msra.mxu0 0.0
    %1189 = vmatprep.subr.mxu0 0.0
    %1190 = vmatpush1.msra.mxu0 0.0
    %1191 = vmatprep.subr.mxu0 0.0
    %1192 = vmatpush1.msra.mxu0 0.0
    %1193 = vmatprep.subr.mxu0 0.0
    %1194 = vmatpush1.msra.mxu0 0.0
    %1195 = vmatprep.subr.mxu0 0.0
    %1196 = vmatpush1.msra.mxu0 0.0
    %1197 = vmatprep.subr.mxu0 0.0
    %1198 = vmatpush1.msra.mxu0 0.0
    %1199 = vmatprep.subr.mxu0 0.0
    %1200 = vmatpush1.msra.mxu0 0.0
    %1201 = vmatprep.subr.mxu0 0.0
    %1202 = vmatpush1.msra.mxu0 0.0
    %1203 = vmatprep.subr.mxu0 0.0
    %1204 = vmatpush1.msra.mxu0 0.0
    %1205 = vmatprep.subr.mxu0 0.0
    %1206 = vmatpush1.msra.mxu0 0.0
    %1207 = vmatprep.subr.mxu0 0.0
    %1208 = vmatpush1.msra.mxu0 0.0
    %1209 = vmatprep.subr.mxu0 0.0
    %1210 = vmatpush1.msra.mxu0 0.0
    %1211 = vmatprep.subr.mxu0 0.0
    %1212 = vmatpush1.msra.mxu0 0.0
    %1213 = vmatprep.subr.mxu0 0.0
    %1214 = vmatpush1.msra.mxu0 0.0
    %1215 = vmatprep.subr.mxu0 0.0
    %1216 = vmatpush1.msra.mxu0 0.0
    %1217 = vmatprep.subr.mxu0 0.0
    %1218 = vmatpush1.msra.mxu0 0.0
    %1219 = vmatprep.subr.mxu0 0.0
    %1220 = vmatpush1.msra.mxu0 0.0
    %1221 = vmatprep.subr.mxu0 0.0
    %1222 = vmatpush1.msra.mxu0 0.0
    %1223 = vmatprep.subr.mxu0 0.0
    %1224 = vmatpush1.msra.mxu0 0.0
    %1225 = vmatprep.subr.mxu0 0.0
    %1226 = vmatpush1.msra.mxu0 0.0
    %1227 = vmatprep.subr.mxu0 0.0
    %1228 = vmatpush1.msra.mxu0 0.0
    %1229 = vmatprep.subr.mxu0 0.0
    %1230 = vmatpush1.msra.mxu0 0.0
    %1231 = vmatprep.mubr.f32.mxu0 0.0
    %1232 = vmatmul.mubr.f32.gmra.mrb[0].mxu0 %v1162
    %v1233 = vpop.f32.mrb[0].mxu0
    %v1234 = vadd.f32 %v1159, %v1233
    %v1235 = vpop.f32.mrb[0].mxu0
    %1236 = vmatprep.mubr.f32.mxu0 0.0
    %1237 = vmatmul.mubr.f32.gmra.mrb[0].mxu0 %v1165
    %v1238 = vpop.f32.mrb[0].mxu0
    %v1239 = vadd.f32 %v1159, %v1238
    %v1240 = vpop.f32.mrb[0].mxu0
    %1241 = vdwg.mxu0
    %v1242 = vld [vmem:[%s8] sm:$0xff]
    %v1243 = vld [vmem:[%s8 + $0x8] sm:$0xff]
    %v1244 = vld [vmem:[%s8 + $0x10] sm:$0xff]
    %v1245 = vld [vmem:[%s8 + $0x18] sm:$0xff]
    %v1246 = vld [vmem:[%s9] sm:$0x1]
    %v1248 = vlaneseq
    %v1249 = vshrl.u32 %v1248, 7
    %v1250 = vsub.s32 0, %v1249
    %v1251 = vrot.slane %v1246, %v1250
    %v1254 = vsel %vm77, %v64, 0
    %v1257 = vsel %vm77, %v65, 0
    %1259 = vmatprep.subr.mxu0 0.0
    %1260 = vmatpush1.msra.mxu0 %v1242
    %1261 = vmatprep.subr.mxu0 0.0
    %1262 = vmatpush1.msra.mxu0 %v1243
    %1263 = vmatprep.subr.mxu0 0.0
    %1264 = vmatpush1.msra.mxu0 %v1244
    %1265 = vmatprep.subr.mxu0 0.0
    %1266 = vmatpush1.msra.mxu0 %v1245
    %1267 = vmatprep.subr.mxu0 0.0
    %1268 = vmatpush1.msra.mxu0 0.0
    %1269 = vmatprep.subr.mxu0 0.0
    %1270 = vmatpush1.msra.mxu0 0.0
    %1271 = vmatprep.subr.mxu0 0.0
    %1272 = vmatpush1.msra.mxu0 0.0
    %1273 = vmatprep.subr.mxu0 0.0
    %1274 = vmatpush1.msra.mxu0 0.0
    %1275 = vmatprep.subr.mxu0 0.0
    %1276 = vmatpush1.msra.mxu0 0.0
    %1277 = vmatprep.subr.mxu0 0.0
    %1278 = vmatpush1.msra.mxu0 0.0
    %1279 = vmatprep.subr.mxu0 0.0
    %1280 = vmatpush1.msra.mxu0 0.0
    %1281 = vmatprep.subr.mxu0 0.0
    %1282 = vmatpush1.msra.mxu0 0.0
    %1283 = vmatprep.subr.mxu0 0.0
    %1284 = vmatpush1.msra.mxu0 0.0
    %1285 = vmatprep.subr.mxu0 0.0
    %1286 = vmatpush1.msra.mxu0 0.0
    %1287 = vmatprep.subr.mxu0 0.0
    %1288 = vmatpush1.msra.mxu0 0.0
    %1289 = vmatprep.subr.mxu0 0.0
    %1290 = vmatpush1.msra.mxu0 0.0
    %1291 = vmatprep.subr.mxu0 0.0
    %1292 = vmatpush1.msra.mxu0 0.0
    %1293 = vmatprep.subr.mxu0 0.0
    %1294 = vmatpush1.msra.mxu0 0.0
    %1295 = vmatprep.subr.mxu0 0.0
    %1296 = vmatpush1.msra.mxu0 0.0
    %1297 = vmatprep.subr.mxu0 0.0
    %1298 = vmatpush1.msra.mxu0 0.0
    %1299 = vmatprep.subr.mxu0 0.0
    %1300 = vmatpush1.msra.mxu0 0.0
    %1301 = vmatprep.subr.mxu0 0.0
    %1302 = vmatpush1.msra.mxu0 0.0
    %1303 = vmatprep.subr.mxu0 0.0
    %1304 = vmatpush1.msra.mxu0 0.0
    %1305 = vmatprep.subr.mxu0 0.0
    %1306 = vmatpush1.msra.mxu0 0.0
    %1307 = vmatprep.subr.mxu0 0.0
    %1308 = vmatpush1.msra.mxu0 0.0
    %1309 = vmatprep.subr.mxu0 0.0
    %1310 = vmatpush1.msra.mxu0 0.0
    %1311 = vmatprep.subr.mxu0 0.0
    %1312 = vmatpush1.msra.mxu0 0.0
    %1313 = vmatprep.subr.mxu0 0.0
    %1314 = vmatpush1.msra.mxu0 0.0
    %1315 = vmatprep.subr.mxu0 0.0
    %1316 = vmatpush1.msra.mxu0 0.0
    %1317 = vmatprep.subr.mxu0 0.0
    %1318 = vmatpush1.msra.mxu0 0.0
    %1319 = vmatprep.subr.mxu0 0.0
    %1320 = vmatpush1.msra.mxu0 0.0
    %1321 = vmatprep.subr.mxu0 0.0
    %1322 = vmatpush1.msra.mxu0 0.0
    %1323 = vmatprep.mubr.f32.mxu0 0.0
    %1324 = vmatmul.mubr.f32.gmra.mrb[0].mxu0 %v1254
    %v1325 = vpop.f32.mrb[0].mxu0
    %v1326 = vadd.f32 %v1251, %v1325
    %v1327 = vpop.f32.mrb[0].mxu0
    %1328 = vmatprep.mubr.f32.mxu0 0.0
    %1329 = vmatmul.mubr.f32.gmra.mrb[0].mxu0 %v1257
    %v1330 = vpop.f32.mrb[0].mxu0
    %v1331 = vadd.f32 %v1251, %v1330
    %v1332 = vpop.f32.mrb[0].mxu0
    %1333 = vdwg.mxu0
    %v1334 = vld [vmem:[%s3] sm:$0xff]
    %v1335 = vld [vmem:[%s3 + $0x8] sm:$0xff]
    %s1336 = scalar_lea.vmem %s10, 32
    %v1337 = vld [vmem:[%s1336] sm:$0xff]
    %v1338 = vld [vmem:[%s1336 + $0x8] sm:$0xff]
    %v1339 = vld [vmem:[%s1336 + $0x10] sm:$0xff]
    %v1340 = vld [vmem:[%s1336 + $0x18] sm:$0xff]
    %v1341 = vld [vmem:[%s11 + $0x1] sm:$0x1]
    %v1343 = vsel %vm172, %v1234, 0
    %v1346 = vsel %vm172, %v1239, 0
    %v1349 = vsel %vm172, %v1326, 0
    %v1352 = vsel %vm172, %v1331, 0
    %1354 = vmatprep.subr.mxu0 0.0
    %1355 = vmatpush1.xpose.msra.mxu0 %v1349
    %1356 = vmatprep.subr.mxu0 0.0
    %1357 = vmatpush1.xpose.msra.mxu0 %v1352
    %1358 = vmatprep.subr.mxu0 0.0
    %1359 = vmatpush1.xpose.msra.mxu0 0.0
    %1360 = vmatprep.subr.mxu0 0.0
    %1361 = vmatpush1.xpose.msra.mxu0 0.0
    %1362 = vmatprep.subr.mxu0 0.0
    %1363 = vmatpush1.xpose.msra.mxu0 0.0
    %1364 = vmatprep.subr.mxu0 0.0
    %1365 = vmatpush1.xpose.msra.mxu0 0.0
    %1366 = vmatprep.subr.mxu0 0.0
    %1367 = vmatpush1.xpose.msra.mxu0 0.0
    %1368 = vmatprep.subr.mxu0 0.0
    %1369 = vmatpush1.xpose.msra.mxu0 0.0
    %1370 = vmatprep.subr.mxu0 0.0
    %1371 = vmatpush1.xpose.msra.mxu0 0.0
    %1372 = vmatprep.subr.mxu0 0.0
    %1373 = vmatpush1.xpose.msra.mxu0 0.0
    %1374 = vmatprep.subr.mxu0 0.0
    %1375 = vmatpush1.xpose.msra.mxu0 0.0
    %1376 = vmatprep.subr.mxu0 0.0
    %1377 = vmatpush1.xpose.msra.mxu0 0.0
    %1378 = vmatprep.subr.mxu0 0.0
    %1379 = vmatpush1.xpose.msra.mxu0 0.0
    %1380 = vmatprep.subr.mxu0 0.0
    %1381 = vmatpush1.xpose.msra.mxu0 0.0
    %1382 = vmatprep.subr.mxu0 0.0
    %1383 = vmatpush1.xpose.msra.mxu0 0.0
    %1384 = vmatprep.subr.mxu0 0.0
    %1385 = vmatpush1.xpose.msra.mxu0 0.0
    %1386 = vmatprep.subr.mxu0 0.0
    %1387 = vmatpush1.xpose.msra.mxu0 0.0
    %1388 = vmatprep.subr.mxu0 0.0
    %1389 = vmatpush1.xpose.msra.mxu0 0.0
    %1390 = vmatprep.subr.mxu0 0.0
    %1391 = vmatpush1.xpose.msra.mxu0 0.0
    %1392 = vmatprep.subr.mxu0 0.0
    %1393 = vmatpush1.xpose.msra.mxu0 0.0
    %1394 = vmatprep.subr.mxu0 0.0
    %1395 = vmatpush1.xpose.msra.mxu0 0.0
    %1396 = vmatprep.subr.mxu0 0.0
    %1397 = vmatpush1.xpose.msra.mxu0 0.0
    %1398 = vmatprep.subr.mxu0 0.0
    %1399 = vmatpush1.xpose.msra.mxu0 0.0
    %1400 = vmatprep.subr.mxu0 0.0
    %1401 = vmatpush1.xpose.msra.mxu0 0.0
    %1402 = vmatprep.subr.mxu0 0.0
    %1403 = vmatpush1.xpose.msra.mxu0 0.0
    %1404 = vmatprep.subr.mxu0 0.0
    %1405 = vmatpush1.xpose.msra.mxu0 0.0
    %1406 = vmatprep.subr.mxu0 0.0
    %1407 = vmatpush1.xpose.msra.mxu0 0.0
    %1408 = vmatprep.subr.mxu0 0.0
    %1409 = vmatpush1.xpose.msra.mxu0 0.0
    %1410 = vmatprep.subr.mxu0 0.0
    %1411 = vmatpush1.xpose.msra.mxu0 0.0
    %1412 = vmatprep.subr.mxu0 0.0
    %1413 = vmatpush1.xpose.msra.mxu0 0.0
    %1414 = vmatprep.subr.mxu0 0.0
    %1415 = vmatpush1.xpose.msra.mxu0 0.0
    %1416 = vmatprep.subr.mxu0 0.0
    %1417 = vmatpush1.xpose.msra.mxu0 0.0
    %1418 = vmatprep.mubr.f32.mxu0 0.0
    %1419 = vmatmul.mubr.f32.gmra.mrb[0].mxu0 %v1343
    %v1420 = vpop.f32.mrb[0].mxu0
    %v1421 = vadd.f32 %v1334, %v1420
    %v1422 = vpop.f32.mrb[0].mxu0
    %1423 = vmatprep.mubr.f32.mxu0 0.0
    %1424 = vmatmul.mubr.f32.gmra.mrb[0].mxu0 %v1346
    %v1425 = vpop.f32.mrb[0].mxu0
    %v1426 = vadd.f32 %v1335, %v1425
    %v1427 = vpop.f32.mrb[0].mxu0
    %1428 = vdwg.mxu0
    %v1429 = vsel %vm256, %v1421, -inf
    %1430 = vmax.xlane.f32.xlu0 %v1429
    %v1431 = vpop.xlane.xlu0 %1430
    %v1432 = vsel %vm256, %v1426, -inf
    %1433 = vmax.xlane.f32.xlu0 %v1432
    %v1434 = vpop.xlane.xlu0 %1433
    %v1435 = vsub.f32 %v1421, %v1431
    %v1436 = vsub.f32 %v1426, %v1434
    %v1437 = vmul.f32 %v1435, 1.442695
    %v1438 = vpow.pop %v1437
    %v1439 = vmul.f32 %v1436, 1.442695
    %v1440 = vpow.pop %v1439
    %v1441 = vsel %vm256, %v1438, 0.0
    %1442 = vadd.xlane.f32.xlu0 %v1441
    %v1443 = vpop.xlane.xlu0 %1442
    %v1444 = vsel %vm256, %v1440, 0.0
    %1445 = vadd.xlane.f32.xlu0 %v1444
    %v1446 = vpop.xlane.xlu0 %1445
    %v1447 = vrcp.pop %v1443
    %v1448 = vrcp.pop %v1446
    %v1449 = vmul.f32 %v1438, %v1447
    %v1450 = vmul.f32 %v1440, %v1448
    %1451 = vrot.lane.b32.xlu0 %v1326, 96
    %v1452 = vpop.permute.xlu0 %1451
    %1453 = vrot.lane.b32.xlu0 %v1331, 96
    %v1454 = vpop.permute.xlu0 %1453
    %v1458 = vsel %vm256, %v1449, 0
    %v1461 = vsel %vm256, %v1450, 0
    %1463 = vmatprep.subr.mxu0 0.0
    %1464 = vmatpush1.msra.mxu0 %v1452
    %1465 = vmatprep.subr.mxu0 0.0
    %1466 = vmatpush1.msra.mxu0 %v1454
    %1467 = vmatprep.subr.mxu0 0.0
    %1468 = vmatpush1.msra.mxu0 0.0
    %1469 = vmatprep.subr.mxu0 0.0
    %1470 = vmatpush1.msra.mxu0 0.0
    %1471 = vmatprep.subr.mxu0 0.0
    %1472 = vmatpush1.msra.mxu0 0.0
    %1473 = vmatprep.subr.mxu0 0.0
    %1474 = vmatpush1.msra.mxu0 0.0
    %1475 = vmatprep.subr.mxu0 0.0
    %1476 = vmatpush1.msra.mxu0 0.0
    %1477 = vmatprep.subr.mxu0 0.0
    %1478 = vmatpush1.msra.mxu0 0.0
    %1479 = vmatprep.subr.mxu0 0.0
    %1480 = vmatpush1.msra.mxu0 0.0
    %1481 = vmatprep.subr.mxu0 0.0
    %1482 = vmatpush1.msra.mxu0 0.0
    %1483 = vmatprep.subr.mxu0 0.0
    %1484 = vmatpush1.msra.mxu0 0.0
    %1485 = vmatprep.subr.mxu0 0.0
    %1486 = vmatpush1.msra.mxu0 0.0
    %1487 = vmatprep.subr.mxu0 0.0
    %1488 = vmatpush1.msra.mxu0 0.0
    %1489 = vmatprep.subr.mxu0 0.0
    %1490 = vmatpush1.msra.mxu0 0.0
    %1491 = vmatprep.subr.mxu0 0.0
    %1492 = vmatpush1.msra.mxu0 0.0
    %1493 = vmatprep.subr.mxu0 0.0
    %1494 = vmatpush1.msra.mxu0 0.0
    %1495 = vmatprep.subr.mxu0 0.0
    %1496 = vmatpush1.msra.mxu0 0.0
    %1497 = vmatprep.subr.mxu0 0.0
    %1498 = vmatpush1.msra.mxu0 0.0
    %1499 = vmatprep.subr.mxu0 0.0
    %1500 = vmatpush1.msra.mxu0 0.0
    %1501 = vmatprep.subr.mxu0 0.0
    %1502 = vmatpush1.msra.mxu0 0.0
    %1503 = vmatprep.subr.mxu0 0.0
    %1504 = vmatpush1.msra.mxu0 0.0
    %1505 = vmatprep.subr.mxu0 0.0
    %1506 = vmatpush1.msra.mxu0 0.0
    %1507 = vmatprep.subr.mxu0 0.0
    %1508 = vmatpush1.msra.mxu0 0.0
    %1509 = vmatprep.subr.mxu0 0.0
    %1510 = vmatpush1.msra.mxu0 0.0
    %1511 = vmatprep.subr.mxu0 0.0
    %1512 = vmatpush1.msra.mxu0 0.0
    %1513 = vmatprep.subr.mxu0 0.0
    %1514 = vmatpush1.msra.mxu0 0.0
    %1515 = vmatprep.subr.mxu0 0.0
    %1516 = vmatpush1.msra.mxu0 0.0
    %1517 = vmatprep.subr.mxu0 0.0
    %1518 = vmatpush1.msra.mxu0 0.0
    %1519 = vmatprep.subr.mxu0 0.0
    %1520 = vmatpush1.msra.mxu0 0.0
    %1521 = vmatprep.subr.mxu0 0.0
    %1522 = vmatpush1.msra.mxu0 0.0
    %1523 = vmatprep.subr.mxu0 0.0
    %1524 = vmatpush1.msra.mxu0 0.0
    %1525 = vmatprep.subr.mxu0 0.0
    %1526 = vmatpush1.msra.mxu0 0.0
    %1527 = vmatprep.mubr.f32.mxu0 0.0
    %1528 = vmatmul.mubr.f32.gmra.mrb[0].mxu0 %v1458
    %v1529 = vpop.f32.mrb[0].mxu0
    %v1530 = vadd.f32 0.0, %v1529
    %v1531 = vpop.f32.mrb[0].mxu0
    %1532 = vmatprep.mubr.f32.mxu0 0.0
    %1533 = vmatmul.mubr.f32.gmra.mrb[0].mxu0 %v1461
    %v1534 = vpop.f32.mrb[0].mxu0
    %v1535 = vadd.f32 0.0, %v1534
    %v1536 = vpop.f32.mrb[0].mxu0
    %1537 = vdwg.mxu0
    %1538 = vrot.lane.b32.xlu0 %v1234, 120
    %v1539 = vpop.permute.xlu0 %1538
    %1540 = vrot.lane.b32.xlu0 %v1239, 120
    %v1541 = vpop.permute.xlu0 %1540
    %1542 = vrot.lane.b32.xlu0 %v1326, 120
    %v1543 = vpop.permute.xlu0 %1542
    %1544 = vrot.lane.b32.xlu0 %v1331, 120
    %v1545 = vpop.permute.xlu0 %1544
    %v1546 = vsel %vm172, %v1539, 0
    %v1548 = vsel %vm172, %v1541, 0
    %v1550 = vsel %vm172, %v1543, 0
    %v1552 = vsel %vm172, %v1545, 0
    %1554 = vmatprep.subr.mxu0 0.0
    %1555 = vmatpush1.xpose.msra.mxu0 %v1550
    %1556 = vmatprep.subr.mxu0 0.0
    %1557 = vmatpush1.xpose.msra.mxu0 %v1552
    %1558 = vmatprep.subr.mxu0 0.0
    %1559 = vmatpush1.xpose.msra.mxu0 0.0
    %1560 = vmatprep.subr.mxu0 0.0
    %1561 = vmatpush1.xpose.msra.mxu0 0.0
    %1562 = vmatprep.subr.mxu0 0.0
    %1563 = vmatpush1.xpose.msra.mxu0 0.0
    %1564 = vmatprep.subr.mxu0 0.0
    %1565 = vmatpush1.xpose.msra.mxu0 0.0
    %1566 = vmatprep.subr.mxu0 0.0
    %1567 = vmatpush1.xpose.msra.mxu0 0.0
    %1568 = vmatprep.subr.mxu0 0.0
    %1569 = vmatpush1.xpose.msra.mxu0 0.0
    %1570 = vmatprep.subr.mxu0 0.0
    %1571 = vmatpush1.xpose.msra.mxu0 0.0
    %1572 = vmatprep.subr.mxu0 0.0
    %1573 = vmatpush1.xpose.msra.mxu0 0.0
    %1574 = vmatprep.subr.mxu0 0.0
    %1575 = vmatpush1.xpose.msra.mxu0 0.0
    %1576 = vmatprep.subr.mxu0 0.0
    %1577 = vmatpush1.xpose.msra.mxu0 0.0
    %1578 = vmatprep.subr.mxu0 0.0
    %1579 = vmatpush1.xpose.msra.mxu0 0.0
    %1580 = vmatprep.subr.mxu0 0.0
    %1581 = vmatpush1.xpose.msra.mxu0 0.0
    %1582 = vmatprep.subr.mxu0 0.0
    %1583 = vmatpush1.xpose.msra.mxu0 0.0
    %1584 = vmatprep.subr.mxu0 0.0
    %1585 = vmatpush1.xpose.msra.mxu0 0.0
    %1586 = vmatprep.subr.mxu0 0.0
    %1587 = vmatpush1.xpose.msra.mxu0 0.0
    %1588 = vmatprep.subr.mxu0 0.0
    %1589 = vmatpush1.xpose.msra.mxu0 0.0
    %1590 = vmatprep.subr.mxu0 0.0
    %1591 = vmatpush1.xpose.msra.mxu0 0.0
    %1592 = vmatprep.subr.mxu0 0.0
    %1593 = vmatpush1.xpose.msra.mxu0 0.0
    %1594 = vmatprep.subr.mxu0 0.0
    %1595 = vmatpush1.xpose.msra.mxu0 0.0
    %1596 = vmatprep.subr.mxu0 0.0
    %1597 = vmatpush1.xpose.msra.mxu0 0.0
    %1598 = vmatprep.subr.mxu0 0.0
    %1599 = vmatpush1.xpose.msra.mxu0 0.0
    %1600 = vmatprep.subr.mxu0 0.0
    %1601 = vmatpush1.xpose.msra.mxu0 0.0
    %1602 = vmatprep.subr.mxu0 0.0
    %1603 = vmatpush1.xpose.msra.mxu0 0.0
    %1604 = vmatprep.subr.mxu0 0.0
    %1605 = vmatpush1.xpose.msra.mxu0 0.0
    %1606 = vmatprep.subr.mxu0 0.0
    %1607 = vmatpush1.xpose.msra.mxu0 0.0
    %1608 = vmatprep.subr.mxu0 0.0
    %1609 = vmatpush1.xpose.msra.mxu0 0.0
    %1610 = vmatprep.subr.mxu0 0.0
    %1611 = vmatpush1.xpose.msra.mxu0 0.0
    %1612 = vmatprep.subr.mxu0 0.0
    %1613 = vmatpush1.xpose.msra.mxu0 0.0
    %1614 = vmatprep.subr.mxu0 0.0
    %1615 = vmatpush1.xpose.msra.mxu0 0.0
    %1616 = vmatprep.subr.mxu0 0.0
    %1617 = vmatpush1.xpose.msra.mxu0 0.0
    %1618 = vmatprep.mubr.f32.mxu0 0.0
    %1619 = vmatmul.mubr.f32.gmra.mrb[0].mxu0 %v1546
    %v1620 = vpop.f32.mrb[0].mxu0
    %v1621 = vadd.f32 %v1334, %v1620
    %v1622 = vpop.f32.mrb[0].mxu0
    %1623 = vmatprep.mubr.f32.mxu0 0.0
    %1624 = vmatmul.mubr.f32.gmra.mrb[0].mxu0 %v1548
    %v1625 = vpop.f32.mrb[0].mxu0
    %v1626 = vadd.f32 %v1335, %v1625
    %v1627 = vpop.f32.mrb[0].mxu0
    %1628 = vdwg.mxu0
    %v1629 = vsel %vm256, %v1621, -inf
    %1630 = vmax.xlane.f32.xlu0 %v1629
    %v1631 = vpop.xlane.xlu0 %1630
    %v1632 = vsel %vm256, %v1626, -inf
    %1633 = vmax.xlane.f32.xlu0 %v1632
    %v1634 = vpop.xlane.xlu0 %1633
    %v1635 = vsub.f32 %v1621, %v1631
    %v1636 = vsub.f32 %v1626, %v1634
    %v1637 = vmul.f32 %v1635, 1.442695
    %v1638 = vpow.pop %v1637
    %v1639 = vmul.f32 %v1636, 1.442695
    %v1640 = vpow.pop %v1639
    %v1641 = vsel %vm256, %v1638, 0.0
    %1642 = vadd.xlane.f32.xlu0 %v1641
    %v1643 = vpop.xlane.xlu0 %1642
    %v1644 = vsel %vm256, %v1640, 0.0
    %1645 = vadd.xlane.f32.xlu0 %v1644
    %v1646 = vpop.xlane.xlu0 %1645
    %v1647 = vrcp.pop %v1643
    %v1648 = vrcp.pop %v1646
    %v1649 = vmul.f32 %v1638, %v1647
    %v1650 = vmul.f32 %v1640, %v1648
    %1651 = vrot.lane.b32.xlu0 %v1326, 88
    %v1652 = vpop.permute.xlu0 %1651
    %1653 = vrot.lane.b32.xlu0 %v1331, 88
    %v1654 = vpop.permute.xlu0 %1653
    %v1658 = vsel %vm256, %v1649, 0
    %v1661 = vsel %vm256, %v1650, 0
    %1663 = vmatprep.subr.mxu0 0.0
    %1664 = vmatpush1.msra.mxu0 %v1652
    %1665 = vmatprep.subr.mxu0 0.0
    %1666 = vmatpush1.msra.mxu0 %v1654
    %1667 = vmatprep.subr.mxu0 0.0
    %1668 = vmatpush1.msra.mxu0 0.0
    %1669 = vmatprep.subr.mxu0 0.0
    %1670 = vmatpush1.msra.mxu0 0.0
    %1671 = vmatprep.subr.mxu0 0.0
    %1672 = vmatpush1.msra.mxu0 0.0
    %1673 = vmatprep.subr.mxu0 0.0
    %1674 = vmatpush1.msra.mxu0 0.0
    %1675 = vmatprep.subr.mxu0 0.0
    %1676 = vmatpush1.msra.mxu0 0.0
    %1677 = vmatprep.subr.mxu0 0.0
    %1678 = vmatpush1.msra.mxu0 0.0
    %1679 = vmatprep.subr.mxu0 0.0
    %1680 = vmatpush1.msra.mxu0 0.0
    %1681 = vmatprep.subr.mxu0 0.0
    %1682 = vmatpush1.msra.mxu0 0.0
    %1683 = vmatprep.subr.mxu0 0.0
    %1684 = vmatpush1.msra.mxu0 0.0
    %1685 = vmatprep.subr.mxu0 0.0
    %1686 = vmatpush1.msra.mxu0 0.0
    %1687 = vmatprep.subr.mxu0 0.0
    %1688 = vmatpush1.msra.mxu0 0.0
    %1689 = vmatprep.subr.mxu0 0.0
    %1690 = vmatpush1.msra.mxu0 0.0
    %1691 = vmatprep.subr.mxu0 0.0
    %1692 = vmatpush1.msra.mxu0 0.0
    %1693 = vmatprep.subr.mxu0 0.0
    %1694 = vmatpush1.msra.mxu0 0.0
    %1695 = vmatprep.subr.mxu0 0.0
    %1696 = vmatpush1.msra.mxu0 0.0
    %1697 = vmatprep.subr.mxu0 0.0
    %1698 = vmatpush1.msra.mxu0 0.0
    %1699 = vmatprep.subr.mxu0 0.0
    %1700 = vmatpush1.msra.mxu0 0.0
    %1701 = vmatprep.subr.mxu0 0.0
    %1702 = vmatpush1.msra.mxu0 0.0
    %1703 = vmatprep.subr.mxu0 0.0
    %1704 = vmatpush1.msra.mxu0 0.0
    %1705 = vmatprep.subr.mxu0 0.0
    %1706 = vmatpush1.msra.mxu0 0.0
    %1707 = vmatprep.subr.mxu0 0.0
    %1708 = vmatpush1.msra.mxu0 0.0
    %1709 = vmatprep.subr.mxu0 0.0
    %1710 = vmatpush1.msra.mxu0 0.0
    %1711 = vmatprep.subr.mxu0 0.0
    %1712 = vmatpush1.msra.mxu0 0.0
    %1713 = vmatprep.subr.mxu0 0.0
    %1714 = vmatpush1.msra.mxu0 0.0
    %1715 = vmatprep.subr.mxu0 0.0
    %1716 = vmatpush1.msra.mxu0 0.0
    %1717 = vmatprep.subr.mxu0 0.0
    %1718 = vmatpush1.msra.mxu0 0.0
    %1719 = vmatprep.subr.mxu0 0.0
    %1720 = vmatpush1.msra.mxu0 0.0
    %1721 = vmatprep.subr.mxu0 0.0
    %1722 = vmatpush1.msra.mxu0 0.0
    %1723 = vmatprep.subr.mxu0 0.0
    %1724 = vmatpush1.msra.mxu0 0.0
    %1725 = vmatprep.subr.mxu0 0.0
    %1726 = vmatpush1.msra.mxu0 0.0
    %1727 = vmatprep.mubr.f32.mxu0 0.0
    %1728 = vmatmul.mubr.f32.gmra.mrb[0].mxu0 %v1658
    %v1729 = vpop.f32.mrb[0].mxu0
    %v1730 = vadd.f32 0.0, %v1729
    %v1731 = vpop.f32.mrb[0].mxu0
    %1732 = vmatprep.mubr.f32.mxu0 0.0
    %1733 = vmatmul.mubr.f32.gmra.mrb[0].mxu0 %v1661
    %v1734 = vpop.f32.mrb[0].mxu0
    %v1735 = vadd.f32 0.0, %v1734
    %v1736 = vpop.f32.mrb[0].mxu0
    %1737 = vdwg.mxu0
    %1738 = vrot.lane.b32.xlu0 %v1234, 112
    %v1739 = vpop.permute.xlu0 %1738
    %1740 = vrot.lane.b32.xlu0 %v1239, 112
    %v1741 = vpop.permute.xlu0 %1740
    %1742 = vrot.lane.b32.xlu0 %v1326, 112
    %v1743 = vpop.permute.xlu0 %1742
    %1744 = vrot.lane.b32.xlu0 %v1331, 112
    %v1745 = vpop.permute.xlu0 %1744
    %v1746 = vsel %vm172, %v1739, 0
    %v1748 = vsel %vm172, %v1741, 0
    %v1750 = vsel %vm172, %v1743, 0
    %v1752 = vsel %vm172, %v1745, 0
    %1754 = vmatprep.subr.mxu0 0.0
    %1755 = vmatpush1.xpose.msra.mxu0 %v1750
    %1756 = vmatprep.subr.mxu0 0.0
    %1757 = vmatpush1.xpose.msra.mxu0 %v1752
    %1758 = vmatprep.subr.mxu0 0.0
    %1759 = vmatpush1.xpose.msra.mxu0 0.0
    %1760 = vmatprep.subr.mxu0 0.0
    %1761 = vmatpush1.xpose.msra.mxu0 0.0
    %1762 = vmatprep.subr.mxu0 0.0
    %1763 = vmatpush1.xpose.msra.mxu0 0.0
    %1764 = vmatprep.subr.mxu0 0.0
    %1765 = vmatpush1.xpose.msra.mxu0 0.0
    %1766 = vmatprep.subr.mxu0 0.0
    %1767 = vmatpush1.xpose.msra.mxu0 0.0
    %1768 = vmatprep.subr.mxu0 0.0
    %1769 = vmatpush1.xpose.msra.mxu0 0.0
    %1770 = vmatprep.subr.mxu0 0.0
    %1771 = vmatpush1.xpose.msra.mxu0 0.0
    %1772 = vmatprep.subr.mxu0 0.0
    %1773 = vmatpush1.xpose.msra.mxu0 0.0
    %1774 = vmatprep.subr.mxu0 0.0
    %1775 = vmatpush1.xpose.msra.mxu0 0.0
    %1776 = vmatprep.subr.mxu0 0.0
    %1777 = vmatpush1.xpose.msra.mxu0 0.0
    %1778 = vmatprep.subr.mxu0 0.0
    %1779 = vmatpush1.xpose.msra.mxu0 0.0
    %1780 = vmatprep.subr.mxu0 0.0
    %1781 = vmatpush1.xpose.msra.mxu0 0.0
    %1782 = vmatprep.subr.mxu0 0.0
    %1783 = vmatpush1.xpose.msra.mxu0 0.0
    %1784 = vmatprep.subr.mxu0 0.0
    %1785 = vmatpush1.xpose.msra.mxu0 0.0
    %1786 = vmatprep.subr.mxu0 0.0
    %1787 = vmatpush1.xpose.msra.mxu0 0.0
    %1788 = vmatprep.subr.mxu0 0.0
    %1789 = vmatpush1.xpose.msra.mxu0 0.0
    %1790 = vmatprep.subr.mxu0 0.0
    %1791 = vmatpush1.xpose.msra.mxu0 0.0
    %1792 = vmatprep.subr.mxu0 0.0
    %1793 = vmatpush1.xpose.msra.mxu0 0.0
    %1794 = vmatprep.subr.mxu0 0.0
    %1795 = vmatpush1.xpose.msra.mxu0 0.0
    %1796 = vmatprep.subr.mxu0 0.0
    %1797 = vmatpush1.xpose.msra.mxu0 0.0
    %1798 = vmatprep.subr.mxu0 0.0
    %1799 = vmatpush1.xpose.msra.mxu0 0.0
    %1800 = vmatprep.subr.mxu0 0.0
    %1801 = vmatpush1.xpose.msra.mxu0 0.0
    %1802 = vmatprep.subr.mxu0 0.0
    %1803 = vmatpush1.xpose.msra.mxu0 0.0
    %1804 = vmatprep.subr.mxu0 0.0
    %1805 = vmatpush1.xpose.msra.mxu0 0.0
    %1806 = vmatprep.subr.mxu0 0.0
    %1807 = vmatpush1.xpose.msra.mxu0 0.0
    %1808 = vmatprep.subr.mxu0 0.0
    %1809 = vmatpush1.xpose.msra.mxu0 0.0
    %1810 = vmatprep.subr.mxu0 0.0
    %1811 = vmatpush1.xpose.msra.mxu0 0.0
    %1812 = vmatprep.subr.mxu0 0.0
    %1813 = vmatpush1.xpose.msra.mxu0 0.0
    %1814 = vmatprep.subr.mxu0 0.0
    %1815 = vmatpush1.xpose.msra.mxu0 0.0
    %1816 = vmatprep.subr.mxu0 0.0
    %1817 = vmatpush1.xpose.msra.mxu0 0.0
    %1818 = vmatprep.mubr.f32.mxu0 0.0
    %1819 = vmatmul.mubr.f32.gmra.mrb[0].mxu0 %v1746
    %v1820 = vpop.f32.mrb[0].mxu0
    %v1821 = vadd.f32 %v1334, %v1820
    %v1822 = vpop.f32.mrb[0].mxu0
    %1823 = vmatprep.mubr.f32.mxu0 0.0
    %1824 = vmatmul.mubr.f32.gmra.mrb[0].mxu0 %v1748
    %v1825 = vpop.f32.mrb[0].mxu0
    %v1826 = vadd.f32 %v1335, %v1825
    %v1827 = vpop.f32.mrb[0].mxu0
    %1828 = vdwg.mxu0
    %v1829 = vsel %vm256, %v1821, -inf
    %1830 = vmax.xlane.f32.xlu0 %v1829
    %v1831 = vpop.xlane.xlu0 %1830
    %v1832 = vsel %vm256, %v1826, -inf
    %1833 = vmax.xlane.f32.xlu0 %v1832
    %v1834 = vpop.xlane.xlu0 %1833
    %v1835 = vsub.f32 %v1821, %v1831
    %v1836 = vsub.f32 %v1826, %v1834
    %v1837 = vmul.f32 %v1835, 1.442695
    %v1838 = vpow.pop %v1837
    %v1839 = vmul.f32 %v1836, 1.442695
    %v1840 = vpow.pop %v1839
    %v1841 = vsel %vm256, %v1838, 0.0
    %1842 = vadd.xlane.f32.xlu0 %v1841
    %v1843 = vpop.xlane.xlu0 %1842
    %v1844 = vsel %vm256, %v1840, 0.0
    %1845 = vadd.xlane.f32.xlu0 %v1844
    %v1846 = vpop.xlane.xlu0 %1845
    %v1847 = vrcp.pop %v1843
    %v1848 = vrcp.pop %v1846
    %v1849 = vmul.f32 %v1838, %v1847
    %v1850 = vmul.f32 %v1840, %v1848
    %1851 = vrot.lane.b32.xlu0 %v1326, 80
    %v1852 = vpop.permute.xlu0 %1851
    %1853 = vrot.lane.b32.xlu0 %v1331, 80
    %v1854 = vpop.permute.xlu0 %1853
    %v1858 = vsel %vm256, %v1849, 0
    %v1861 = vsel %vm256, %v1850, 0
    %1863 = vmatprep.subr.mxu0 0.0
    %1864 = vmatpush1.msra.mxu0 %v1852
    %1865 = vmatprep.subr.mxu0 0.0
    %1866 = vmatpush1.msra.mxu0 %v1854
    %1867 = vmatprep.subr.mxu0 0.0
    %1868 = vmatpush1.msra.mxu0 0.0
    %1869 = vmatprep.subr.mxu0 0.0
    %1870 = vmatpush1.msra.mxu0 0.0
    %1871 = vmatprep.subr.mxu0 0.0
    %1872 = vmatpush1.msra.mxu0 0.0
    %1873 = vmatprep.subr.mxu0 0.0
    %1874 = vmatpush1.msra.mxu0 0.0
    %1875 = vmatprep.subr.mxu0 0.0
    %1876 = vmatpush1.msra.mxu0 0.0
    %1877 = vmatprep.subr.mxu0 0.0
    %1878 = vmatpush1.msra.mxu0 0.0
    %1879 = vmatprep.subr.mxu0 0.0
    %1880 = vmatpush1.msra.mxu0 0.0
    %1881 = vmatprep.subr.mxu0 0.0
    %1882 = vmatpush1.msra.mxu0 0.0
    %1883 = vmatprep.subr.mxu0 0.0
    %1884 = vmatpush1.msra.mxu0 0.0
    %1885 = vmatprep.subr.mxu0 0.0
    %1886 = vmatpush1.msra.mxu0 0.0
    %1887 = vmatprep.subr.mxu0 0.0
    %1888 = vmatpush1.msra.mxu0 0.0
    %1889 = vmatprep.subr.mxu0 0.0
    %1890 = vmatpush1.msra.mxu0 0.0
    %1891 = vmatprep.subr.mxu0 0.0
    %1892 = vmatpush1.msra.mxu0 0.0
    %1893 = vmatprep.subr.mxu0 0.0
    %1894 = vmatpush1.msra.mxu0 0.0
    %1895 = vmatprep.subr.mxu0 0.0
    %1896 = vmatpush1.msra.mxu0 0.0
    %1897 = vmatprep.subr.mxu0 0.0
    %1898 = vmatpush1.msra.mxu0 0.0
    %1899 = vmatprep.subr.mxu0 0.0
    %1900 = vmatpush1.msra.mxu0 0.0
    %1901 = vmatprep.subr.mxu0 0.0
    %1902 = vmatpush1.msra.mxu0 0.0
    %1903 = vmatprep.subr.mxu0 0.0
    %1904 = vmatpush1.msra.mxu0 0.0
    %1905 = vmatprep.subr.mxu0 0.0
    %1906 = vmatpush1.msra.mxu0 0.0
    %1907 = vmatprep.subr.mxu0 0.0
    %1908 = vmatpush1.msra.mxu0 0.0
    %1909 = vmatprep.subr.mxu0 0.0
    %1910 = vmatpush1.msra.mxu0 0.0
    %1911 = vmatprep.subr.mxu0 0.0
    %1912 = vmatpush1.msra.mxu0 0.0
    %1913 = vmatprep.subr.mxu0 0.0
    %1914 = vmatpush1.msra.mxu0 0.0
    %1915 = vmatprep.subr.mxu0 0.0
    %1916 = vmatpush1.msra.mxu0 0.0
    %1917 = vmatprep.subr.mxu0 0.0
    %1918 = vmatpush1.msra.mxu0 0.0
    %1919 = vmatprep.subr.mxu0 0.0
    %1920 = vmatpush1.msra.mxu0 0.0
    %1921 = vmatprep.subr.mxu0 0.0
    %1922 = vmatpush1.msra.mxu0 0.0
    %1923 = vmatprep.subr.mxu0 0.0
    %1924 = vmatpush1.msra.mxu0 0.0
    %1925 = vmatprep.subr.mxu0 0.0
    %1926 = vmatpush1.msra.mxu0 0.0
    %1927 = vmatprep.mubr.f32.mxu0 0.0
    %1928 = vmatmul.mubr.f32.gmra.mrb[0].mxu0 %v1858
    %v1929 = vpop.f32.mrb[0].mxu0
    %v1930 = vadd.f32 0.0, %v1929
    %v1931 = vpop.f32.mrb[0].mxu0
    %1932 = vmatprep.mubr.f32.mxu0 0.0
    %1933 = vmatmul.mubr.f32.gmra.mrb[0].mxu0 %v1861
    %v1934 = vpop.f32.mrb[0].mxu0
    %v1935 = vadd.f32 0.0, %v1934
    %v1936 = vpop.f32.mrb[0].mxu0
    %1937 = vdwg.mxu0
    %1938 = vrot.lane.b32.xlu0 %v1234, 104
    %v1939 = vpop.permute.xlu0 %1938
    %1940 = vrot.lane.b32.xlu0 %v1239, 104
    %v1941 = vpop.permute.xlu0 %1940
    %1942 = vrot.lane.b32.xlu0 %v1326, 104
    %v1943 = vpop.permute.xlu0 %1942
    %1944 = vrot.lane.b32.xlu0 %v1331, 104
    %v1945 = vpop.permute.xlu0 %1944
    %v1946 = vsel %vm172, %v1939, 0
    %v1948 = vsel %vm172, %v1941, 0
    %v1950 = vsel %vm172, %v1943, 0
    %v1952 = vsel %vm172, %v1945, 0
    %1954 = vmatprep.subr.mxu0 0.0
    %1955 = vmatpush1.xpose.msra.mxu0 %v1950
    %1956 = vmatprep.subr.mxu0 0.0
    %1957 = vmatpush1.xpose.msra.mxu0 %v1952
    %1958 = vmatprep.subr.mxu0 0.0
    %1959 = vmatpush1.xpose.msra.mxu0 0.0
    %1960 = vmatprep.subr.mxu0 0.0
    %1961 = vmatpush1.xpose.msra.mxu0 0.0
    %1962 = vmatprep.subr.mxu0 0.0
    %1963 = vmatpush1.xpose.msra.mxu0 0.0
    %1964 = vmatprep.subr.mxu0 0.0
    %1965 = vmatpush1.xpose.msra.mxu0 0.0
    %1966 = vmatprep.subr.mxu0 0.0
    %1967 = vmatpush1.xpose.msra.mxu0 0.0
    %1968 = vmatprep.subr.mxu0 0.0
    %1969 = vmatpush1.xpose.msra.mxu0 0.0
    %1970 = vmatprep.subr.mxu0 0.0
    %1971 = vmatpush1.xpose.msra.mxu0 0.0
    %1972 = vmatprep.subr.mxu0 0.0
    %1973 = vmatpush1.xpose.msra.mxu0 0.0
    %1974 = vmatprep.subr.mxu0 0.0
    %1975 = vmatpush1.xpose.msra.mxu0 0.0
    %1976 = vmatprep.subr.mxu0 0.0
    %1977 = vmatpush1.xpose.msra.mxu0 0.0
    %1978 = vmatprep.subr.mxu0 0.0
    %1979 = vmatpush1.xpose.msra.mxu0 0.0
    %1980 = vmatprep.subr.mxu0 0.0
    %1981 = vmatpush1.xpose.msra.mxu0 0.0
    %1982 = vmatprep.subr.mxu0 0.0
    %1983 = vmatpush1.xpose.msra.mxu0 0.0
    %1984 = vmatprep.subr.mxu0 0.0
    %1985 = vmatpush1.xpose.msra.mxu0 0.0
    %1986 = vmatprep.subr.mxu0 0.0
    %1987 = vmatpush1.xpose.msra.mxu0 0.0
    %1988 = vmatprep.subr.mxu0 0.0
    %1989 = vmatpush1.xpose.msra.mxu0 0.0
    %1990 = vmatprep.subr.mxu0 0.0
    %1991 = vmatpush1.xpose.msra.mxu0 0.0
    %1992 = vmatprep.subr.mxu0 0.0
    %1993 = vmatpush1.xpose.msra.mxu0 0.0
    %1994 = vmatprep.subr.mxu0 0.0
    %1995 = vmatpush1.xpose.msra.mxu0 0.0
    %1996 = vmatprep.subr.mxu0 0.0
    %1997 = vmatpush1.xpose.msra.mxu0 0.0
    %1998 = vmatprep.subr.mxu0 0.0
    %1999 = vmatpush1.xpose.msra.mxu0 0.0
    %2000 = vmatprep.subr.mxu0 0.0
    %2001 = vmatpush1.xpose.msra.mxu0 0.0
    %2002 = vmatprep.subr.mxu0 0.0
    %2003 = vmatpush1.xpose.msra.mxu0 0.0
    %2004 = vmatprep.subr.mxu0 0.0
    %2005 = vmatpush1.xpose.msra.mxu0 0.0
    %2006 = vmatprep.subr.mxu0 0.0
    %2007 = vmatpush1.xpose.msra.mxu0 0.0
    %2008 = vmatprep.subr.mxu0 0.0
    %2009 = vmatpush1.xpose.msra.mxu0 0.0
    %2010 = vmatprep.subr.mxu0 0.0
    %2011 = vmatpush1.xpose.msra.mxu0 0.0
    %2012 = vmatprep.subr.mxu0 0.0
    %2013 = vmatpush1.xpose.msra.mxu0 0.0
    %2014 = vmatprep.subr.mxu0 0.0
    %2015 = vmatpush1.xpose.msra.mxu0 0.0
    %2016 = vmatprep.subr.mxu0 0.0
    %2017 = vmatpush1.xpose.msra.mxu0 0.0
    %2018 = vmatprep.mubr.f32.mxu0 0.0
    %2019 = vmatmul.mubr.f32.gmra.mrb[0].mxu0 %v1946
    %v2020 = vpop.f32.mrb[0].mxu0
    %v2021 = vadd.f32 %v1334, %v2020
    %v2022 = vpop.f32.mrb[0].mxu0
    %2023 = vmatprep.mubr.f32.mxu0 0.0
    %2024 = vmatmul.mubr.f32.gmra.mrb[0].mxu0 %v1948
    %v2025 = vpop.f32.mrb[0].mxu0
    %v2026 = vadd.f32 %v1335, %v2025
    %v2027 = vpop.f32.mrb[0].mxu0
    %2028 = vdwg.mxu0
    %v2029 = vsel %vm256, %v2021, -inf
    %2030 = vmax.xlane.f32.xlu0 %v2029
    %v2031 = vpop.xlane.xlu0 %2030
    %v2032 = vsel %vm256, %v2026, -inf
    %2033 = vmax.xlane.f32.xlu0 %v2032
    %v2034 = vpop.xlane.xlu0 %2033
    %v2035 = vsub.f32 %v2021, %v2031
    %v2036 = vsub.f32 %v2026, %v2034
    %v2037 = vmul.f32 %v2035, 1.442695
    %v2038 = vpow.pop %v2037
    %v2039 = vmul.f32 %v2036, 1.442695
    %v2040 = vpow.pop %v2039
    %v2041 = vsel %vm256, %v2038, 0.0
    %2042 = vadd.xlane.f32.xlu0 %v2041
    %v2043 = vpop.xlane.xlu0 %2042
    %v2044 = vsel %vm256, %v2040, 0.0
    %2045 = vadd.xlane.f32.xlu0 %v2044
    %v2046 = vpop.xlane.xlu0 %2045
    %v2047 = vrcp.pop %v2043
    %v2048 = vrcp.pop %v2046
    %v2049 = vmul.f32 %v2038, %v2047
    %v2050 = vmul.f32 %v2040, %v2048
    %2051 = vrot.lane.b32.xlu0 %v1326, 72
    %v2052 = vpop.permute.xlu0 %2051
    %2053 = vrot.lane.b32.xlu0 %v1331, 72
    %v2054 = vpop.permute.xlu0 %2053
    %v2058 = vsel %vm256, %v2049, 0
    %v2061 = vsel %vm256, %v2050, 0
    %2063 = vmatprep.subr.mxu0 0.0
    %2064 = vmatpush1.msra.mxu0 %v2052
    %2065 = vmatprep.subr.mxu0 0.0
    %2066 = vmatpush1.msra.mxu0 %v2054
    %2067 = vmatprep.subr.mxu0 0.0
    %2068 = vmatpush1.msra.mxu0 0.0
    %2069 = vmatprep.subr.mxu0 0.0
    %2070 = vmatpush1.msra.mxu0 0.0
    %2071 = vmatprep.subr.mxu0 0.0
    %2072 = vmatpush1.msra.mxu0 0.0
    %2073 = vmatprep.subr.mxu0 0.0
    %2074 = vmatpush1.msra.mxu0 0.0
    %2075 = vmatprep.subr.mxu0 0.0
    %2076 = vmatpush1.msra.mxu0 0.0
    %2077 = vmatprep.subr.mxu0 0.0
    %2078 = vmatpush1.msra.mxu0 0.0
    %2079 = vmatprep.subr.mxu0 0.0
    %2080 = vmatpush1.msra.mxu0 0.0
    %2081 = vmatprep.subr.mxu0 0.0
    %2082 = vmatpush1.msra.mxu0 0.0
    %2083 = vmatprep.subr.mxu0 0.0
    %2084 = vmatpush1.msra.mxu0 0.0
    %2085 = vmatprep.subr.mxu0 0.0
    %2086 = vmatpush1.msra.mxu0 0.0
    %2087 = vmatprep.subr.mxu0 0.0
    %2088 = vmatpush1.msra.mxu0 0.0
    %2089 = vmatprep.subr.mxu0 0.0
    %2090 = vmatpush1.msra.mxu0 0.0
    %2091 = vmatprep.subr.mxu0 0.0
    %2092 = vmatpush1.msra.mxu0 0.0
    %2093 = vmatprep.subr.mxu0 0.0
    %2094 = vmatpush1.msra.mxu0 0.0
    %2095 = vmatprep.subr.mxu0 0.0
    %2096 = vmatpush1.msra.mxu0 0.0
    %2097 = vmatprep.subr.mxu0 0.0
    %2098 = vmatpush1.msra.mxu0 0.0
    %2099 = vmatprep.subr.mxu0 0.0
    %2100 = vmatpush1.msra.mxu0 0.0
    %2101 = vmatprep.subr.mxu0 0.0
    %2102 = vmatpush1.msra.mxu0 0.0
    %2103 = vmatprep.subr.mxu0 0.0
    %2104 = vmatpush1.msra.mxu0 0.0
    %2105 = vmatprep.subr.mxu0 0.0
    %2106 = vmatpush1.msra.mxu0 0.0
    %2107 = vmatprep.subr.mxu0 0.0
    %2108 = vmatpush1.msra.mxu0 0.0
    %2109 = vmatprep.subr.mxu0 0.0
    %2110 = vmatpush1.msra.mxu0 0.0
    %2111 = vmatprep.subr.mxu0 0.0
    %2112 = vmatpush1.msra.mxu0 0.0
    %2113 = vmatprep.subr.mxu0 0.0
    %2114 = vmatpush1.msra.mxu0 0.0
    %2115 = vmatprep.subr.mxu0 0.0
    %2116 = vmatpush1.msra.mxu0 0.0
    %2117 = vmatprep.subr.mxu0 0.0
    %2118 = vmatpush1.msra.mxu0 0.0
    %2119 = vmatprep.subr.mxu0 0.0
    %2120 = vmatpush1.msra.mxu0 0.0
    %2121 = vmatprep.subr.mxu0 0.0
    %2122 = vmatpush1.msra.mxu0 0.0
    %2123 = vmatprep.subr.mxu0 0.0
    %2124 = vmatpush1.msra.mxu0 0.0
    %2125 = vmatprep.subr.mxu0 0.0
    %2126 = vmatpush1.msra.mxu0 0.0
    %2127 = vmatprep.mubr.f32.mxu0 0.0
    %2128 = vmatmul.mubr.f32.gmra.mrb[0].mxu0 %v2058
    %v2129 = vpop.f32.mrb[0].mxu0
    %v2130 = vadd.f32 0.0, %v2129
    %v2131 = vpop.f32.mrb[0].mxu0
    %2132 = vmatprep.mubr.f32.mxu0 0.0
    %2133 = vmatmul.mubr.f32.gmra.mrb[0].mxu0 %v2061
    %v2134 = vpop.f32.mrb[0].mxu0
    %v2135 = vadd.f32 0.0, %v2134
    %v2136 = vpop.f32.mrb[0].mxu0
    %2137 = vdwg.mxu0
    %2140 = vrot.lane.b32.xlu0 %v1730, 8
    %v2141 = vpop.permute.xlu0 %2140
    %2142 = vrot.lane.b32.xlu0 %v1735, 8
    %v2143 = vpop.permute.xlu0 %2142
    %2148 = vrot.lane.b32.xlu0 %v1930, 16
    %v2149 = vpop.permute.xlu0 %2148
    %2150 = vrot.lane.b32.xlu0 %v1935, 16
    %v2151 = vpop.permute.xlu0 %2150
    %2156 = vrot.lane.b32.xlu0 %v2130, 24
    %v2157 = vpop.permute.xlu0 %2156
    %2158 = vrot.lane.b32.xlu0 %v2135, 24
    %v2159 = vpop.permute.xlu0 %2158
    %v2162 = vsel %vm172, %v1530, %v2141
    %v2163 = vsel %vm172, %v1535, %v2143
    %v2164 = vsel %vm256, %v2162, %v2149
    %v2165 = vsel %vm256, %v2163, %v2151
    %v2166 = vsel %vm994, %v2164, %v2157
    %v2167 = vsel %vm994, %v2165, %v2159
    %v2168 = vlaneseq
    %v2169 = vshrl.u32 %v2168, 7
    %v2170 = vsub.s32 0, %v2169
    %v2171 = vrot.slane %v1341, %v2170
    %v2173 = vsel %vm77, %v2166, 0
    %v2176 = vsel %vm77, %v2167, 0
    %2178 = vmatprep.subr.mxu0 0.0
    %2179 = vmatpush1.msra.mxu0 %v1337
    %2180 = vmatprep.subr.mxu0 0.0
    %2181 = vmatpush1.msra.mxu0 %v1338
    %2182 = vmatprep.subr.mxu0 0.0
    %2183 = vmatpush1.msra.mxu0 %v1339
    %2184 = vmatprep.subr.mxu0 0.0
    %2185 = vmatpush1.msra.mxu0 %v1340
    %2186 = vmatprep.subr.mxu0 0.0
    %2187 = vmatpush1.msra.mxu0 0.0
    %2188 = vmatprep.subr.mxu0 0.0
    %2189 = vmatpush1.msra.mxu0 0.0
    %2190 = vmatprep.subr.mxu0 0.0
    %2191 = vmatpush1.msra.mxu0 0.0
    %2192 = vmatprep.subr.mxu0 0.0
    %2193 = vmatpush1.msra.mxu0 0.0
    %2194 = vmatprep.subr.mxu0 0.0
    %2195 = vmatpush1.msra.mxu0 0.0
    %2196 = vmatprep.subr.mxu0 0.0
    %2197 = vmatpush1.msra.mxu0 0.0
    %2198 = vmatprep.subr.mxu0 0.0
    %2199 = vmatpush1.msra.mxu0 0.0
    %2200 = vmatprep.subr.mxu0 0.0
    %2201 = vmatpush1.msra.mxu0 0.0
    %2202 = vmatprep.subr.mxu0 0.0
    %2203 = vmatpush1.msra.mxu0 0.0
    %2204 = vmatprep.subr.mxu0 0.0
    %2205 = vmatpush1.msra.mxu0 0.0
    %2206 = vmatprep.subr.mxu0 0.0
    %2207 = vmatpush1.msra.mxu0 0.0
    %2208 = vmatprep.subr.mxu0 0.0
    %2209 = vmatpush1.msra.mxu0 0.0
    %2210 = vmatprep.subr.mxu0 0.0
    %2211 = vmatpush1.msra.mxu0 0.0
    %2212 = vmatprep.subr.mxu0 0.0
    %2213 = vmatpush1.msra.mxu0 0.0
    %2214 = vmatprep.subr.mxu0 0.0
    %2215 = vmatpush1.msra.mxu0 0.0
    %2216 = vmatprep.subr.mxu0 0.0
    %2217 = vmatpush1.msra.mxu0 0.0
    %2218 = vmatprep.subr.mxu0 0.0
    %2219 = vmatpush1.msra.mxu0 0.0
    %2220 = vmatprep.subr.mxu0 0.0
    %2221 = vmatpush1.msra.mxu0 0.0
    %2222 = vmatprep.subr.mxu0 0.0
    %2223 = vmatpush1.msra.mxu0 0.0
    %2224 = vmatprep.subr.mxu0 0.0
    %2225 = vmatpush1.msra.mxu0 0.0
    %2226 = vmatprep.subr.mxu0 0.0
    %2227 = vmatpush1.msra.mxu0 0.0
    %2228 = vmatprep.subr.mxu0 0.0
    %2229 = vmatpush1.msra.mxu0 0.0
    %2230 = vmatprep.subr.mxu0 0.0
    %2231 = vmatpush1.msra.mxu0 0.0
    %2232 = vmatprep.subr.mxu0 0.0
    %2233 = vmatpush1.msra.mxu0 0.0
    %2234 = vmatprep.subr.mxu0 0.0
    %2235 = vmatpush1.msra.mxu0 0.0
    %2236 = vmatprep.subr.mxu0 0.0
    %2237 = vmatpush1.msra.mxu0 0.0
    %2238 = vmatprep.subr.mxu0 0.0
    %2239 = vmatpush1.msra.mxu0 0.0
    %2240 = vmatprep.subr.mxu0 0.0
    %2241 = vmatpush1.msra.mxu0 0.0
    %2242 = vmatprep.mubr.f32.mxu0 0.0
    %2243 = vmatmul.mubr.f32.gmra.mrb[0].mxu0 %v2173
    %v2244 = vpop.f32.mrb[0].mxu0
    %v2245 = vadd.f32 %v2171, %v2244
    %v2246 = vpop.f32.mrb[0].mxu0
    %2247 = vmatprep.mubr.f32.mxu0 0.0
    %2248 = vmatmul.mubr.f32.gmra.mrb[0].mxu0 %v2176
    %v2249 = vpop.f32.mrb[0].mxu0
    %v2250 = vadd.f32 %v2171, %v2249
    %v2251 = vpop.f32.mrb[0].mxu0
    %2252 = vdwg.mxu0
    %2253 = vrot.lane.b32.xlu0 %v1649, 16
    %v2254 = vpop.permute.xlu0 %2253
    %2255 = vrot.lane.b32.xlu0 %v1650, 16
    %v2256 = vpop.permute.xlu0 %2255
    %2259 = vrot.lane.b32.xlu0 %v1849, 32
    %v2260 = vpop.permute.xlu0 %2259
    %2261 = vrot.lane.b32.xlu0 %v1850, 32
    %v2262 = vpop.permute.xlu0 %2261
    %2265 = vrot.lane.b32.xlu0 %v2049, 48
    %v2266 = vpop.permute.xlu0 %2265
    %2267 = vrot.lane.b32.xlu0 %v2050, 48
    %v2268 = vpop.permute.xlu0 %2267
    %v2271 = vsel %vm256, %v1449, %v2254
    %v2272 = vsel %vm256, %v1450, %v2256
    %v2273 = vsel %vm77, %v2271, %v2260
    %v2274 = vsel %vm77, %v2272, %v2262
    %v2275 = vsel %vm1104, %v2273, %v2266
    %v2276 = vsel %vm1104, %v2274, %v2268
    %v2277 = vadd.f32 %v1148, %v2245
    %v2278 = vadd.f32 %v1149, %v2250
    %v2279 = vld [vmem:[%s16 + $0x1] sm:$0x1]
    %v2280 = vld [vmem:[%s17 + $0x1] sm:$0x1]
    %v2281 = vsel %vm77, %v2277, 0.0
    %2282 = vadd.xlane.f32.xlu0 %v2281
    %v2283 = vpop.xlane.xlu0 %2282
    %v2284 = vsel %vm77, %v2278, 0.0
    %2285 = vadd.xlane.f32.xlu0 %v2284
    %v2286 = vpop.xlane.xlu0 %2285
    %v2287 = vmul.f32 %v2283, %v1117
    %v2288 = vmul.f32 %v2286, %v1117
    %v2289 = vsub.f32 %v2277, %v2287
    %v2290 = vsub.f32 %v2278, %v2288
    %v2291 = vmul.f32 %v2289, %v2289
    %v2292 = vmul.f32 %v2290, %v2290
    %v2293 = vsel %vm77, %v2291, 0.0
    %2294 = vadd.xlane.f32.xlu0 %v2293
    %v2295 = vpop.xlane.xlu0 %2294
    %v2296 = vsel %vm77, %v2292, 0.0
    %2297 = vadd.xlane.f32.xlu0 %v2296
    %v2298 = vpop.xlane.xlu0 %2297
    %v2299 = vmul.f32 %v2295, %v1117
    %v2300 = vmul.f32 %v2298, %v1117
    %v2301 = vadd.f32 %v2299, 1e-05
    %v2302 = vadd.f32 %v2300, 1e-05
    %v2303 = vrsqrt.pop %v2301
    %v2304 = vrsqrt.pop %v2302
    %v2305 = vmul.f32 %v2289, %v2303
    %v2306 = vmul.f32 %v2290, %v2304
    %v2307 = vlaneseq
    %v2308 = vshrl.u32 %v2307, 7
    %v2309 = vsub.s32 0, %v2308
    %v2310 = vrot.slane %v2279, %v2309
    %v2311 = vmul.f32 %v2305, %v2310
    %v2312 = vmul.f32 %v2306, %v2310
    %v2313 = vlaneseq
    %v2314 = vshrl.u32 %v2313, 7
    %v2315 = vsub.s32 0, %v2314
    %v2316 = vrot.slane %v2280, %v2315
    %v2317 = vadd.f32 %v2311, %v2316
    %v2318 = vadd.f32 %v2312, %v2316
    %v2319 = vld [vmem:[%s12] sm:$0xff]
    %v2320 = vld [vmem:[%s12 + $0x8] sm:$0xff]
    %v2321 = vld [vmem:[%s12 + $0x10] sm:$0xff]
    %v2322 = vld [vmem:[%s12 + $0x18] sm:$0xff]
    %v2323 = vld [vmem:[%s13] sm:$0x1]
    %v2325 = vlaneseq
    %v2326 = vshrl.u32 %v2325, 7
    %v2327 = vsub.s32 0, %v2326
    %v2328 = vrot.slane %v2323, %v2327
    %v2331 = vsel %vm77, %v2317, 0
    %v2334 = vsel %vm77, %v2318, 0
    %2336 = vmatprep.subr.mxu0 0.0
    %2337 = vmatpush1.msra.mxu0 %v2319
    %2338 = vmatprep.subr.mxu0 0.0
    %2339 = vmatpush1.msra.mxu0 %v2320
    %2340 = vmatprep.subr.mxu0 0.0
    %2341 = vmatpush1.msra.mxu0 %v2321
    %2342 = vmatprep.subr.mxu0 0.0
    %2343 = vmatpush1.msra.mxu0 %v2322
    %2344 = vmatprep.subr.mxu0 0.0
    %2345 = vmatpush1.msra.mxu0 0.0
    %2346 = vmatprep.subr.mxu0 0.0
    %2347 = vmatpush1.msra.mxu0 0.0
    %2348 = vmatprep.subr.mxu0 0.0
    %2349 = vmatpush1.msra.mxu0 0.0
    %2350 = vmatprep.subr.mxu0 0.0
    %2351 = vmatpush1.msra.mxu0 0.0
    %2352 = vmatprep.subr.mxu0 0.0
    %2353 = vmatpush1.msra.mxu0 0.0
    %2354 = vmatprep.subr.mxu0 0.0
    %2355 = vmatpush1.msra.mxu0 0.0
    %2356 = vmatprep.subr.mxu0 0.0
    %2357 = vmatpush1.msra.mxu0 0.0
    %2358 = vmatprep.subr.mxu0 0.0
    %2359 = vmatpush1.msra.mxu0 0.0
    %2360 = vmatprep.subr.mxu0 0.0
    %2361 = vmatpush1.msra.mxu0 0.0
    %2362 = vmatprep.subr.mxu0 0.0
    %2363 = vmatpush1.msra.mxu0 0.0
    %2364 = vmatprep.subr.mxu0 0.0
    %2365 = vmatpush1.msra.mxu0 0.0
    %2366 = vmatprep.subr.mxu0 0.0
    %2367 = vmatpush1.msra.mxu0 0.0
    %2368 = vmatprep.subr.mxu0 0.0
    %2369 = vmatpush1.msra.mxu0 0.0
    %2370 = vmatprep.subr.mxu0 0.0
    %2371 = vmatpush1.msra.mxu0 0.0
    %2372 = vmatprep.subr.mxu0 0.0
    %2373 = vmatpush1.msra.mxu0 0.0
    %2374 = vmatprep.subr.mxu0 0.0
    %2375 = vmatpush1.msra.mxu0 0.0
    %2376 = vmatprep.subr.mxu0 0.0
    %2377 = vmatpush1.msra.mxu0 0.0
    %2378 = vmatprep.subr.mxu0 0.0
    %2379 = vmatpush1.msra.mxu0 0.0
    %2380 = vmatprep.subr.mxu0 0.0
    %2381 = vmatpush1.msra.mxu0 0.0
    %2382 = vmatprep.subr.mxu0 0.0
    %2383 = vmatpush1.msra.mxu0 0.0
    %2384 = vmatprep.subr.mxu0 0.0
    %2385 = vmatpush1.msra.mxu0 0.0
    %2386 = vmatprep.subr.mxu0 0.0
    %2387 = vmatpush1.msra.mxu0 0.0
    %2388 = vmatprep.subr.mxu0 0.0
    %2389 = vmatpush1.msra.mxu0 0.0
    %2390 = vmatprep.subr.mxu0 0.0
    %2391 = vmatpush1.msra.mxu0 0.0
    %2392 = vmatprep.subr.mxu0 0.0
    %2393 = vmatpush1.msra.mxu0 0.0
    %2394 = vmatprep.subr.mxu0 0.0
    %2395 = vmatpush1.msra.mxu0 0.0
    %2396 = vmatprep.subr.mxu0 0.0
    %2397 = vmatpush1.msra.mxu0 0.0
    %2398 = vmatprep.subr.mxu0 0.0
    %2399 = vmatpush1.msra.mxu0 0.0
    %2400 = vmatprep.mubr.f32.mxu0 0.0
    %2401 = vmatmul.mubr.f32.gmra.mrb[0].mxu0 %v2331
    %v2402 = vpop.f32.mrb[0].mxu0
    %v2403 = vadd.f32 %v2328, %v2402
    %v2404 = vpop.f32.mrb[0].mxu0
    %2405 = vmatprep.mubr.f32.mxu0 0.0
    %2406 = vmatmul.mubr.f32.gmra.mrb[0].mxu0 %v2334
    %v2407 = vpop.f32.mrb[0].mxu0
    %v2408 = vadd.f32 %v2328, %v2407
    %v2409 = vpop.f32.mrb[0].mxu0
    %2410 = vdwg.mxu0
    %v2411 = vmax.f32 %v2403, 0.0
    %v2412 = vmax.f32 %v2408, 0.0
    %v2413 = vld [vmem:[%s14] sm:$0xff]
    %v2414 = vld [vmem:[%s14 + $0x8] sm:$0xff]
    %v2415 = vld [vmem:[%s14 + $0x10] sm:$0xff]
    %v2416 = vld [vmem:[%s14 + $0x18] sm:$0xff]
    %v2417 = vld [vmem:[%s14 + $0x20] sm:$0xff]
    %v2418 = vld [vmem:[%s14 + $0x28] sm:$0xff]
    %v2419 = vld [vmem:[%s14 + $0x30] sm:$0xff]
    %v2420 = vld [vmem:[%s14 + $0x38] sm:$0xff]
    %v2421 = vld [vmem:[%s15] sm:$0x1]
    %v2423 = vlaneseq
    %v2424 = vshrl.u32 %v2423, 7
    %v2425 = vsub.s32 0, %v2424
    %v2426 = vrot.slane %v2421, %v2425
    %vm2428 = vcmask 523264
    %v2430 = vsel %vm2428, %v2411, 0
    %v2433 = vsel %vm2428, %v2412, 0
    %2435 = vmatprep.subr.mxu0 0.0
    %2436 = vmatpush1.msra.mxu0 %v2413
    %2437 = vmatprep.subr.mxu0 0.0
    %2438 = vmatpush1.msra.mxu0 %v2414
    %2439 = vmatprep.subr.mxu0 0.0
    %2440 = vmatpush1.msra.mxu0 %v2415
    %2441 = vmatprep.subr.mxu0 0.0
    %2442 = vmatpush1.msra.mxu0 %v2416
    %2443 = vmatprep.subr.mxu0 0.0
    %2444 = vmatpush1.msra.mxu0 %v2417
    %2445 = vmatprep.subr.mxu0 0.0
    %2446 = vmatpush1.msra.mxu0 %v2418
    %2447 = vmatprep.subr.mxu0 0.0
    %2448 = vmatpush1.msra.mxu0 %v2419
    %2449 = vmatprep.subr.mxu0 0.0
    %2450 = vmatpush1.msra.mxu0 %v2420
    %2451 = vmatprep.subr.mxu0 0.0
    %2452 = vmatpush1.msra.mxu0 0.0
    %2453 = vmatprep.subr.mxu0 0.0
    %2454 = vmatpush1.msra.mxu0 0.0
    %2455 = vmatprep.subr.mxu0 0.0
    %2456 = vmatpush1.msra.mxu0 0.0
    %2457 = vmatprep.subr.mxu0 0.0
    %2458 = vmatpush1.msra.mxu0 0.0
    %2459 = vmatprep.subr.mxu0 0.0
    %2460 = vmatpush1.msra.mxu0 0.0
    %2461 = vmatprep.subr.mxu0 0.0
    %2462 = vmatpush1.msra.mxu0 0.0
    %2463 = vmatprep.subr.mxu0 0.0
    %2464 = vmatpush1.msra.mxu0 0.0
    %2465 = vmatprep.subr.mxu0 0.0
    %2466 = vmatpush1.msra.mxu0 0.0
    %2467 = vmatprep.subr.mxu0 0.0
    %2468 = vmatpush1.msra.mxu0 0.0
    %2469 = vmatprep.subr.mxu0 0.0
    %2470 = vmatpush1.msra.mxu0 0.0
    %2471 = vmatprep.subr.mxu0 0.0
    %2472 = vmatpush1.msra.mxu0 0.0
    %2473 = vmatprep.subr.mxu0 0.0
    %2474 = vmatpush1.msra.mxu0 0.0
    %2475 = vmatprep.subr.mxu0 0.0
    %2476 = vmatpush1.msra.mxu0 0.0
    %2477 = vmatprep.subr.mxu0 0.0
    %2478 = vmatpush1.msra.mxu0 0.0
    %2479 = vmatprep.subr.mxu0 0.0
    %2480 = vmatpush1.msra.mxu0 0.0
    %2481 = vmatprep.subr.mxu0 0.0
    %2482 = vmatpush1.msra.mxu0 0.0
    %2483 = vmatprep.subr.mxu0 0.0
    %2484 = vmatpush1.msra.mxu0 0.0
    %2485 = vmatprep.subr.mxu0 0.0
    %2486 = vmatpush1.msra.mxu0 0.0
    %2487 = vmatprep.subr.mxu0 0.0
    %2488 = vmatpush1.msra.mxu0 0.0
    %2489 = vmatprep.subr.mxu0 0.0
    %2490 = vmatpush1.msra.mxu0 0.0
    %2491 = vmatprep.subr.mxu0 0.0
    %2492 = vmatpush1.msra.mxu0 0.0
    %2493 = vmatprep.subr.mxu0 0.0
    %2494 = vmatpush1.msra.mxu0 0.0
    %2495 = vmatprep.subr.mxu0 0.0
    %2496 = vmatpush1.msra.mxu0 0.0
    %2497 = vmatprep.subr.mxu0 0.0
    %2498 = vmatpush1.msra.mxu0 0.0
    %2499 = vmatprep.mubr.f32.mxu0 0.0
    %2500 = vmatmul.mubr.f32.gmra.mrb[0].mxu0 %v2430
    %v2501 = vpop.f32.mrb[0].mxu0
    %v2502 = vadd.f32 %v2426, %v2501
    %v2503 = vpop.f32.mrb[0].mxu0
    %2504 = vmatprep.mubr.f32.mxu0 0.0
    %2505 = vmatmul.mubr.f32.gmra.mrb[0].mxu0 %v2433
    %v2506 = vpop.f32.mrb[0].mxu0
    %v2507 = vadd.f32 %v2426, %v2506
    %v2508 = vpop.f32.mrb[0].mxu0
    %2509 = vdwg.mxu0
    %v2510 = vadd.f32 %v2317, %v2502
    %v2511 = vadd.f32 %v2318, %v2507
    %v2512 = vld [vmem:[%s16 + $0x2] sm:$0x1]
    %v2513 = vld [vmem:[%s17 + $0x2] sm:$0x1]
    %v2514 = vsel %vm77, %v2510, 0.0
    %2515 = vadd.xlane.f32.xlu0 %v2514
    %v2516 = vpop.xlane.xlu0 %2515
    %v2517 = vsel %vm77, %v2511, 0.0
    %2518 = vadd.xlane.f32.xlu0 %v2517
    %v2519 = vpop.xlane.xlu0 %2518
    %v2520 = vmul.f32 %v2516, %v1117
    %v2521 = vmul.f32 %v2519, %v1117
    %v2522 = vsub.f32 %v2510, %v2520
    %v2523 = vsub.f32 %v2511, %v2521
    %v2524 = vmul.f32 %v2522, %v2522
    %v2525 = vmul.f32 %v2523, %v2523
    %v2526 = vsel %vm77, %v2524, 0.0
    %2527 = vadd.xlane.f32.xlu0 %v2526
    %v2528 = vpop.xlane.xlu0 %2527
    %v2529 = vsel %vm77, %v2525, 0.0
    %2530 = vadd.xlane.f32.xlu0 %v2529
    %v2531 = vpop.xlane.xlu0 %2530
    %v2532 = vmul.f32 %v2528, %v1117
    %v2533 = vmul.f32 %v2531, %v1117
    %v2534 = vadd.f32 %v2532, 1e-05
    %v2535 = vadd.f32 %v2533, 1e-05
    %v2536 = vrsqrt.pop %v2534
    %v2537 = vrsqrt.pop %v2535
    %v2538 = vmul.f32 %v2522, %v2536
    %v2539 = vmul.f32 %v2523, %v2537
    %v2540 = vlaneseq
    %v2541 = vshrl.u32 %v2540, 7
    %v2542 = vsub.s32 0, %v2541
    %v2543 = vrot.slane %v2512, %v2542
    %v2544 = vmul.f32 %v2538, %v2543
    %v2545 = vmul.f32 %v2539, %v2543
    %v2546 = vlaneseq
    %v2547 = vshrl.u32 %v2546, 7
    %v2548 = vsub.s32 0, %v2547
    %v2549 = vrot.slane %v2513, %v2548
    %v2550 = vadd.f32 %v2544, %v2549
    %v2551 = vadd.f32 %v2545, %v2549
    %2552 = vst.msk [vmem:[#allocation2] sm:$0xff] %vm77, %v2550
    %2553 = vst.msk [vmem:[#allocation2 + $0x8] sm:$0xff] %vm77, %v2551
    %2556 = vrot.lane.b32.xlu0 %v2275, 64
    %v2557 = vpop.permute.xlu0 %2556
    %2558 = vrot.lane.b32.xlu0 %v2276, 64
    %v2559 = vpop.permute.xlu0 %2558
    %v2562 = vsel %vm2428, %v1105, %v2557
    %v2563 = vsel %vm2428, %v1106, %v2559
    %2564 = vst [vmem:[%s19] sm:$0xff] %v2562
    %2565 = vst [vmem:[%s19 + $0x8] sm:$0xff] %v2563
    // Predicated region
    $region74: #{decoder_layer.1} parent=1 // pred_check
      _
    $region75: #{decoder_layer.1} parent=1 // pred_check_branch
      %2567 = sbr.rel (0) target = $region77
    $region76: #{decoder_layer.1} parent=1 // pred_region
      %s2569 = ssub.s32 256, 256
      %2570 = vsyncadd [#allocation3], %s2569
      %s2571 = sshll.u32 [#allocation2], 4
      %s2572 = int_to_ptr.vmem [resolvable:$true] %s2571
      %2577 = dma.vmem_to_hbm [thread:$0]  %s2572, 256, %s18, [#allocation3], 128, 128, 8
    $region77: #{decoder_layer.1} parent=1 // pred_fallthru
      _
    // Predicated region
    $region78: #{decoder_layer.1} parent=1 // pred_check
      _
    $region79: #{decoder_layer.1} parent=1 // pred_check_branch
      %2579 = sbr.rel (0) target = $region81
    $region80: #{decoder_layer.1} parent=1 // pred_region
      _
    $region81: #{decoder_layer.1} parent=1 // pred_fallthru
      _
    // Predicated region
    $region82: #{decoder_layer.1} parent=1 // pred_check
      _
    $region83: #{decoder_layer.1} parent=1 // pred_check_branch
      %2581 = sbr.rel (0) target = $region85
    $region84: #{decoder_layer.1} parent=1 // pred_region
      %2582 = dma.done [#allocation3], 256
    $region85: #{decoder_layer.1} parent=1 // pred_fallthru
      _
    // Predicated region
    $region86: #{decoder_layer.1} parent=1 // pred_check
      _
    $region87: #{decoder_layer.1} parent=1 // pred_check_branch
      %2584 = sbr.rel (0) target = $region89
    $region88: #{decoder_layer.1} parent=1 // pred_region
      _
    $region89: #{decoder_layer.1} parent=1 // pred_fallthru
      _
    %2585 = vsyncpa [#allocation3], 1

</llo_original>
